<compile_context>
chip_gen: v5e
topology: v5e:2x2
jax: 0.10.0
libtpu: 0.0.40
codegen_flags: <defaults>
</compile_context>

<pallas_src>
import math

import jax
import jax.numpy as jnp
from jax.experimental import pallas as pl
from jax.experimental.pallas import tpu as pltpu

LANE = 128   # vreg lane width
SUB = 8      # f32 sublane tile


def _round_up(n, m):
    return ((n + m - 1) // m) * m


def lstm_kernel(xproj_ref, wcombo_ref, b1_ref, fcw_ref, fcb_ref, out_ref):
    # xproj_ref : (T, B, 4H)  x @ Wih0 + b0, time-major, i/f/o gate cols pre-scaled
    # wcombo_ref: (2H, 8H)    [[Whh0, Wih1], [0, Whh1]], gate cols pre-scaled
    # b1_ref    : (1, 4H)     layer-1 bias (pre-scaled)
    # fcw_ref   : (1, H), fcb_ref: (1, 1), out_ref: (B, 1)
    T, B, G4 = xproj_ref.shape
    H = G4 // 4

    w = wcombo_ref[...]                                   # (2H, 8H)
    # Hoisted broadcast (JAX does not CSE broadcast_in_dim inside the loop).
    b1 = jnp.broadcast_to(b1_ref[...], (B, G4))
    fcw = fcw_ref[...]                                    # (1, H)
    fcb = fcb_ref[...]                                    # (1, 1)

    def activate(gates, c):
        # i/f/o columns were pre-scaled by 0.5 in the wrapper, so
        # sigmoid(x) == 0.5 * tanh(x/2) + 0.5 costs a single EUP pass over (B, 4H).
        th = jnp.tanh(gates)
        i = 0.5 * th[:, 0 * H:1 * H] + 0.5
        f = 0.5 * th[:, 1 * H:2 * H] + 0.5
        g = th[:, 2 * H:3 * H]
        o = 0.5 * th[:, 3 * H:4 * H] + 0.5
        c_new = f * c + i * g
        h_new = o * jnp.tanh(c_new)
        return h_new, c_new

    zH = jnp.zeros((B, H), jnp.float32)
    c0, c1, h1 = zH, zH, zH
    r0 = jnp.zeros((B, G4), jnp.float32)   # h0(t-1) @ Whh0, from previous fused dot

    # T is small & static: fully unrolled recurrence (all slices are static and
    # vreg-aligned; maximum scheduler visibility across timesteps).
    for t in range(T):
        # layer 0: recurrent contribution r0 was produced by last step's fused dot.
        h0, c0 = activate(xproj_ref[t] + r0, c0)
        # single fused cell matmul; [h0|h1] concat is pure vreg placement (H%128==0).
        s = jnp.concatenate([h0, h1], axis=-1)                        # (B, 2H)
        fused = jnp.dot(s, w, preferred_element_type=jnp.float32)     # (B, 8H)
        r0 = fused[:, :G4]                                            # gates0 @ t+1
        # layer 1
        h1, c1 = activate(fused[:, G4:] + b1, c1)

    # fc on the last timestep's top-layer hidden state: VPU multiply + lane reduce
    # (output_size == 1) instead of a degenerate (B,H)x(H,1) MXU dot.
    out_ref[...] = jnp.sum(h1 * fcw, axis=-1, keepdims=True) + fcb


def _pad_gate_cols(w, H, Hp):
    """Pad the trailing 4H (i|f|g|o) gate axis to 4Hp, per gate block."""
    lead = w.shape[:-1]
    w4 = w.reshape(lead + (4, H))
    w4 = jnp.pad(w4, [(0, 0)] * (len(lead) + 1) + [(0, Hp - H)])
    return w4.reshape(lead + (4 * Hp,))


def lstm_forward(x, params):
    """x: (B, T, I) float32, batch_first. Returns (B,) float32 (PyTorch .view(-1))."""
    B, T, I = x.shape
    H = params["whh0"].shape[0]
    if params["fcw"].shape[1] != 1:
        # The module's output_size is 1; the lane-reduce fc below assumes it.
        raise ValueError("kernel implements output_size == 1 (as in the module)")

    # Pad hidden size per-gate to a lane multiple (vreg-aligned slices, lane-dense
    # h/c) and batch to the sublane tile. Padded lanes stay exactly zero through the
    # recurrence (zero-padded weights/biases); padded batch rows compute harmless
    # bounded garbage that is sliced off below (never reduced over).
    Hp = _round_up(H, LANE)
    Bp = _round_up(B, SUB)

    f32 = jnp.float32
    # Fold the 0.5 pre-scale of the i/f/o gate columns (sigmoid-via-tanh) into the
    # weights/biases. Gate order is PyTorch's [i, f, g, o].
    gate_scale = jnp.concatenate(
        [jnp.full((Hp,), 0.5, f32), jnp.full((Hp,), 0.5, f32),
         jnp.ones((Hp,), f32), jnp.full((Hp,), 0.5, f32)])            # (4Hp,)

    def prep(w):                       # pad gate cols + fold scale
        return _pad_gate_cols(w.astype(f32), H, Hp) * gate_scale

    def prep_hh(w):                    # also zero-pad the state-row axis H -> Hp
        return prep(jnp.pad(w.astype(f32), ((0, Hp - H), (0, 0))))

    wih0 = prep(params["wih0"])        # (I,  4Hp)
    b0 = prep(params["b0"])            # (1,  4Hp)
    whh0 = prep_hh(params["whh0"])     # (Hp, 4Hp)
    wih1 = prep_hh(params["wih1"])     # (Hp, 4Hp)
    whh1 = prep_hh(params["whh1"])     # (Hp, 4Hp)
    b1 = prep(params["b1"])            # (1,  4Hp)

    # Fused cell weight: [h0 | h1] @ [[Whh0, Wih1], [0, Whh1]] -> (B, 8Hp).
    w_combo = jnp.concatenate(
        [jnp.concatenate([whh0, wih1], axis=1),
         jnp.concatenate([jnp.zeros((Hp, 4 * Hp), f32), whh1], axis=1)], axis=0)

    fcw = jnp.pad(params["fcw"].astype(f32).T, ((0, 0), (0, Hp - H)))   # (1, Hp)
    fcb = params["fcb"].astype(f32)                                     # (1, 1)

    # Layer-0 input projection hoisted into plain XLA, produced directly in the
    # time-major (T, Bp, 4Hp) layout (no separate HBM transpose pass over x).
    x_p = jnp.pad(x.astype(f32), ((0, Bp - B), (0, 0), (0, 0)))
    xproj = jnp.einsum("bti,ig->tbg", x_p, wih0) + b0                   # (T, Bp, 4Hp)

    vmem = pl.BlockSpec(memory_space=pltpu.MemorySpace.VMEM)
    out = pl.pallas_call(
        lstm_kernel,
        out_shape=jax.ShapeDtypeStruct((Bp, 1), jnp.float32),
        in_specs=[vmem] * 5,
        out_specs=vmem,
    )(xproj, w_combo, b1, fcw, fcb)
    return out[:B, 0]


def init_params(key, input_size, hidden_size, output_size):
    """Deterministic init mimicking PyTorch's U(-1/sqrt(H), 1/sqrt(H))."""
    H = hidden_size
    scale = 1.0 / math.sqrt(H)
    keys = jax.random.split(key, 12)

    def u(k, shape):
        return jax.random.uniform(k, shape, jnp.float32, -scale, scale)

    return {
        # layer 0
        "wih0": u(keys[0], (input_size, 4 * H)),
        "whh0": u(keys[1], (H, 4 * H)),
        "b0": (u(keys[2], (1, 4 * H)) + u(keys[3], (1, 4 * H))),  # b_ih + b_hh
        # layer 1
        "wih1": u(keys[4], (H, 4 * H)),
        "whh1": u(keys[5], (H, 4 * H)),
        "b1": (u(keys[6], (1, 4 * H)) + u(keys[7], (1, 4 * H))),
        # fc
        "fcw": u(keys[8], (H, output_size)),
        "fcb": u(keys[9], (1, output_size)),
    }


def lstm_reference(x, params):
    """Pure-JAX reference of the same math (PyTorch-faithful gates)."""
    B, T, I = x.shape
    H = params["whh0"].shape[0]

    def cell(xt, h, c, wih, whh, b):
        g = xt @ wih + h @ whh + b
        i = jax.nn.sigmoid(g[:, 0 * H:1 * H])
        f = jax.nn.sigmoid(g[:, 1 * H:2 * H])
        gg = jnp.tanh(g[:, 2 * H:3 * H])
        o = jax.nn.sigmoid(g[:, 3 * H:4 * H])
        c = f * c + i * gg
        h = o * jnp.tanh(c)
        return h, c

    h0 = c0 = h1 = c1 = jnp.zeros((B, H), jnp.float32)
    for t in range(T):
        xt = x[:, t, :]
        h0, c0 = cell(xt, h0, c0, params["wih0"], params["whh0"], params["b0"])
        h1, c1 = cell(h0, h1, c1, params["wih1"], params["whh1"], params["b1"])
    return (h1 @ params["fcw"] + params["fcb"]).reshape(-1)


if __name__ == "__main__":
    # Small shapes consistent with the module's forward: x is (batch, seq, input_size).
    B, T, I, H, OUT = 2, 8, 16, 32, 1

    key = jax.random.PRNGKey(0)
    k_x, k_p = jax.random.split(key)
    x = jax.random.normal(k_x, (B, T, I), jnp.float32)
    params = init_params(k_p, I, H, OUT)

    y = jax.block_until_ready(lstm_forward(x, params))
    y_ref = lstm_reference(x, params)

    assert y.shape == (B,)
    # Tolerance covers the sigmoid-via-tanh reformulation (mathematically identical,
    # ~1e-6-level float divergence accumulated over 2 layers x T steps).
    assert jnp.allclose(y, y_ref, atol=1e-4, rtol=1e-4), (y, y_ref)
    print("KERNEL_OK")
</pallas_src>

<mosaic_0001>
module attributes {stable_mosaic.version = 11 : i64} {
  func.func @lstm_kernel(%arg0: memref<8x8x512xf32, #tpu.memory_space<vmem>>, %arg1: memref<256x1024xf32, #tpu.memory_space<vmem>>, %arg2: memref<1x512xf32, #tpu.memory_space<vmem>>, %arg3: memref<1x128xf32, #tpu.memory_space<vmem>>, %arg4: memref<1x1xf32, #tpu.memory_space<vmem>>, %arg5: memref<8x1xf32, #tpu.memory_space<vmem>>) attributes {dimension_semantics = [], scalar_prefetch = 0 : i64, scratch_operands = 0 : i64, tpu.core_type = #tpu.core_type<tc>} {
    %c0 = arith.constant 0 : index
    %c0_0 = arith.constant 0 : index
    %0 = vector.load %arg1[%c0, %c0_0] : memref<256x1024xf32, #tpu.memory_space<vmem>>, vector<256x1024xf32>
    %c0_1 = arith.constant 0 : index
    %c0_2 = arith.constant 0 : index
    %1 = vector.load %arg2[%c0_1, %c0_2] : memref<1x512xf32, #tpu.memory_space<vmem>>, vector<1x512xf32>
    %2 = vector.shape_cast %1 : vector<1x512xf32> to vector<1x512xf32>
    %3 = vector.broadcast %2 : vector<1x512xf32> to vector<8x512xf32>
    %c0_3 = arith.constant 0 : index
    %c0_4 = arith.constant 0 : index
    %4 = vector.load %arg3[%c0_3, %c0_4] : memref<1x128xf32, #tpu.memory_space<vmem>>, vector<1x128xf32>
    %c0_5 = arith.constant 0 : index
    %c0_6 = arith.constant 0 : index
    %5 = vector.load %arg4[%c0_5, %c0_6] : memref<1x1xf32, #tpu.memory_space<vmem>>, vector<1x1xf32>
    %cst = arith.constant 0.000000e+00 : f32
    %6 = vector.broadcast %cst : f32 to vector<8x128xf32>
    %cst_7 = arith.constant 0.000000e+00 : f32
    %7 = vector.broadcast %cst_7 : f32 to vector<8x512xf32>
    %c0_8 = arith.constant 0 : index
    %c0_9 = arith.constant 0 : index
    %c0_10 = arith.constant 0 : index
    %8 = vector.load %arg0[%c0_8, %c0_9, %c0_10] : memref<8x8x512xf32, #tpu.memory_space<vmem>>, vector<1x8x512xf32>
    %9 = vector.shape_cast %8 : vector<1x8x512xf32> to vector<8x512xf32>
    %10 = arith.addf %9, %7 : vector<8x512xf32>
    %11 = math.tanh %10 : vector<8x512xf32>
    %12 = vector.extract_strided_slice %11 {offsets = [0, 0], sizes = [8, 128], strides = [1, 1]} : vector<8x512xf32> to vector<8x128xf32>
    %cst_11 = arith.constant 5.000000e-01 : f32
    %13 = vector.broadcast %cst_11 : f32 to vector<8x128xf32>
    %14 = arith.mulf %13, %12 : vector<8x128xf32>
    %cst_12 = arith.constant 5.000000e-01 : f32
    %15 = vector.broadcast %cst_12 : f32 to vector<8x128xf32>
    %16 = arith.addf %14, %15 : vector<8x128xf32>
    %17 = vector.extract_strided_slice %11 {offsets = [0, 128], sizes = [8, 128], strides = [1, 1]} : vector<8x512xf32> to vector<8x128xf32>
    %cst_13 = arith.constant 5.000000e-01 : f32
    %18 = vector.broadcast %cst_13 : f32 to vector<8x128xf32>
    %19 = arith.mulf %18, %17 : vector<8x128xf32>
    %cst_14 = arith.constant 5.000000e-01 : f32
    %20 = vector.broadcast %cst_14 : f32 to vector<8x128xf32>
    %21 = arith.addf %19, %20 : vector<8x128xf32>
    %22 = vector.extract_strided_slice %11 {offsets = [0, 256], sizes = [8, 128], strides = [1, 1]} : vector<8x512xf32> to vector<8x128xf32>
    %23 = vector.extract_strided_slice %11 {offsets = [0, 384], sizes = [8, 128], strides = [1, 1]} : vector<8x512xf32> to vector<8x128xf32>
    %cst_15 = arith.constant 5.000000e-01 : f32
    %24 = vector.broadcast %cst_15 : f32 to vector<8x128xf32>
    %25 = arith.mulf %24, %23 : vector<8x128xf32>
    %cst_16 = arith.constant 5.000000e-01 : f32
    %26 = vector.broadcast %cst_16 : f32 to vector<8x128xf32>
    %27 = arith.addf %25, %26 : vector<8x128xf32>
    %28 = arith.mulf %21, %6 : vector<8x128xf32>
    %29 = arith.mulf %16, %22 : vector<8x128xf32>
    %30 = arith.addf %28, %29 : vector<8x128xf32>
    %31 = math.tanh %30 : vector<8x128xf32>
    %32 = arith.mulf %27, %31 : vector<8x128xf32>
    %33 = tpu.concatenate %32, %6 in 1 : vector<8x128xf32>, vector<8x128xf32> -> vector<8x256xf32>
    %cst_17 = arith.constant dense<0.000000e+00> : vector<8x1024xf32>
    %34 = tpu.matmul %33, %0, %cst_17 {dimension_numbers = #tpu.dot_dimension_numbers<[1], [0], [0], [1], [0, 0, 1, 1], [], []>} : vector<8x256xf32>, vector<256x1024xf32>, vector<8x1024xf32> -> vector<8x1024xf32>
    %35 = vector.extract_strided_slice %34 {offsets = [0, 0], sizes = [8, 512], strides = [1, 1]} : vector<8x1024xf32> to vector<8x512xf32>
    %36 = vector.extract_strided_slice %34 {offsets = [0, 512], sizes = [8, 512], strides = [1, 1]} : vector<8x1024xf32> to vector<8x512xf32>
    %37 = arith.addf %36, %3 : vector<8x512xf32>
    %38 = math.tanh %37 : vector<8x512xf32>
    %39 = vector.extract_strided_slice %38 {offsets = [0, 0], sizes = [8, 128], strides = [1, 1]} : vector<8x512xf32> to vector<8x128xf32>
    %cst_18 = arith.constant 5.000000e-01 : f32
    %40 = vector.broadcast %cst_18 : f32 to vector<8x128xf32>
    %41 = arith.mulf %40, %39 : vector<8x128xf32>
    %cst_19 = arith.constant 5.000000e-01 : f32
    %42 = vector.broadcast %cst_19 : f32 to vector<8x128xf32>
    %43 = arith.addf %41, %42 : vector<8x128xf32>
    %44 = vector.extract_strided_slice %38 {offsets = [0, 128], sizes = [8, 128], strides = [1, 1]} : vector<8x512xf32> to vector<8x128xf32>
    %cst_20 = arith.constant 5.000000e-01 : f32
    %45 = vector.broadcast %cst_20 : f32 to vector<8x128xf32>
    %46 = arith.mulf %45, %44 : vector<8x128xf32>
    %cst_21 = arith.constant 5.000000e-01 : f32
    %47 = vector.broadcast %cst_21 : f32 to vector<8x128xf32>
    %48 = arith.addf %46, %47 : vector<8x128xf32>
    %49 = vector.extract_strided_slice %38 {offsets = [0, 256], sizes = [8, 128], strides = [1, 1]} : vector<8x512xf32> to vector<8x128xf32>
    %50 = vector.extract_strided_slice %38 {offsets = [0, 384], sizes = [8, 128], strides = [1, 1]} : vector<8x512xf32> to vector<8x128xf32>
    %cst_22 = arith.constant 5.000000e-01 : f32
    %51 = vector.broadcast %cst_22 : f32 to vector<8x128xf32>
    %52 = arith.mulf %51, %50 : vector<8x128xf32>
    %cst_23 = arith.constant 5.000000e-01 : f32
    %53 = vector.broadcast %cst_23 : f32 to vector<8x128xf32>
    %54 = arith.addf %52, %53 : vector<8x128xf32>
    %55 = arith.mulf %48, %6 : vector<8x128xf32>
    %56 = arith.mulf %43, %49 : vector<8x128xf32>
    %57 = arith.addf %55, %56 : vector<8x128xf32>
    %58 = math.tanh %57 : vector<8x128xf32>
    %59 = arith.mulf %54, %58 : vector<8x128xf32>
    %c1 = arith.constant 1 : index
    %c0_24 = arith.constant 0 : index
    %c0_25 = arith.constant 0 : index
    %60 = vector.load %arg0[%c1, %c0_24, %c0_25] : memref<8x8x512xf32, #tpu.memory_space<vmem>>, vector<1x8x512xf32>
    %61 = vector.shape_cast %60 : vector<1x8x512xf32> to vector<8x512xf32>
    %62 = arith.addf %61, %35 : vector<8x512xf32>
    %63 = math.tanh %62 : vector<8x512xf32>
    %64 = vector.extract_strided_slice %63 {offsets = [0, 0], sizes = [8, 128], strides = [1, 1]} : vector<8x512xf32> to vector<8x128xf32>
    %cst_26 = arith.constant 5.000000e-01 : f32
    %65 = vector.broadcast %cst_26 : f32 to vector<8x128xf32>
    %66 = arith.mulf %65, %64 : vector<8x128xf32>
    %cst_27 = arith.constant 5.000000e-01 : f32
    %67 = vector.broadcast %cst_27 : f32 to vector<8x128xf32>
    %68 = arith.addf %66, %67 : vector<8x128xf32>
    %69 = vector.extract_strided_slice %63 {offsets = [0, 128], sizes = [8, 128], strides = [1, 1]} : vector<8x512xf32> to vector<8x128xf32>
    %cst_28 = arith.constant 5.000000e-01 : f32
    %70 = vector.broadcast %cst_28 : f32 to vector<8x128xf32>
    %71 = arith.mulf %70, %69 : vector<8x128xf32>
    %cst_29 = arith.constant 5.000000e-01 : f32
    %72 = vector.broadcast %cst_29 : f32 to vector<8x128xf32>
    %73 = arith.addf %71, %72 : vector<8x128xf32>
    %74 = vector.extract_strided_slice %63 {offsets = [0, 256], sizes = [8, 128], strides = [1, 1]} : vector<8x512xf32> to vector<8x128xf32>
    %75 = vector.extract_strided_slice %63 {offsets = [0, 384], sizes = [8, 128], strides = [1, 1]} : vector<8x512xf32> to vector<8x128xf32>
    %cst_30 = arith.constant 5.000000e-01 : f32
    %76 = vector.broadcast %cst_30 : f32 to vector<8x128xf32>
    %77 = arith.mulf %76, %75 : vector<8x128xf32>
    %cst_31 = arith.constant 5.000000e-01 : f32
    %78 = vector.broadcast %cst_31 : f32 to vector<8x128xf32>
    %79 = arith.addf %77, %78 : vector<8x128xf32>
    %80 = arith.mulf %73, %30 : vector<8x128xf32>
    %81 = arith.mulf %68, %74 : vector<8x128xf32>
    %82 = arith.addf %80, %81 : vector<8x128xf32>
    %83 = math.tanh %82 : vector<8x128xf32>
    %84 = arith.mulf %79, %83 : vector<8x128xf32>
    %85 = tpu.concatenate %84, %59 in 1 : vector<8x128xf32>, vector<8x128xf32> -> vector<8x256xf32>
    %cst_32 = arith.constant dense<0.000000e+00> : vector<8x1024xf32>
    %86 = tpu.matmul %85, %0, %cst_32 {dimension_numbers = #tpu.dot_dimension_numbers<[1], [0], [0], [1], [0, 0, 1, 1], [], []>} : vector<8x256xf32>, vector<256x1024xf32>, vector<8x1024xf32> -> vector<8x1024xf32>
    %87 = vector.extract_strided_slice %86 {offsets = [0, 0], sizes = [8, 512], strides = [1, 1]} : vector<8x1024xf32> to vector<8x512xf32>
    %88 = vector.extract_strided_slice %86 {offsets = [0, 512], sizes = [8, 512], strides = [1, 1]} : vector<8x1024xf32> to vector<8x512xf32>
    %89 = arith.addf %88, %3 : vector<8x512xf32>
    %90 = math.tanh %89 : vector<8x512xf32>
    %91 = vector.extract_strided_slice %90 {offsets = [0, 0], sizes = [8, 128], strides = [1, 1]} : vector<8x512xf32> to vector<8x128xf32>
    %cst_33 = arith.constant 5.000000e-01 : f32
    %92 = vector.broadcast %cst_33 : f32 to vector<8x128xf32>
    %93 = arith.mulf %92, %91 : vector<8x128xf32>
    %cst_34 = arith.constant 5.000000e-01 : f32
    %94 = vector.broadcast %cst_34 : f32 to vector<8x128xf32>
    %95 = arith.addf %93, %94 : vector<8x128xf32>
    %96 = vector.extract_strided_slice %90 {offsets = [0, 128], sizes = [8, 128], strides = [1, 1]} : vector<8x512xf32> to vector<8x128xf32>
    %cst_35 = arith.constant 5.000000e-01 : f32
    %97 = vector.broadcast %cst_35 : f32 to vector<8x128xf32>
    %98 = arith.mulf %97, %96 : vector<8x128xf32>
    %cst_36 = arith.constant 5.000000e-01 : f32
    %99 = vector.broadcast %cst_36 : f32 to vector<8x128xf32>
    %100 = arith.addf %98, %99 : vector<8x128xf32>
    %101 = vector.extract_strided_slice %90 {offsets = [0, 256], sizes = [8, 128], strides = [1, 1]} : vector<8x512xf32> to vector<8x128xf32>
    %102 = vector.extract_strided_slice %90 {offsets = [0, 384], sizes = [8, 128], strides = [1, 1]} : vector<8x512xf32> to vector<8x128xf32>
    %cst_37 = arith.constant 5.000000e-01 : f32
    %103 = vector.broadcast %cst_37 : f32 to vector<8x128xf32>
    %104 = arith.mulf %103, %102 : vector<8x128xf32>
    %cst_38 = arith.constant 5.000000e-01 : f32
    %105 = vector.broadcast %cst_38 : f32 to vector<8x128xf32>
    %106 = arith.addf %104, %105 : vector<8x128xf32>
    %107 = arith.mulf %100, %57 : vector<8x128xf32>
    %108 = arith.mulf %95, %101 : vector<8x128xf32>
    %109 = arith.addf %107, %108 : vector<8x128xf32>
    %110 = math.tanh %109 : vector<8x128xf32>
    %111 = arith.mulf %106, %110 : vector<8x128xf32>
    %c2 = arith.constant 2 : index
    %c0_39 = arith.constant 0 : index
    %c0_40 = arith.constant 0 : index
    %112 = vector.load %arg0[%c2, %c0_39, %c0_40] : memref<8x8x512xf32, #tpu.memory_space<vmem>>, vector<1x8x512xf32>
    %113 = vector.shape_cast %112 : vector<1x8x512xf32> to vector<8x512xf32>
    %114 = arith.addf %113, %87 : vector<8x512xf32>
    %115 = math.tanh %114 : vector<8x512xf32>
    %116 = vector.extract_strided_slice %115 {offsets = [0, 0], sizes = [8, 128], strides = [1, 1]} : vector<8x512xf32> to vector<8x128xf32>
    %cst_41 = arith.constant 5.000000e-01 : f32
    %117 = vector.broadcast %cst_41 : f32 to vector<8x128xf32>
    %118 = arith.mulf %117, %116 : vector<8x128xf32>
    %cst_42 = arith.constant 5.000000e-01 : f32
    %119 = vector.broadcast %cst_42 : f32 to vector<8x128xf32>
    %120 = arith.addf %118, %119 : vector<8x128xf32>
    %121 = vector.extract_strided_slice %115 {offsets = [0, 128], sizes = [8, 128], strides = [1, 1]} : vector<8x512xf32> to vector<8x128xf32>
    %cst_43 = arith.constant 5.000000e-01 : f32
    %122 = vector.broadcast %cst_43 : f32 to vector<8x128xf32>
    %123 = arith.mulf %122, %121 : vector<8x128xf32>
    %cst_44 = arith.constant 5.000000e-01 : f32
    %124 = vector.broadcast %cst_44 : f32 to vector<8x128xf32>
    %125 = arith.addf %123, %124 : vector<8x128xf32>
    %126 = vector.extract_strided_slice %115 {offsets = [0, 256], sizes = [8, 128], strides = [1, 1]} : vector<8x512xf32> to vector<8x128xf32>
    %127 = vector.extract_strided_slice %115 {offsets = [0, 384], sizes = [8, 128], strides = [1, 1]} : vector<8x512xf32> to vector<8x128xf32>
    %cst_45 = arith.constant 5.000000e-01 : f32
    %128 = vector.broadcast %cst_45 : f32 to vector<8x128xf32>
    %129 = arith.mulf %128, %127 : vector<8x128xf32>
    %cst_46 = arith.constant 5.000000e-01 : f32
    %130 = vector.broadcast %cst_46 : f32 to vector<8x128xf32>
    %131 = arith.addf %129, %130 : vector<8x128xf32>
    %132 = arith.mulf %125, %82 : vector<8x128xf32>
    %133 = arith.mulf %120, %126 : vector<8x128xf32>
    %134 = arith.addf %132, %133 : vector<8x128xf32>
    %135 = math.tanh %134 : vector<8x128xf32>
    %136 = arith.mulf %131, %135 : vector<8x128xf32>
    %137 = tpu.concatenate %136, %111 in 1 : vector<8x128xf32>, vector<8x128xf32> -> vector<8x256xf32>
    %cst_47 = arith.constant dense<0.000000e+00> : vector<8x1024xf32>
    %138 = tpu.matmul %137, %0, %cst_47 {dimension_numbers = #tpu.dot_dimension_numbers<[1], [0], [0], [1], [0, 0, 1, 1], [], []>} : vector<8x256xf32>, vector<256x1024xf32>, vector<8x1024xf32> -> vector<8x1024xf32>
    %139 = vector.extract_strided_slice %138 {offsets = [0, 0], sizes = [8, 512], strides = [1, 1]} : vector<8x1024xf32> to vector<8x512xf32>
    %140 = vector.extract_strided_slice %138 {offsets = [0, 512], sizes = [8, 512], strides = [1, 1]} : vector<8x1024xf32> to vector<8x512xf32>
    %141 = arith.addf %140, %3 : vector<8x512xf32>
    %142 = math.tanh %141 : vector<8x512xf32>
    %143 = vector.extract_strided_slice %142 {offsets = [0, 0], sizes = [8, 128], strides = [1, 1]} : vector<8x512xf32> to vector<8x128xf32>
    %cst_48 = arith.constant 5.000000e-01 : f32
    %144 = vector.broadcast %cst_48 : f32 to vector<8x128xf32>
    %145 = arith.mulf %144, %143 : vector<8x128xf32>
    %cst_49 = arith.constant 5.000000e-01 : f32
    %146 = vector.broadcast %cst_49 : f32 to vector<8x128xf32>
    %147 = arith.addf %145, %146 : vector<8x128xf32>
    %148 = vector.extract_strided_slice %142 {offsets = [0, 128], sizes = [8, 128], strides = [1, 1]} : vector<8x512xf32> to vector<8x128xf32>
    %cst_50 = arith.constant 5.000000e-01 : f32
    %149 = vector.broadcast %cst_50 : f32 to vector<8x128xf32>
    %150 = arith.mulf %149, %148 : vector<8x128xf32>
    %cst_51 = arith.constant 5.000000e-01 : f32
    %151 = vector.broadcast %cst_51 : f32 to vector<8x128xf32>
    %152 = arith.addf %150, %151 : vector<8x128xf32>
    %153 = vector.extract_strided_slice %142 {offsets = [0, 256], sizes = [8, 128], strides = [1, 1]} : vector<8x512xf32> to vector<8x128xf32>
    %154 = vector.extract_strided_slice %142 {offsets = [0, 384], sizes = [8, 128], strides = [1, 1]} : vector<8x512xf32> to vector<8x128xf32>
    %cst_52 = arith.constant 5.000000e-01 : f32
    %155 = vector.broadcast %cst_52 : f32 to vector<8x128xf32>
    %156 = arith.mulf %155, %154 : vector<8x128xf32>
    %cst_53 = arith.constant 5.000000e-01 : f32
    %157 = vector.broadcast %cst_53 : f32 to vector<8x128xf32>
    %158 = arith.addf %156, %157 : vector<8x128xf32>
    %159 = arith.mulf %152, %109 : vector<8x128xf32>
    %160 = arith.mulf %147, %153 : vector<8x128xf32>
    %161 = arith.addf %159, %160 : vector<8x128xf32>
    %162 = math.tanh %161 : vector<8x128xf32>
    %163 = arith.mulf %158, %162 : vector<8x128xf32>
    %c3 = arith.constant 3 : index
    %c0_54 = arith.constant 0 : index
    %c0_55 = arith.constant 0 : index
    %164 = vector.load %arg0[%c3, %c0_54, %c0_55] : memref<8x8x512xf32, #tpu.memory_space<vmem>>, vector<1x8x512xf32>
    %165 = vector.shape_cast %164 : vector<1x8x512xf32> to vector<8x512xf32>
    %166 = arith.addf %165, %139 : vector<8x512xf32>
    %167 = math.tanh %166 : vector<8x512xf32>
    %168 = vector.extract_strided_slice %167 {offsets = [0, 0], sizes = [8, 128], strides = [1, 1]} : vector<8x512xf32> to vector<8x128xf32>
    %cst_56 = arith.constant 5.000000e-01 : f32
    %169 = vector.broadcast %cst_56 : f32 to vector<8x128xf32>
    %170 = arith.mulf %169, %168 : vector<8x128xf32>
    %cst_57 = arith.constant 5.000000e-01 : f32
    %171 = vector.broadcast %cst_57 : f32 to vector<8x128xf32>
    %172 = arith.addf %170, %171 : vector<8x128xf32>
    %173 = vector.extract_strided_slice %167 {offsets = [0, 128], sizes = [8, 128], strides = [1, 1]} : vector<8x512xf32> to vector<8x128xf32>
    %cst_58 = arith.constant 5.000000e-01 : f32
    %174 = vector.broadcast %cst_58 : f32 to vector<8x128xf32>
    %175 = arith.mulf %174, %173 : vector<8x128xf32>
    %cst_59 = arith.constant 5.000000e-01 : f32
    %176 = vector.broadcast %cst_59 : f32 to vector<8x128xf32>
    %177 = arith.addf %175, %176 : vector<8x128xf32>
    %178 = vector.extract_strided_slice %167 {offsets = [0, 256], sizes = [8, 128], strides = [1, 1]} : vector<8x512xf32> to vector<8x128xf32>
    %179 = vector.extract_strided_slice %167 {offsets = [0, 384], sizes = [8, 128], strides = [1, 1]} : vector<8x512xf32> to vector<8x128xf32>
    %cst_60 = arith.constant 5.000000e-01 : f32
    %180 = vector.broadcast %cst_60 : f32 to vector<8x128xf32>
    %181 = arith.mulf %180, %179 : vector<8x128xf32>
    %cst_61 = arith.constant 5.000000e-01 : f32
    %182 = vector.broadcast %cst_61 : f32 to vector<8x128xf32>
    %183 = arith.addf %181, %182 : vector<8x128xf32>
    %184 = arith.mulf %177, %134 : vector<8x128xf32>
    %185 = arith.mulf %172, %178 : vector<8x128xf32>
    %186 = arith.addf %184, %185 : vector<8x128xf32>
    %187 = math.tanh %186 : vector<8x128xf32>
    %188 = arith.mulf %183, %187 : vector<8x128xf32>
    %189 = tpu.concatenate %188, %163 in 1 : vector<8x128xf32>, vector<8x128xf32> -> vector<8x256xf32>
    %cst_62 = arith.constant dense<0.000000e+00> : vector<8x1024xf32>
    %190 = tpu.matmul %189, %0, %cst_62 {dimension_numbers = #tpu.dot_dimension_numbers<[1], [0], [0], [1], [0, 0, 1, 1], [], []>} : vector<8x256xf32>, vector<256x1024xf32>, vector<8x1024xf32> -> vector<8x1024xf32>
    %191 = vector.extract_strided_slice %190 {offsets = [0, 0], sizes = [8, 512], strides = [1, 1]} : vector<8x1024xf32> to vector<8x512xf32>
    %192 = vector.extract_strided_slice %190 {offsets = [0, 512], sizes = [8, 512], strides = [1, 1]} : vector<8x1024xf32> to vector<8x512xf32>
    %193 = arith.addf %192, %3 : vector<8x512xf32>
    %194 = math.tanh %193 : vector<8x512xf32>
    %195 = vector.extract_strided_slice %194 {offsets = [0, 0], sizes = [8, 128], strides = [1, 1]} : vector<8x512xf32> to vector<8x128xf32>
    %cst_63 = arith.constant 5.000000e-01 : f32
    %196 = vector.broadcast %cst_63 : f32 to vector<8x128xf32>
    %197 = arith.mulf %196, %195 : vector<8x128xf32>
    %cst_64 = arith.constant 5.000000e-01 : f32
    %198 = vector.broadcast %cst_64 : f32 to vector<8x128xf32>
    %199 = arith.addf %197, %198 : vector<8x128xf32>
    %200 = vector.extract_strided_slice %194 {offsets = [0, 128], sizes = [8, 128], strides = [1, 1]} : vector<8x512xf32> to vector<8x128xf32>
    %cst_65 = arith.constant 5.000000e-01 : f32
    %201 = vector.broadcast %cst_65 : f32 to vector<8x128xf32>
    %202 = arith.mulf %201, %200 : vector<8x128xf32>
    %cst_66 = arith.constant 5.000000e-01 : f32
    %203 = vector.broadcast %cst_66 : f32 to vector<8x128xf32>
    %204 = arith.addf %202, %203 : vector<8x128xf32>
    %205 = vector.extract_strided_slice %194 {offsets = [0, 256], sizes = [8, 128], strides = [1, 1]} : vector<8x512xf32> to vector<8x128xf32>
    %206 = vector.extract_strided_slice %194 {offsets = [0, 384], sizes = [8, 128], strides = [1, 1]} : vector<8x512xf32> to vector<8x128xf32>
    %cst_67 = arith.constant 5.000000e-01 : f32
    %207 = vector.broadcast %cst_67 : f32 to vector<8x128xf32>
    %208 = arith.mulf %207, %206 : vector<8x128xf32>
    %cst_68 = arith.constant 5.000000e-01 : f32
    %209 = vector.broadcast %cst_68 : f32 to vector<8x128xf32>
    %210 = arith.addf %208, %209 : vector<8x128xf32>
    %211 = arith.mulf %204, %161 : vector<8x128xf32>
    %212 = arith.mulf %199, %205 : vector<8x128xf32>
    %213 = arith.addf %211, %212 : vector<8x128xf32>
    %214 = math.tanh %213 : vector<8x128xf32>
    %215 = arith.mulf %210, %214 : vector<8x128xf32>
    %c4 = arith.constant 4 : index
    %c0_69 = arith.constant 0 : index
    %c0_70 = arith.constant 0 : index
    %216 = vector.load %arg0[%c4, %c0_69, %c0_70] : memref<8x8x512xf32, #tpu.memory_space<vmem>>, vector<1x8x512xf32>
    %217 = vector.shape_cast %216 : vector<1x8x512xf32> to vector<8x512xf32>
    %218 = arith.addf %217, %191 : vector<8x512xf32>
    %219 = math.tanh %218 : vector<8x512xf32>
    %220 = vector.extract_strided_slice %219 {offsets = [0, 0], sizes = [8, 128], strides = [1, 1]} : vector<8x512xf32> to vector<8x128xf32>
    %cst_71 = arith.constant 5.000000e-01 : f32
    %221 = vector.broadcast %cst_71 : f32 to vector<8x128xf32>
    %222 = arith.mulf %221, %220 : vector<8x128xf32>
    %cst_72 = arith.constant 5.000000e-01 : f32
    %223 = vector.broadcast %cst_72 : f32 to vector<8x128xf32>
    %224 = arith.addf %222, %223 : vector<8x128xf32>
    %225 = vector.extract_strided_slice %219 {offsets = [0, 128], sizes = [8, 128], strides = [1, 1]} : vector<8x512xf32> to vector<8x128xf32>
    %cst_73 = arith.constant 5.000000e-01 : f32
    %226 = vector.broadcast %cst_73 : f32 to vector<8x128xf32>
    %227 = arith.mulf %226, %225 : vector<8x128xf32>
    %cst_74 = arith.constant 5.000000e-01 : f32
    %228 = vector.broadcast %cst_74 : f32 to vector<8x128xf32>
    %229 = arith.addf %227, %228 : vector<8x128xf32>
    %230 = vector.extract_strided_slice %219 {offsets = [0, 256], sizes = [8, 128], strides = [1, 1]} : vector<8x512xf32> to vector<8x128xf32>
    %231 = vector.extract_strided_slice %219 {offsets = [0, 384], sizes = [8, 128], strides = [1, 1]} : vector<8x512xf32> to vector<8x128xf32>
    %cst_75 = arith.constant 5.000000e-01 : f32
    %232 = vector.broadcast %cst_75 : f32 to vector<8x128xf32>
    %233 = arith.mulf %232, %231 : vector<8x128xf32>
    %cst_76 = arith.constant 5.000000e-01 : f32
    %234 = vector.broadcast %cst_76 : f32 to vector<8x128xf32>
    %235 = arith.addf %233, %234 : vector<8x128xf32>
    %236 = arith.mulf %229, %186 : vector<8x128xf32>
    %237 = arith.mulf %224, %230 : vector<8x128xf32>
    %238 = arith.addf %236, %237 : vector<8x128xf32>
    %239 = math.tanh %238 : vector<8x128xf32>
    %240 = arith.mulf %235, %239 : vector<8x128xf32>
    %241 = tpu.concatenate %240, %215 in 1 : vector<8x128xf32>, vector<8x128xf32> -> vector<8x256xf32>
    %cst_77 = arith.constant dense<0.000000e+00> : vector<8x1024xf32>
    %242 = tpu.matmul %241, %0, %cst_77 {dimension_numbers = #tpu.dot_dimension_numbers<[1], [0], [0], [1], [0, 0, 1, 1], [], []>} : vector<8x256xf32>, vector<256x1024xf32>, vector<8x1024xf32> -> vector<8x1024xf32>
    %243 = vector.extract_strided_slice %242 {offsets = [0, 0], sizes = [8, 512], strides = [1, 1]} : vector<8x1024xf32> to vector<8x512xf32>
    %244 = vector.extract_strided_slice %242 {offsets = [0, 512], sizes = [8, 512], strides = [1, 1]} : vector<8x1024xf32> to vector<8x512xf32>
    %245 = arith.addf %244, %3 : vector<8x512xf32>
    %246 = math.tanh %245 : vector<8x512xf32>
    %247 = vector.extract_strided_slice %246 {offsets = [0, 0], sizes = [8, 128], strides = [1, 1]} : vector<8x512xf32> to vector<8x128xf32>
    %cst_78 = arith.constant 5.000000e-01 : f32
    %248 = vector.broadcast %cst_78 : f32 to vector<8x128xf32>
    %249 = arith.mulf %248, %247 : vector<8x128xf32>
    %cst_79 = arith.constant 5.000000e-01 : f32
    %250 = vector.broadcast %cst_79 : f32 to vector<8x128xf32>
    %251 = arith.addf %249, %250 : vector<8x128xf32>
    %252 = vector.extract_strided_slice %246 {offsets = [0, 128], sizes = [8, 128], strides = [1, 1]} : vector<8x512xf32> to vector<8x128xf32>
    %cst_80 = arith.constant 5.000000e-01 : f32
    %253 = vector.broadcast %cst_80 : f32 to vector<8x128xf32>
    %254 = arith.mulf %253, %252 : vector<8x128xf32>
    %cst_81 = arith.constant 5.000000e-01 : f32
    %255 = vector.broadcast %cst_81 : f32 to vector<8x128xf32>
    %256 = arith.addf %254, %255 : vector<8x128xf32>
    %257 = vector.extract_strided_slice %246 {offsets = [0, 256], sizes = [8, 128], strides = [1, 1]} : vector<8x512xf32> to vector<8x128xf32>
    %258 = vector.extract_strided_slice %246 {offsets = [0, 384], sizes = [8, 128], strides = [1, 1]} : vector<8x512xf32> to vector<8x128xf32>
    %cst_82 = arith.constant 5.000000e-01 : f32
    %259 = vector.broadcast %cst_82 : f32 to vector<8x128xf32>
    %260 = arith.mulf %259, %258 : vector<8x128xf32>
    %cst_83 = arith.constant 5.000000e-01 : f32
    %261 = vector.broadcast %cst_83 : f32 to vector<8x128xf32>
    %262 = arith.addf %260, %261 : vector<8x128xf32>
    %263 = arith.mulf %256, %213 : vector<8x128xf32>
    %264 = arith.mulf %251, %257 : vector<8x128xf32>
    %265 = arith.addf %263, %264 : vector<8x128xf32>
    %266 = math.tanh %265 : vector<8x128xf32>
    %267 = arith.mulf %262, %266 : vector<8x128xf32>
    %c5 = arith.constant 5 : index
    %c0_84 = arith.constant 0 : index
    %c0_85 = arith.constant 0 : index
    %268 = vector.load %arg0[%c5, %c0_84, %c0_85] : memref<8x8x512xf32, #tpu.memory_space<vmem>>, vector<1x8x512xf32>
    %269 = vector.shape_cast %268 : vector<1x8x512xf32> to vector<8x512xf32>
    %270 = arith.addf %269, %243 : vector<8x512xf32>
    %271 = math.tanh %270 : vector<8x512xf32>
    %272 = vector.extract_strided_slice %271 {offsets = [0, 0], sizes = [8, 128], strides = [1, 1]} : vector<8x512xf32> to vector<8x128xf32>
    %cst_86 = arith.constant 5.000000e-01 : f32
    %273 = vector.broadcast %cst_86 : f32 to vector<8x128xf32>
    %274 = arith.mulf %273, %272 : vector<8x128xf32>
    %cst_87 = arith.constant 5.000000e-01 : f32
    %275 = vector.broadcast %cst_87 : f32 to vector<8x128xf32>
    %276 = arith.addf %274, %275 : vector<8x128xf32>
    %277 = vector.extract_strided_slice %271 {offsets = [0, 128], sizes = [8, 128], strides = [1, 1]} : vector<8x512xf32> to vector<8x128xf32>
    %cst_88 = arith.constant 5.000000e-01 : f32
    %278 = vector.broadcast %cst_88 : f32 to vector<8x128xf32>
    %279 = arith.mulf %278, %277 : vector<8x128xf32>
    %cst_89 = arith.constant 5.000000e-01 : f32
    %280 = vector.broadcast %cst_89 : f32 to vector<8x128xf32>
    %281 = arith.addf %279, %280 : vector<8x128xf32>
    %282 = vector.extract_strided_slice %271 {offsets = [0, 256], sizes = [8, 128], strides = [1, 1]} : vector<8x512xf32> to vector<8x128xf32>
    %283 = vector.extract_strided_slice %271 {offsets = [0, 384], sizes = [8, 128], strides = [1, 1]} : vector<8x512xf32> to vector<8x128xf32>
    %cst_90 = arith.constant 5.000000e-01 : f32
    %284 = vector.broadcast %cst_90 : f32 to vector<8x128xf32>
    %285 = arith.mulf %284, %283 : vector<8x128xf32>
    %cst_91 = arith.constant 5.000000e-01 : f32
    %286 = vector.broadcast %cst_91 : f32 to vector<8x128xf32>
    %287 = arith.addf %285, %286 : vector<8x128xf32>
    %288 = arith.mulf %281, %238 : vector<8x128xf32>
    %289 = arith.mulf %276, %282 : vector<8x128xf32>
    %290 = arith.addf %288, %289 : vector<8x128xf32>
    %291 = math.tanh %290 : vector<8x128xf32>
    %292 = arith.mulf %287, %291 : vector<8x128xf32>
    %293 = tpu.concatenate %292, %267 in 1 : vector<8x128xf32>, vector<8x128xf32> -> vector<8x256xf32>
    %cst_92 = arith.constant dense<0.000000e+00> : vector<8x1024xf32>
    %294 = tpu.matmul %293, %0, %cst_92 {dimension_numbers = #tpu.dot_dimension_numbers<[1], [0], [0], [1], [0, 0, 1, 1], [], []>} : vector<8x256xf32>, vector<256x1024xf32>, vector<8x1024xf32> -> vector<8x1024xf32>
    %295 = vector.extract_strided_slice %294 {offsets = [0, 0], sizes = [8, 512], strides = [1, 1]} : vector<8x1024xf32> to vector<8x512xf32>
    %296 = vector.extract_strided_slice %294 {offsets = [0, 512], sizes = [8, 512], strides = [1, 1]} : vector<8x1024xf32> to vector<8x512xf32>
    %297 = arith.addf %296, %3 : vector<8x512xf32>
    %298 = math.tanh %297 : vector<8x512xf32>
    %299 = vector.extract_strided_slice %298 {offsets = [0, 0], sizes = [8, 128], strides = [1, 1]} : vector<8x512xf32> to vector<8x128xf32>
    %cst_93 = arith.constant 5.000000e-01 : f32
    %300 = vector.broadcast %cst_93 : f32 to vector<8x128xf32>
    %301 = arith.mulf %300, %299 : vector<8x128xf32>
    %cst_94 = arith.constant 5.000000e-01 : f32
    %302 = vector.broadcast %cst_94 : f32 to vector<8x128xf32>
    %303 = arith.addf %301, %302 : vector<8x128xf32>
    %304 = vector.extract_strided_slice %298 {offsets = [0, 128], sizes = [8, 128], strides = [1, 1]} : vector<8x512xf32> to vector<8x128xf32>
    %cst_95 = arith.constant 5.000000e-01 : f32
    %305 = vector.broadcast %cst_95 : f32 to vector<8x128xf32>
    %306 = arith.mulf %305, %304 : vector<8x128xf32>
    %cst_96 = arith.constant 5.000000e-01 : f32
    %307 = vector.broadcast %cst_96 : f32 to vector<8x128xf32>
    %308 = arith.addf %306, %307 : vector<8x128xf32>
    %309 = vector.extract_strided_slice %298 {offsets = [0, 256], sizes = [8, 128], strides = [1, 1]} : vector<8x512xf32> to vector<8x128xf32>
    %310 = vector.extract_strided_slice %298 {offsets = [0, 384], sizes = [8, 128], strides = [1, 1]} : vector<8x512xf32> to vector<8x128xf32>
    %cst_97 = arith.constant 5.000000e-01 : f32
    %311 = vector.broadcast %cst_97 : f32 to vector<8x128xf32>
    %312 = arith.mulf %311, %310 : vector<8x128xf32>
    %cst_98 = arith.constant 5.000000e-01 : f32
    %313 = vector.broadcast %cst_98 : f32 to vector<8x128xf32>
    %314 = arith.addf %312, %313 : vector<8x128xf32>
    %315 = arith.mulf %308, %265 : vector<8x128xf32>
    %316 = arith.mulf %303, %309 : vector<8x128xf32>
    %317 = arith.addf %315, %316 : vector<8x128xf32>
    %318 = math.tanh %317 : vector<8x128xf32>
    %319 = arith.mulf %314, %318 : vector<8x128xf32>
    %c6 = arith.constant 6 : index
    %c0_99 = arith.constant 0 : index
    %c0_100 = arith.constant 0 : index
    %320 = vector.load %arg0[%c6, %c0_99, %c0_100] : memref<8x8x512xf32, #tpu.memory_space<vmem>>, vector<1x8x512xf32>
    %321 = vector.shape_cast %320 : vector<1x8x512xf32> to vector<8x512xf32>
    %322 = arith.addf %321, %295 : vector<8x512xf32>
    %323 = math.tanh %322 : vector<8x512xf32>
    %324 = vector.extract_strided_slice %323 {offsets = [0, 0], sizes = [8, 128], strides = [1, 1]} : vector<8x512xf32> to vector<8x128xf32>
    %cst_101 = arith.constant 5.000000e-01 : f32
    %325 = vector.broadcast %cst_101 : f32 to vector<8x128xf32>
    %326 = arith.mulf %325, %324 : vector<8x128xf32>
    %cst_102 = arith.constant 5.000000e-01 : f32
    %327 = vector.broadcast %cst_102 : f32 to vector<8x128xf32>
    %328 = arith.addf %326, %327 : vector<8x128xf32>
    %329 = vector.extract_strided_slice %323 {offsets = [0, 128], sizes = [8, 128], strides = [1, 1]} : vector<8x512xf32> to vector<8x128xf32>
    %cst_103 = arith.constant 5.000000e-01 : f32
    %330 = vector.broadcast %cst_103 : f32 to vector<8x128xf32>
    %331 = arith.mulf %330, %329 : vector<8x128xf32>
    %cst_104 = arith.constant 5.000000e-01 : f32
    %332 = vector.broadcast %cst_104 : f32 to vector<8x128xf32>
    %333 = arith.addf %331, %332 : vector<8x128xf32>
    %334 = vector.extract_strided_slice %323 {offsets = [0, 256], sizes = [8, 128], strides = [1, 1]} : vector<8x512xf32> to vector<8x128xf32>
    %335 = vector.extract_strided_slice %323 {offsets = [0, 384], sizes = [8, 128], strides = [1, 1]} : vector<8x512xf32> to vector<8x128xf32>
    %cst_105 = arith.constant 5.000000e-01 : f32
    %336 = vector.broadcast %cst_105 : f32 to vector<8x128xf32>
    %337 = arith.mulf %336, %335 : vector<8x128xf32>
    %cst_106 = arith.constant 5.000000e-01 : f32
    %338 = vector.broadcast %cst_106 : f32 to vector<8x128xf32>
    %339 = arith.addf %337, %338 : vector<8x128xf32>
    %340 = arith.mulf %333, %290 : vector<8x128xf32>
    %341 = arith.mulf %328, %334 : vector<8x128xf32>
    %342 = arith.addf %340, %341 : vector<8x128xf32>
    %343 = math.tanh %342 : vector<8x128xf32>
    %344 = arith.mulf %339, %343 : vector<8x128xf32>
    %345 = tpu.concatenate %344, %319 in 1 : vector<8x128xf32>, vector<8x128xf32> -> vector<8x256xf32>
    %cst_107 = arith.constant dense<0.000000e+00> : vector<8x1024xf32>
    %346 = tpu.matmul %345, %0, %cst_107 {dimension_numbers = #tpu.dot_dimension_numbers<[1], [0], [0], [1], [0, 0, 1, 1], [], []>} : vector<8x256xf32>, vector<256x1024xf32>, vector<8x1024xf32> -> vector<8x1024xf32>
    %347 = vector.extract_strided_slice %346 {offsets = [0, 0], sizes = [8, 512], strides = [1, 1]} : vector<8x1024xf32> to vector<8x512xf32>
    %348 = vector.extract_strided_slice %346 {offsets = [0, 512], sizes = [8, 512], strides = [1, 1]} : vector<8x1024xf32> to vector<8x512xf32>
    %349 = arith.addf %348, %3 : vector<8x512xf32>
    %350 = math.tanh %349 : vector<8x512xf32>
    %351 = vector.extract_strided_slice %350 {offsets = [0, 0], sizes = [8, 128], strides = [1, 1]} : vector<8x512xf32> to vector<8x128xf32>
    %cst_108 = arith.constant 5.000000e-01 : f32
    %352 = vector.broadcast %cst_108 : f32 to vector<8x128xf32>
    %353 = arith.mulf %352, %351 : vector<8x128xf32>
    %cst_109 = arith.constant 5.000000e-01 : f32
    %354 = vector.broadcast %cst_109 : f32 to vector<8x128xf32>
    %355 = arith.addf %353, %354 : vector<8x128xf32>
    %356 = vector.extract_strided_slice %350 {offsets = [0, 128], sizes = [8, 128], strides = [1, 1]} : vector<8x512xf32> to vector<8x128xf32>
    %cst_110 = arith.constant 5.000000e-01 : f32
    %357 = vector.broadcast %cst_110 : f32 to vector<8x128xf32>
    %358 = arith.mulf %357, %356 : vector<8x128xf32>
    %cst_111 = arith.constant 5.000000e-01 : f32
    %359 = vector.broadcast %cst_111 : f32 to vector<8x128xf32>
    %360 = arith.addf %358, %359 : vector<8x128xf32>
    %361 = vector.extract_strided_slice %350 {offsets = [0, 256], sizes = [8, 128], strides = [1, 1]} : vector<8x512xf32> to vector<8x128xf32>
    %362 = vector.extract_strided_slice %350 {offsets = [0, 384], sizes = [8, 128], strides = [1, 1]} : vector<8x512xf32> to vector<8x128xf32>
    %cst_112 = arith.constant 5.000000e-01 : f32
    %363 = vector.broadcast %cst_112 : f32 to vector<8x128xf32>
    %364 = arith.mulf %363, %362 : vector<8x128xf32>
    %cst_113 = arith.constant 5.000000e-01 : f32
    %365 = vector.broadcast %cst_113 : f32 to vector<8x128xf32>
    %366 = arith.addf %364, %365 : vector<8x128xf32>
    %367 = arith.mulf %360, %317 : vector<8x128xf32>
    %368 = arith.mulf %355, %361 : vector<8x128xf32>
    %369 = arith.addf %367, %368 : vector<8x128xf32>
    %370 = math.tanh %369 : vector<8x128xf32>
    %371 = arith.mulf %366, %370 : vector<8x128xf32>
    %c7 = arith.constant 7 : index
    %c0_114 = arith.constant 0 : index
    %c0_115 = arith.constant 0 : index
    %372 = vector.load %arg0[%c7, %c0_114, %c0_115] : memref<8x8x512xf32, #tpu.memory_space<vmem>>, vector<1x8x512xf32>
    %373 = vector.shape_cast %372 : vector<1x8x512xf32> to vector<8x512xf32>
    %374 = arith.addf %373, %347 : vector<8x512xf32>
    %375 = math.tanh %374 : vector<8x512xf32>
    %376 = vector.extract_strided_slice %375 {offsets = [0, 0], sizes = [8, 128], strides = [1, 1]} : vector<8x512xf32> to vector<8x128xf32>
    %cst_116 = arith.constant 5.000000e-01 : f32
    %377 = vector.broadcast %cst_116 : f32 to vector<8x128xf32>
    %378 = arith.mulf %377, %376 : vector<8x128xf32>
    %cst_117 = arith.constant 5.000000e-01 : f32
    %379 = vector.broadcast %cst_117 : f32 to vector<8x128xf32>
    %380 = arith.addf %378, %379 : vector<8x128xf32>
    %381 = vector.extract_strided_slice %375 {offsets = [0, 128], sizes = [8, 128], strides = [1, 1]} : vector<8x512xf32> to vector<8x128xf32>
    %cst_118 = arith.constant 5.000000e-01 : f32
    %382 = vector.broadcast %cst_118 : f32 to vector<8x128xf32>
    %383 = arith.mulf %382, %381 : vector<8x128xf32>
    %cst_119 = arith.constant 5.000000e-01 : f32
    %384 = vector.broadcast %cst_119 : f32 to vector<8x128xf32>
    %385 = arith.addf %383, %384 : vector<8x128xf32>
    %386 = vector.extract_strided_slice %375 {offsets = [0, 256], sizes = [8, 128], strides = [1, 1]} : vector<8x512xf32> to vector<8x128xf32>
    %387 = vector.extract_strided_slice %375 {offsets = [0, 384], sizes = [8, 128], strides = [1, 1]} : vector<8x512xf32> to vector<8x128xf32>
    %cst_120 = arith.constant 5.000000e-01 : f32
    %388 = vector.broadcast %cst_120 : f32 to vector<8x128xf32>
    %389 = arith.mulf %388, %387 : vector<8x128xf32>
    %cst_121 = arith.constant 5.000000e-01 : f32
    %390 = vector.broadcast %cst_121 : f32 to vector<8x128xf32>
    %391 = arith.addf %389, %390 : vector<8x128xf32>
    %392 = arith.mulf %385, %342 : vector<8x128xf32>
    %393 = arith.mulf %380, %386 : vector<8x128xf32>
    %394 = arith.addf %392, %393 : vector<8x128xf32>
    %395 = math.tanh %394 : vector<8x128xf32>
    %396 = arith.mulf %391, %395 : vector<8x128xf32>
    %397 = tpu.concatenate %396, %371 in 1 : vector<8x128xf32>, vector<8x128xf32> -> vector<8x256xf32>
    %cst_122 = arith.constant dense<0.000000e+00> : vector<8x1024xf32>
    %398 = tpu.matmul %397, %0, %cst_122 {dimension_numbers = #tpu.dot_dimension_numbers<[1], [0], [0], [1], [0, 0, 1, 1], [], []>} : vector<8x256xf32>, vector<256x1024xf32>, vector<8x1024xf32> -> vector<8x1024xf32>
    %399 = vector.extract_strided_slice %398 {offsets = [0, 512], sizes = [8, 512], strides = [1, 1]} : vector<8x1024xf32> to vector<8x512xf32>
    %400 = arith.addf %399, %3 : vector<8x512xf32>
    %401 = math.tanh %400 : vector<8x512xf32>
    %402 = vector.extract_strided_slice %401 {offsets = [0, 0], sizes = [8, 128], strides = [1, 1]} : vector<8x512xf32> to vector<8x128xf32>
    %cst_123 = arith.constant 5.000000e-01 : f32
    %403 = vector.broadcast %cst_123 : f32 to vector<8x128xf32>
    %404 = arith.mulf %403, %402 : vector<8x128xf32>
    %cst_124 = arith.constant 5.000000e-01 : f32
    %405 = vector.broadcast %cst_124 : f32 to vector<8x128xf32>
    %406 = arith.addf %404, %405 : vector<8x128xf32>
    %407 = vector.extract_strided_slice %401 {offsets = [0, 128], sizes = [8, 128], strides = [1, 1]} : vector<8x512xf32> to vector<8x128xf32>
    %cst_125 = arith.constant 5.000000e-01 : f32
    %408 = vector.broadcast %cst_125 : f32 to vector<8x128xf32>
    %409 = arith.mulf %408, %407 : vector<8x128xf32>
    %cst_126 = arith.constant 5.000000e-01 : f32
    %410 = vector.broadcast %cst_126 : f32 to vector<8x128xf32>
    %411 = arith.addf %409, %410 : vector<8x128xf32>
    %412 = vector.extract_strided_slice %401 {offsets = [0, 256], sizes = [8, 128], strides = [1, 1]} : vector<8x512xf32> to vector<8x128xf32>
    %413 = vector.extract_strided_slice %401 {offsets = [0, 384], sizes = [8, 128], strides = [1, 1]} : vector<8x512xf32> to vector<8x128xf32>
    %cst_127 = arith.constant 5.000000e-01 : f32
    %414 = vector.broadcast %cst_127 : f32 to vector<8x128xf32>
    %415 = arith.mulf %414, %413 : vector<8x128xf32>
    %cst_128 = arith.constant 5.000000e-01 : f32
    %416 = vector.broadcast %cst_128 : f32 to vector<8x128xf32>
    %417 = arith.addf %415, %416 : vector<8x128xf32>
    %418 = arith.mulf %411, %369 : vector<8x128xf32>
    %419 = arith.mulf %406, %412 : vector<8x128xf32>
    %420 = arith.addf %418, %419 : vector<8x128xf32>
    %421 = math.tanh %420 : vector<8x128xf32>
    %422 = arith.mulf %417, %421 : vector<8x128xf32>
    %423 = vector.broadcast %4 : vector<1x128xf32> to vector<8x128xf32>
    %424 = arith.mulf %422, %423 : vector<8x128xf32>
    %cst_129 = arith.constant dense<0.000000e+00> : vector<8xf32>
    %425 = vector.multi_reduction <add>, %424, %cst_129 [1] : vector<8x128xf32> to vector<8xf32>
    %426 = vector.shape_cast %425 : vector<8xf32> to vector<8x1xf32>
    %427 = vector.broadcast %5 : vector<1x1xf32> to vector<8x1xf32>
    %428 = arith.addf %426, %427 : vector<8x1xf32>
    %c0_130 = arith.constant 0 : index
    %c0_131 = arith.constant 0 : index
    %429 = vector.load %arg5[%c0_130, %c0_131] : memref<8x1xf32, #tpu.memory_space<vmem>>, vector<8x1xf32>
    tpu.vector_store %arg5[%c0_130, %c0_131], %428 {strides = array<i32>} : memref<8x1xf32, #tpu.memory_space<vmem>>, vector<8x1xf32>,
    return
  }
}

</mosaic_0001>

<llo_original>
// kernel: tpu_custom_call.1
$region0: #{tpu_custom_call.1}
  #allocation0 [shape = 'u32[]', space=smem, size = 0x4, offset = 0x4, fixed_abs, tag = 'smem constant byte address 0x4 - core index']
  #allocation1 [shape = 'u32[72,128]{1,0:T(1,128)}', space=vmem, size = 0x9000, scoped, tag = 'internal scratch']
  #allocation2 [shape = 'f32[1,1]{1,0:T(1,128)S(1)}', space=vmem, size = 0x200, scoped, tag = 'scoped memory for tpu_custom_call.1']
  %s0 = inlined_call_operand.hbm [shape: f32[8,8,512], index: 0, kind: input, shape index: {}]
  %s1 = inlined_call_operand.hbm [shape: f32[256,1024], index: 1, kind: input, shape index: {}]
  %s2 = inlined_call_operand.hbm [shape: f32[1,512], index: 2, kind: input, shape index: {}]
  %s3 = inlined_call_operand.vmem [shape: f32[1,128], index: 3, kind: input, shape index: {}]
  %s4 = inlined_call_operand.<no memory space> [shape: f32[1,1], index: 4, kind: input, shape index: {}]
  %s5 = inlined_call_operand.vmem [shape: f32[8,1], index: 5, kind: output, shape index: {}]
  %s6 = sld [smem:[#allocation0]]
  $region42: #{tpu_custom_call.1} parent=0
    _
  %s8 = ssub.s32 1, %s6
  %s9 = scalar_select 0, %s8, %s6
  %v10 = vstv %s4
  %11 = vst [vmem:[#allocation2] sm:$0x1] %v10
  $region1: #{tpu_custom_call.1} parent=0
    #allocation3 [shape = 'u8[131072]{0}', space=vmem, size = 0x20000, scoped, tag = 'input window, operand 0, single buffered']
    #allocation4 [shape = 's32[1]{0}', space=sflag, size = 0x4, scoped, tag = 'scoped memory for tpu_custom_call.1']
    #allocation5 [shape = 'u8[1048576]{0}', space=vmem, size = 0x100000, scoped, tag = 'input window, operand 1, single buffered']
    #allocation6 [shape = 's32[1]{0}', space=sflag, size = 0x4, scoped, tag = 'scoped memory for tpu_custom_call.1']
    #allocation7 [shape = 'u8[2048]{0}', space=vmem, size = 0x800, scoped, tag = 'input window, operand 2, single buffered']
    %12 = vsyncpa [#allocation4], 0
    %13 = vsyncpa [#allocation6], 0
    // Predicated region
    $region2: #{tpu_custom_call.1} parent=1 // pred_check
      _
    $region3: #{tpu_custom_call.1} parent=1 // pred_check_branch
      %15 = sbr.rel (0) target = $region5
    $region4: #{tpu_custom_call.1} parent=1 // pred_region
      %17 = vsyncadd [#allocation4], 0
      %s18 = sshll.u32 %s0, 4
      %s19 = int_to_ptr.hbm [resolvable:$true] %s18
      %s20 = sshll.u32 [#allocation3], 4
      %s21 = int_to_ptr.vmem [resolvable:$true] %s20
      %26 = dma.hbm_to_vmem [thread:$0]  %s19, 4096, %s21, [#allocation4], 512, 512, 32
    $region5: #{tpu_custom_call.1} parent=1 // pred_fallthru
      _
    // Predicated region
    $region6: #{tpu_custom_call.1} parent=1 // pred_check
      _
    $region7: #{tpu_custom_call.1} parent=1 // pred_check_branch
      %28 = sbr.rel (0) target = $region9
    $region8: #{tpu_custom_call.1} parent=1 // pred_region
      %30 = vsyncadd [#allocation6], 0
      %s31 = sshll.u32 %s1, 4
      %s32 = int_to_ptr.hbm [resolvable:$true] %s31
      %s33 = sshll.u32 [#allocation5], 4
      %s34 = int_to_ptr.vmem [resolvable:$true] %s33
      %39 = dma.hbm_to_vmem [thread:$0]  %s32, 32768, %s34, [#allocation6], 1024, 1024, 64
    $region9: #{tpu_custom_call.1} parent=1 // pred_fallthru
      _
    // Predicated region
    $region10: #{tpu_custom_call.1} parent=1 // pred_check
      _
    $region11: #{tpu_custom_call.1} parent=1 // pred_check_branch
      %41 = sbr.rel (0) target = $region13
    $region12: #{tpu_custom_call.1} parent=1 // pred_region
      %43 = vsyncadd [#allocation6], 0
      %s45 = sshll.u32 %s2, 4
      %s46 = int_to_ptr.hbm [resolvable:$true] %s45
      %s47 = sshll.u32 [#allocation7], 4
      %s48 = int_to_ptr.vmem [resolvable:$true] %s47
      %50 = dma.hbm_to_vmem [thread:$0]  %s46, 64, %s48, [#allocation6]
    $region13: #{tpu_custom_call.1} parent=1 // pred_fallthru
      _
    // Predicated region
    $region14: #{tpu_custom_call.1} parent=1 // pred_check
      _
    $region15: #{tpu_custom_call.1} parent=1 // pred_check_branch
      %52 = sbr.rel (0) target = $region17
    $region16: #{tpu_custom_call.1} parent=1 // pred_region
      _
    $region17: #{tpu_custom_call.1} parent=1 // pred_fallthru
      _
    // Predicated region
    $region18: #{tpu_custom_call.1} parent=1 // pred_check
      _
    $region19: #{tpu_custom_call.1} parent=1 // pred_check_branch
      %54 = sbr.rel (0) target = $region21
    $region20: #{tpu_custom_call.1} parent=1 // pred_region
      _
    $region21: #{tpu_custom_call.1} parent=1 // pred_fallthru
      _
    // Predicated region
    $region22: #{tpu_custom_call.1} parent=1 // pred_check
      _
    $region23: #{tpu_custom_call.1} parent=1 // pred_check_branch
      %56 = sbr.rel (0) target = $region25
    $region24: #{tpu_custom_call.1} parent=1 // pred_region
      %58 = dma.done [#allocation4], 4096
    $region25: #{tpu_custom_call.1} parent=1 // pred_fallthru
      _
    // Predicated region
    $region26: #{tpu_custom_call.1} parent=1 // pred_check
      _
    $region27: #{tpu_custom_call.1} parent=1 // pred_check_branch
      %60 = sbr.rel (0) target = $region29
    $region28: #{tpu_custom_call.1} parent=1 // pred_region
      %62 = dma.done [#allocation6], 32768
    $region29: #{tpu_custom_call.1} parent=1 // pred_fallthru
      _
    // Predicated region
    $region30: #{tpu_custom_call.1} parent=1 // pred_check
      _
    $region31: #{tpu_custom_call.1} parent=1 // pred_check_branch
      %64 = sbr.rel (0) target = $region33
    $region32: #{tpu_custom_call.1} parent=1 // pred_region
      %66 = dma.done [#allocation6], 64
    $region33: #{tpu_custom_call.1} parent=1 // pred_fallthru
      _
    %v67 = vld [vmem:[#allocation5] sm:$0xff]
    %v68 = vld [vmem:[#allocation5 + $0x8] sm:$0xff]
    %v69 = vld [vmem:[#allocation5 + $0x10] sm:$0xff]
    %v70 = vld [vmem:[#allocation5 + $0x18] sm:$0xff]
    %v71 = vld [vmem:[#allocation5 + $0x20] sm:$0xff]
    %v72 = vld [vmem:[#allocation5 + $0x28] sm:$0xff]
    %v73 = vld [vmem:[#allocation5 + $0x30] sm:$0xff]
    %v74 = vld [vmem:[#allocation5 + $0x38] sm:$0xff]
    %v75 = vld [vmem:[#allocation5 + $0x40] sm:$0xff]
    %v76 = vld [vmem:[#allocation5 + $0x48] sm:$0xff]
    %v77 = vld [vmem:[#allocation5 + $0x50] sm:$0xff]
    %v78 = vld [vmem:[#allocation5 + $0x58] sm:$0xff]
    %v79 = vld [vmem:[#allocation5 + $0x60] sm:$0xff]
    %v80 = vld [vmem:[#allocation5 + $0x68] sm:$0xff]
    %v81 = vld [vmem:[#allocation5 + $0x70] sm:$0xff]
    %v82 = vld [vmem:[#allocation5 + $0x78] sm:$0xff]
    %v83 = vld [vmem:[#allocation5 + $0x80] sm:$0xff]
    %v84 = vld [vmem:[#allocation5 + $0x88] sm:$0xff]
    %v85 = vld [vmem:[#allocation5 + $0x90] sm:$0xff]
    %v86 = vld [vmem:[#allocation5 + $0x98] sm:$0xff]
    %v87 = vld [vmem:[#allocation5 + $0xa0] sm:$0xff]
    %v88 = vld [vmem:[#allocation5 + $0xa8] sm:$0xff]
    %v89 = vld [vmem:[#allocation5 + $0xb0] sm:$0xff]
    %v90 = vld [vmem:[#allocation5 + $0xb8] sm:$0xff]
    %v91 = vld [vmem:[#allocation5 + $0xc0] sm:$0xff]
    %v92 = vld [vmem:[#allocation5 + $0xc8] sm:$0xff]
    %v93 = vld [vmem:[#allocation5 + $0xd0] sm:$0xff]
    %v94 = vld [vmem:[#allocation5 + $0xd8] sm:$0xff]
    %v95 = vld [vmem:[#allocation5 + $0xe0] sm:$0xff]
    %v96 = vld [vmem:[#allocation5 + $0xe8] sm:$0xff]
    %v97 = vld [vmem:[#allocation5 + $0xf0] sm:$0xff]
    %v98 = vld [vmem:[#allocation5 + $0xf8] sm:$0xff]
    %v99 = vld [vmem:[#allocation5 + $0x100] sm:$0xff]
    %v100 = vld [vmem:[#allocation5 + $0x108] sm:$0xff]
    %v101 = vld [vmem:[#allocation5 + $0x110] sm:$0xff]
    %v102 = vld [vmem:[#allocation5 + $0x118] sm:$0xff]
    %v103 = vld [vmem:[#allocation5 + $0x120] sm:$0xff]
    %v104 = vld [vmem:[#allocation5 + $0x128] sm:$0xff]
    %v105 = vld [vmem:[#allocation5 + $0x130] sm:$0xff]
    %v106 = vld [vmem:[#allocation5 + $0x138] sm:$0xff]
    %v107 = vld [vmem:[#allocation5 + $0x140] sm:$0xff]
    %v108 = vld [vmem:[#allocation5 + $0x148] sm:$0xff]
    %v109 = vld [vmem:[#allocation5 + $0x150] sm:$0xff]
    %v110 = vld [vmem:[#allocation5 + $0x158] sm:$0xff]
    %v111 = vld [vmem:[#allocation5 + $0x160] sm:$0xff]
    %v112 = vld [vmem:[#allocation5 + $0x168] sm:$0xff]
    %v113 = vld [vmem:[#allocation5 + $0x170] sm:$0xff]
    %v114 = vld [vmem:[#allocation5 + $0x178] sm:$0xff]
    %v115 = vld [vmem:[#allocation5 + $0x180] sm:$0xff]
    %v116 = vld [vmem:[#allocation5 + $0x188] sm:$0xff]
    %v117 = vld [vmem:[#allocation5 + $0x190] sm:$0xff]
    %v118 = vld [vmem:[#allocation5 + $0x198] sm:$0xff]
    %v119 = vld [vmem:[#allocation5 + $0x1a0] sm:$0xff]
    %v120 = vld [vmem:[#allocation5 + $0x1a8] sm:$0xff]
    %v121 = vld [vmem:[#allocation5 + $0x1b0] sm:$0xff]
    %v122 = vld [vmem:[#allocation5 + $0x1b8] sm:$0xff]
    %v123 = vld [vmem:[#allocation5 + $0x1c0] sm:$0xff]
    %v124 = vld [vmem:[#allocation5 + $0x1c8] sm:$0xff]
    %v125 = vld [vmem:[#allocation5 + $0x1d0] sm:$0xff]
    %v126 = vld [vmem:[#allocation5 + $0x1d8] sm:$0xff]
    %v127 = vld [vmem:[#allocation5 + $0x1e0] sm:$0xff]
    %v128 = vld [vmem:[#allocation5 + $0x1e8] sm:$0xff]
    %v129 = vld [vmem:[#allocation5 + $0x1f0] sm:$0xff]
    %v130 = vld [vmem:[#allocation5 + $0x1f8] sm:$0xff]
    %v131 = vld [vmem:[#allocation5 + $0x200] sm:$0xff]
    %v132 = vld [vmem:[#allocation5 + $0x208] sm:$0xff]
    %v133 = vld [vmem:[#allocation5 + $0x210] sm:$0xff]
    %v134 = vld [vmem:[#allocation5 + $0x218] sm:$0xff]
    %v135 = vld [vmem:[#allocation5 + $0x220] sm:$0xff]
    %v136 = vld [vmem:[#allocation5 + $0x228] sm:$0xff]
    %v137 = vld [vmem:[#allocation5 + $0x230] sm:$0xff]
    %v138 = vld [vmem:[#allocation5 + $0x238] sm:$0xff]
    %v139 = vld [vmem:[#allocation5 + $0x240] sm:$0xff]
    %v140 = vld [vmem:[#allocation5 + $0x248] sm:$0xff]
    %v141 = vld [vmem:[#allocation5 + $0x250] sm:$0xff]
    %v142 = vld [vmem:[#allocation5 + $0x258] sm:$0xff]
    %v143 = vld [vmem:[#allocation5 + $0x260] sm:$0xff]
    %v144 = vld [vmem:[#allocation5 + $0x268] sm:$0xff]
    %v145 = vld [vmem:[#allocation5 + $0x270] sm:$0xff]
    %v146 = vld [vmem:[#allocation5 + $0x278] sm:$0xff]
    %v147 = vld [vmem:[#allocation5 + $0x280] sm:$0xff]
    %v148 = vld [vmem:[#allocation5 + $0x288] sm:$0xff]
    %v149 = vld [vmem:[#allocation5 + $0x290] sm:$0xff]
    %v150 = vld [vmem:[#allocation5 + $0x298] sm:$0xff]
    %v151 = vld [vmem:[#allocation5 + $0x2a0] sm:$0xff]
    %v152 = vld [vmem:[#allocation5 + $0x2a8] sm:$0xff]
    %v153 = vld [vmem:[#allocation5 + $0x2b0] sm:$0xff]
    %v154 = vld [vmem:[#allocation5 + $0x2b8] sm:$0xff]
    %v155 = vld [vmem:[#allocation5 + $0x2c0] sm:$0xff]
    %v156 = vld [vmem:[#allocation5 + $0x2c8] sm:$0xff]
    %v157 = vld [vmem:[#allocation5 + $0x2d0] sm:$0xff]
    %v158 = vld [vmem:[#allocation5 + $0x2d8] sm:$0xff]
    %v159 = vld [vmem:[#allocation5 + $0x2e0] sm:$0xff]
    %v160 = vld [vmem:[#allocation5 + $0x2e8] sm:$0xff]
    %v161 = vld [vmem:[#allocation5 + $0x2f0] sm:$0xff]
    %v162 = vld [vmem:[#allocation5 + $0x2f8] sm:$0xff]
    %v163 = vld [vmem:[#allocation5 + $0x300] sm:$0xff]
    %v164 = vld [vmem:[#allocation5 + $0x308] sm:$0xff]
    %v165 = vld [vmem:[#allocation5 + $0x310] sm:$0xff]
    %v166 = vld [vmem:[#allocation5 + $0x318] sm:$0xff]
    %v167 = vld [vmem:[#allocation5 + $0x320] sm:$0xff]
    %v168 = vld [vmem:[#allocation5 + $0x328] sm:$0xff]
    %v169 = vld [vmem:[#allocation5 + $0x330] sm:$0xff]
    %v170 = vld [vmem:[#allocation5 + $0x338] sm:$0xff]
    %v171 = vld [vmem:[#allocation5 + $0x340] sm:$0xff]
    %v172 = vld [vmem:[#allocation5 + $0x348] sm:$0xff]
    %v173 = vld [vmem:[#allocation5 + $0x350] sm:$0xff]
    %v174 = vld [vmem:[#allocation5 + $0x358] sm:$0xff]
    %v175 = vld [vmem:[#allocation5 + $0x360] sm:$0xff]
    %v176 = vld [vmem:[#allocation5 + $0x368] sm:$0xff]
    %v177 = vld [vmem:[#allocation5 + $0x370] sm:$0xff]
    %v178 = vld [vmem:[#allocation5 + $0x378] sm:$0xff]
    %v179 = vld [vmem:[#allocation5 + $0x380] sm:$0xff]
    %v180 = vld [vmem:[#allocation5 + $0x388] sm:$0xff]
    %v181 = vld [vmem:[#allocation5 + $0x390] sm:$0xff]
    %v182 = vld [vmem:[#allocation5 + $0x398] sm:$0xff]
    %v183 = vld [vmem:[#allocation5 + $0x3a0] sm:$0xff]
    %v184 = vld [vmem:[#allocation5 + $0x3a8] sm:$0xff]
    %v185 = vld [vmem:[#allocation5 + $0x3b0] sm:$0xff]
    %v186 = vld [vmem:[#allocation5 + $0x3b8] sm:$0xff]
    %v187 = vld [vmem:[#allocation5 + $0x3c0] sm:$0xff]
    %v188 = vld [vmem:[#allocation5 + $0x3c8] sm:$0xff]
    %v189 = vld [vmem:[#allocation5 + $0x3d0] sm:$0xff]
    %v190 = vld [vmem:[#allocation5 + $0x3d8] sm:$0xff]
    %v191 = vld [vmem:[#allocation5 + $0x3e0] sm:$0xff]
    %v192 = vld [vmem:[#allocation5 + $0x3e8] sm:$0xff]
    %v193 = vld [vmem:[#allocation5 + $0x3f0] sm:$0xff]
    %v194 = vld [vmem:[#allocation5 + $0x3f8] sm:$0xff]
    %v195 = vld [vmem:[#allocation5 + $0x400] sm:$0xff]
    %v196 = vld [vmem:[#allocation5 + $0x408] sm:$0xff]
    %v197 = vld [vmem:[#allocation5 + $0x410] sm:$0xff]
    %v198 = vld [vmem:[#allocation5 + $0x418] sm:$0xff]
    %v199 = vld [vmem:[#allocation5 + $0x420] sm:$0xff]
    %v200 = vld [vmem:[#allocation5 + $0x428] sm:$0xff]
    %v201 = vld [vmem:[#allocation5 + $0x430] sm:$0xff]
    %v202 = vld [vmem:[#allocation5 + $0x438] sm:$0xff]
    %v203 = vld [vmem:[#allocation5 + $0x440] sm:$0xff]
    %v204 = vld [vmem:[#allocation5 + $0x448] sm:$0xff]
    %v205 = vld [vmem:[#allocation5 + $0x450] sm:$0xff]
    %v206 = vld [vmem:[#allocation5 + $0x458] sm:$0xff]
    %v207 = vld [vmem:[#allocation5 + $0x460] sm:$0xff]
    %v208 = vld [vmem:[#allocation5 + $0x468] sm:$0xff]
    %v209 = vld [vmem:[#allocation5 + $0x470] sm:$0xff]
    %v210 = vld [vmem:[#allocation5 + $0x478] sm:$0xff]
    %v211 = vld [vmem:[#allocation5 + $0x480] sm:$0xff]
    %v212 = vld [vmem:[#allocation5 + $0x488] sm:$0xff]
    %v213 = vld [vmem:[#allocation5 + $0x490] sm:$0xff]
    %v214 = vld [vmem:[#allocation5 + $0x498] sm:$0xff]
    %v215 = vld [vmem:[#allocation5 + $0x4a0] sm:$0xff]
    %v216 = vld [vmem:[#allocation5 + $0x4a8] sm:$0xff]
    %v217 = vld [vmem:[#allocation5 + $0x4b0] sm:$0xff]
    %v218 = vld [vmem:[#allocation5 + $0x4b8] sm:$0xff]
    %v219 = vld [vmem:[#allocation5 + $0x4c0] sm:$0xff]
    %v220 = vld [vmem:[#allocation5 + $0x4c8] sm:$0xff]
    %v221 = vld [vmem:[#allocation5 + $0x4d0] sm:$0xff]
    %v222 = vld [vmem:[#allocation5 + $0x4d8] sm:$0xff]
    %v223 = vld [vmem:[#allocation5 + $0x4e0] sm:$0xff]
    %v224 = vld [vmem:[#allocation5 + $0x4e8] sm:$0xff]
    %v225 = vld [vmem:[#allocation5 + $0x4f0] sm:$0xff]
    %v226 = vld [vmem:[#allocation5 + $0x4f8] sm:$0xff]
    %v227 = vld [vmem:[#allocation5 + $0x500] sm:$0xff]
    %v228 = vld [vmem:[#allocation5 + $0x508] sm:$0xff]
    %v229 = vld [vmem:[#allocation5 + $0x510] sm:$0xff]
    %v230 = vld [vmem:[#allocation5 + $0x518] sm:$0xff]
    %v231 = vld [vmem:[#allocation5 + $0x520] sm:$0xff]
    %v232 = vld [vmem:[#allocation5 + $0x528] sm:$0xff]
    %v233 = vld [vmem:[#allocation5 + $0x530] sm:$0xff]
    %v234 = vld [vmem:[#allocation5 + $0x538] sm:$0xff]
    %v235 = vld [vmem:[#allocation5 + $0x540] sm:$0xff]
    %v236 = vld [vmem:[#allocation5 + $0x548] sm:$0xff]
    %v237 = vld [vmem:[#allocation5 + $0x550] sm:$0xff]
    %v238 = vld [vmem:[#allocation5 + $0x558] sm:$0xff]
    %v239 = vld [vmem:[#allocation5 + $0x560] sm:$0xff]
    %v240 = vld [vmem:[#allocation5 + $0x568] sm:$0xff]
    %v241 = vld [vmem:[#allocation5 + $0x570] sm:$0xff]
    %v242 = vld [vmem:[#allocation5 + $0x578] sm:$0xff]
    %v243 = vld [vmem:[#allocation5 + $0x580] sm:$0xff]
    %v244 = vld [vmem:[#allocation5 + $0x588] sm:$0xff]
    %v245 = vld [vmem:[#allocation5 + $0x590] sm:$0xff]
    %v246 = vld [vmem:[#allocation5 + $0x598] sm:$0xff]
    %v247 = vld [vmem:[#allocation5 + $0x5a0] sm:$0xff]
    %v248 = vld [vmem:[#allocation5 + $0x5a8] sm:$0xff]
    %v249 = vld [vmem:[#allocation5 + $0x5b0] sm:$0xff]
    %v250 = vld [vmem:[#allocation5 + $0x5b8] sm:$0xff]
    %v251 = vld [vmem:[#allocation5 + $0x5c0] sm:$0xff]
    %v252 = vld [vmem:[#allocation5 + $0x5c8] sm:$0xff]
    %v253 = vld [vmem:[#allocation5 + $0x5d0] sm:$0xff]
    %v254 = vld [vmem:[#allocation5 + $0x5d8] sm:$0xff]
    %v255 = vld [vmem:[#allocation5 + $0x5e0] sm:$0xff]
    %v256 = vld [vmem:[#allocation5 + $0x5e8] sm:$0xff]
    %v257 = vld [vmem:[#allocation5 + $0x5f0] sm:$0xff]
    %v258 = vld [vmem:[#allocation5 + $0x5f8] sm:$0xff]
    %v259 = vld [vmem:[#allocation5 + $0x600] sm:$0xff]
    %v260 = vld [vmem:[#allocation5 + $0x608] sm:$0xff]
    %v261 = vld [vmem:[#allocation5 + $0x610] sm:$0xff]
    %v262 = vld [vmem:[#allocation5 + $0x618] sm:$0xff]
    %v263 = vld [vmem:[#allocation5 + $0x620] sm:$0xff]
    %v264 = vld [vmem:[#allocation5 + $0x628] sm:$0xff]
    %v265 = vld [vmem:[#allocation5 + $0x630] sm:$0xff]
    %v266 = vld [vmem:[#allocation5 + $0x638] sm:$0xff]
    %v267 = vld [vmem:[#allocation5 + $0x640] sm:$0xff]
    %v268 = vld [vmem:[#allocation5 + $0x648] sm:$0xff]
    %v269 = vld [vmem:[#allocation5 + $0x650] sm:$0xff]
    %v270 = vld [vmem:[#allocation5 + $0x658] sm:$0xff]
    %v271 = vld [vmem:[#allocation5 + $0x660] sm:$0xff]
    %v272 = vld [vmem:[#allocation5 + $0x668] sm:$0xff]
    %v273 = vld [vmem:[#allocation5 + $0x670] sm:$0xff]
    %v274 = vld [vmem:[#allocation5 + $0x678] sm:$0xff]
    %v275 = vld [vmem:[#allocation5 + $0x680] sm:$0xff]
    %v276 = vld [vmem:[#allocation5 + $0x688] sm:$0xff]
    %v277 = vld [vmem:[#allocation5 + $0x690] sm:$0xff]
    %v278 = vld [vmem:[#allocation5 + $0x698] sm:$0xff]
    %v279 = vld [vmem:[#allocation5 + $0x6a0] sm:$0xff]
    %v280 = vld [vmem:[#allocation5 + $0x6a8] sm:$0xff]
    %v281 = vld [vmem:[#allocation5 + $0x6b0] sm:$0xff]
    %v282 = vld [vmem:[#allocation5 + $0x6b8] sm:$0xff]
    %v283 = vld [vmem:[#allocation5 + $0x6c0] sm:$0xff]
    %v284 = vld [vmem:[#allocation5 + $0x6c8] sm:$0xff]
    %v285 = vld [vmem:[#allocation5 + $0x6d0] sm:$0xff]
    %v286 = vld [vmem:[#allocation5 + $0x6d8] sm:$0xff]
    %v287 = vld [vmem:[#allocation5 + $0x6e0] sm:$0xff]
    %v288 = vld [vmem:[#allocation5 + $0x6e8] sm:$0xff]
    %v289 = vld [vmem:[#allocation5 + $0x6f0] sm:$0xff]
    %v290 = vld [vmem:[#allocation5 + $0x6f8] sm:$0xff]
    %v291 = vld [vmem:[#allocation5 + $0x700] sm:$0xff]
    %v292 = vld [vmem:[#allocation5 + $0x708] sm:$0xff]
    %v293 = vld [vmem:[#allocation5 + $0x710] sm:$0xff]
    %v294 = vld [vmem:[#allocation5 + $0x718] sm:$0xff]
    %v295 = vld [vmem:[#allocation5 + $0x720] sm:$0xff]
    %v296 = vld [vmem:[#allocation5 + $0x728] sm:$0xff]
    %v297 = vld [vmem:[#allocation5 + $0x730] sm:$0xff]
    %v298 = vld [vmem:[#allocation5 + $0x738] sm:$0xff]
    %v299 = vld [vmem:[#allocation5 + $0x740] sm:$0xff]
    %v300 = vld [vmem:[#allocation5 + $0x748] sm:$0xff]
    %v301 = vld [vmem:[#allocation5 + $0x750] sm:$0xff]
    %v302 = vld [vmem:[#allocation5 + $0x758] sm:$0xff]
    %v303 = vld [vmem:[#allocation5 + $0x760] sm:$0xff]
    %v304 = vld [vmem:[#allocation5 + $0x768] sm:$0xff]
    %v305 = vld [vmem:[#allocation5 + $0x770] sm:$0xff]
    %v306 = vld [vmem:[#allocation5 + $0x778] sm:$0xff]
    %v307 = vld [vmem:[#allocation5 + $0x780] sm:$0xff]
    %v308 = vld [vmem:[#allocation5 + $0x788] sm:$0xff]
    %v309 = vld [vmem:[#allocation5 + $0x790] sm:$0xff]
    %v310 = vld [vmem:[#allocation5 + $0x798] sm:$0xff]
    %v311 = vld [vmem:[#allocation5 + $0x7a0] sm:$0xff]
    %v312 = vld [vmem:[#allocation5 + $0x7a8] sm:$0xff]
    %v313 = vld [vmem:[#allocation5 + $0x7b0] sm:$0xff]
    %v314 = vld [vmem:[#allocation5 + $0x7b8] sm:$0xff]
    %v315 = vld [vmem:[#allocation5 + $0x7c0] sm:$0xff]
    %v316 = vld [vmem:[#allocation5 + $0x7c8] sm:$0xff]
    %v317 = vld [vmem:[#allocation5 + $0x7d0] sm:$0xff]
    %v318 = vld [vmem:[#allocation5 + $0x7d8] sm:$0xff]
    %v319 = vld [vmem:[#allocation5 + $0x7e0] sm:$0xff]
    %v320 = vld [vmem:[#allocation5 + $0x7e8] sm:$0xff]
    %v321 = vld [vmem:[#allocation5 + $0x7f0] sm:$0xff]
    %v322 = vld [vmem:[#allocation5 + $0x7f8] sm:$0xff]
    %v323 = vld [vmem:[#allocation7] sm:$0xf]
    %v325 = vperm.slane %v323, 0
    %v326 = vperm.slane %v323, 1
    %v327 = vperm.slane %v323, 2
    %v328 = vperm.slane %v323, 3
    %v333 = vld [vmem:[%s3] sm:$0x1]
    %v334 = vld [vmem:[#allocation2] sm:$0x1]
    %v335 = vld [vmem:[#allocation3] sm:$0xff]
    %v336 = vld [vmem:[#allocation3 + $0x8] sm:$0xff]
    %v337 = vld [vmem:[#allocation3 + $0x10] sm:$0xff]
    %v338 = vld [vmem:[#allocation3 + $0x18] sm:$0xff]
    %v339 = vadd.f32 %v335, 0.0
    %v340 = vadd.f32 %v336, 0.0
    %v341 = vadd.f32 %v337, 0.0
    %v342 = vadd.f32 %v338, 0.0
    %v343 = vtanh.pop %v339
    %v344 = vtanh.pop %v340
    %v345 = vtanh.pop %v341
    %v346 = vtanh.pop %v342
    %v347 = vmul.f32 %v343, 0.5
    %v348 = vadd.f32 %v347, 0.5
    %v349 = vmul.f32 %v344, 0.5
    %v350 = vadd.f32 %v349, 0.5
    %v351 = vmul.f32 %v346, 0.5
    %v352 = vadd.f32 %v351, 0.5
    %v353 = vmul.f32 %v350, 0.0
    %v354 = vmul.f32 %v348, %v345
    %v355 = vadd.f32 %v353, %v354
    %v356 = vtanh.pop %v355
    %v357 = vmul.f32 %v352, %v356
    %358 = vmatpush.msra.mxu0 %v187
    %359 = vmatpush.msra.mxu0 %v179
    %360 = vmatpush.msra.mxu0 %v171
    %361 = vmatpush.msra.mxu0 %v163
    %362 = vmatpush.msra.mxu0 %v155
    %363 = vmatpush.msra.mxu0 %v147
    %364 = vmatpush.msra.mxu0 %v139
    %365 = vmatpush.msra.mxu0 %v131
    %366 = vmatpush.msra.mxu0 %v123
    %367 = vmatpush.msra.mxu0 %v115
    %368 = vmatpush.msra.mxu0 %v107
    %369 = vmatpush.msra.mxu0 %v99
    %370 = vmatpush.msra.mxu0 %v91
    %371 = vmatpush.msra.mxu0 %v83
    %372 = vmatpush.msra.mxu0 %v75
    %373 = vmatpush.msra.mxu0 %v67
    %374 = vmatmul.f32.gmra.mxu0 %v357
    %v375 = vpop.f32.mrf.mxu0
    %v376 = vadd.f32 0.0, %v375
    %377 = vdwg.mxu0
    %378 = vmatpush.msra.mxu0 %v315
    %379 = vmatpush.msra.mxu0 %v307
    %380 = vmatpush.msra.mxu0 %v299
    %381 = vmatpush.msra.mxu0 %v291
    %382 = vmatpush.msra.mxu0 %v283
    %383 = vmatpush.msra.mxu0 %v275
    %384 = vmatpush.msra.mxu0 %v267
    %385 = vmatpush.msra.mxu0 %v259
    %386 = vmatpush.msra.mxu0 %v251
    %387 = vmatpush.msra.mxu0 %v243
    %388 = vmatpush.msra.mxu0 %v235
    %389 = vmatpush.msra.mxu0 %v227
    %390 = vmatpush.msra.mxu0 %v219
    %391 = vmatpush.msra.mxu0 %v211
    %392 = vmatpush.msra.mxu0 %v203
    %393 = vmatpush.msra.mxu0 %v195
    %394 = vmatmul.f32.gmra.mxu0 0.0
    %v395 = vpop.f32.mrf.mxu0
    %v396 = vadd.f32 %v376, %v395
    %397 = vdwg.mxu0
    %398 = vmatpush.msra.mxu0 %v188
    %399 = vmatpush.msra.mxu0 %v180
    %400 = vmatpush.msra.mxu0 %v172
    %401 = vmatpush.msra.mxu0 %v164
    %402 = vmatpush.msra.mxu0 %v156
    %403 = vmatpush.msra.mxu0 %v148
    %404 = vmatpush.msra.mxu0 %v140
    %405 = vmatpush.msra.mxu0 %v132
    %406 = vmatpush.msra.mxu0 %v124
    %407 = vmatpush.msra.mxu0 %v116
    %408 = vmatpush.msra.mxu0 %v108
    %409 = vmatpush.msra.mxu0 %v100
    %410 = vmatpush.msra.mxu0 %v92
    %411 = vmatpush.msra.mxu0 %v84
    %412 = vmatpush.msra.mxu0 %v76
    %413 = vmatpush.msra.mxu0 %v68
    %414 = vmatmul.f32.gmra.mxu0 %v357
    %v415 = vpop.f32.mrf.mxu0
    %v416 = vadd.f32 0.0, %v415
    %417 = vdwg.mxu0
    %418 = vmatpush.msra.mxu0 %v316
    %419 = vmatpush.msra.mxu0 %v308
    %420 = vmatpush.msra.mxu0 %v300
    %421 = vmatpush.msra.mxu0 %v292
    %422 = vmatpush.msra.mxu0 %v284
    %423 = vmatpush.msra.mxu0 %v276
    %424 = vmatpush.msra.mxu0 %v268
    %425 = vmatpush.msra.mxu0 %v260
    %426 = vmatpush.msra.mxu0 %v252
    %427 = vmatpush.msra.mxu0 %v244
    %428 = vmatpush.msra.mxu0 %v236
    %429 = vmatpush.msra.mxu0 %v228
    %430 = vmatpush.msra.mxu0 %v220
    %431 = vmatpush.msra.mxu0 %v212
    %432 = vmatpush.msra.mxu0 %v204
    %433 = vmatpush.msra.mxu0 %v196
    %434 = vmatmul.f32.gmra.mxu0 0.0
    %v435 = vpop.f32.mrf.mxu0
    %v436 = vadd.f32 %v416, %v435
    %437 = vdwg.mxu0
    %438 = vmatpush.msra.mxu0 %v189
    %439 = vmatpush.msra.mxu0 %v181
    %440 = vmatpush.msra.mxu0 %v173
    %441 = vmatpush.msra.mxu0 %v165
    %442 = vmatpush.msra.mxu0 %v157
    %443 = vmatpush.msra.mxu0 %v149
    %444 = vmatpush.msra.mxu0 %v141
    %445 = vmatpush.msra.mxu0 %v133
    %446 = vmatpush.msra.mxu0 %v125
    %447 = vmatpush.msra.mxu0 %v117
    %448 = vmatpush.msra.mxu0 %v109
    %449 = vmatpush.msra.mxu0 %v101
    %450 = vmatpush.msra.mxu0 %v93
    %451 = vmatpush.msra.mxu0 %v85
    %452 = vmatpush.msra.mxu0 %v77
    %453 = vmatpush.msra.mxu0 %v69
    %454 = vmatmul.f32.gmra.mxu0 %v357
    %v455 = vpop.f32.mrf.mxu0
    %v456 = vadd.f32 0.0, %v455
    %457 = vdwg.mxu0
    %458 = vmatpush.msra.mxu0 %v317
    %459 = vmatpush.msra.mxu0 %v309
    %460 = vmatpush.msra.mxu0 %v301
    %461 = vmatpush.msra.mxu0 %v293
    %462 = vmatpush.msra.mxu0 %v285
    %463 = vmatpush.msra.mxu0 %v277
    %464 = vmatpush.msra.mxu0 %v269
    %465 = vmatpush.msra.mxu0 %v261
    %466 = vmatpush.msra.mxu0 %v253
    %467 = vmatpush.msra.mxu0 %v245
    %468 = vmatpush.msra.mxu0 %v237
    %469 = vmatpush.msra.mxu0 %v229
    %470 = vmatpush.msra.mxu0 %v221
    %471 = vmatpush.msra.mxu0 %v213
    %472 = vmatpush.msra.mxu0 %v205
    %473 = vmatpush.msra.mxu0 %v197
    %474 = vmatmul.f32.gmra.mxu0 0.0
    %v475 = vpop.f32.mrf.mxu0
    %v476 = vadd.f32 %v456, %v475
    %477 = vdwg.mxu0
    %478 = vmatpush.msra.mxu0 %v190
    %479 = vmatpush.msra.mxu0 %v182
    %480 = vmatpush.msra.mxu0 %v174
    %481 = vmatpush.msra.mxu0 %v166
    %482 = vmatpush.msra.mxu0 %v158
    %483 = vmatpush.msra.mxu0 %v150
    %484 = vmatpush.msra.mxu0 %v142
    %485 = vmatpush.msra.mxu0 %v134
    %486 = vmatpush.msra.mxu0 %v126
    %487 = vmatpush.msra.mxu0 %v118
    %488 = vmatpush.msra.mxu0 %v110
    %489 = vmatpush.msra.mxu0 %v102
    %490 = vmatpush.msra.mxu0 %v94
    %491 = vmatpush.msra.mxu0 %v86
    %492 = vmatpush.msra.mxu0 %v78
    %493 = vmatpush.msra.mxu0 %v70
    %494 = vmatmul.f32.gmra.mxu0 %v357
    %v495 = vpop.f32.mrf.mxu0
    %v496 = vadd.f32 0.0, %v495
    %497 = vdwg.mxu0
    %498 = vmatpush.msra.mxu0 %v318
    %499 = vmatpush.msra.mxu0 %v310
    %500 = vmatpush.msra.mxu0 %v302
    %501 = vmatpush.msra.mxu0 %v294
    %502 = vmatpush.msra.mxu0 %v286
    %503 = vmatpush.msra.mxu0 %v278
    %504 = vmatpush.msra.mxu0 %v270
    %505 = vmatpush.msra.mxu0 %v262
    %506 = vmatpush.msra.mxu0 %v254
    %507 = vmatpush.msra.mxu0 %v246
    %508 = vmatpush.msra.mxu0 %v238
    %509 = vmatpush.msra.mxu0 %v230
    %510 = vmatpush.msra.mxu0 %v222
    %511 = vmatpush.msra.mxu0 %v214
    %512 = vmatpush.msra.mxu0 %v206
    %513 = vmatpush.msra.mxu0 %v198
    %514 = vmatmul.f32.gmra.mxu0 0.0
    %v515 = vpop.f32.mrf.mxu0
    %v516 = vadd.f32 %v496, %v515
    %517 = vdwg.mxu0
    %518 = vmatpush.msra.mxu0 %v191
    %519 = vmatpush.msra.mxu0 %v183
    %520 = vmatpush.msra.mxu0 %v175
    %521 = vmatpush.msra.mxu0 %v167
    %522 = vmatpush.msra.mxu0 %v159
    %523 = vmatpush.msra.mxu0 %v151
    %524 = vmatpush.msra.mxu0 %v143
    %525 = vmatpush.msra.mxu0 %v135
    %526 = vmatpush.msra.mxu0 %v127
    %527 = vmatpush.msra.mxu0 %v119
    %528 = vmatpush.msra.mxu0 %v111
    %529 = vmatpush.msra.mxu0 %v103
    %530 = vmatpush.msra.mxu0 %v95
    %531 = vmatpush.msra.mxu0 %v87
    %532 = vmatpush.msra.mxu0 %v79
    %533 = vmatpush.msra.mxu0 %v71
    %534 = vmatmul.f32.gmra.mxu0 %v357
    %v535 = vpop.f32.mrf.mxu0
    %v536 = vadd.f32 0.0, %v535
    %537 = vdwg.mxu0
    %538 = vmatpush.msra.mxu0 %v319
    %539 = vmatpush.msra.mxu0 %v311
    %540 = vmatpush.msra.mxu0 %v303
    %541 = vmatpush.msra.mxu0 %v295
    %542 = vmatpush.msra.mxu0 %v287
    %543 = vmatpush.msra.mxu0 %v279
    %544 = vmatpush.msra.mxu0 %v271
    %545 = vmatpush.msra.mxu0 %v263
    %546 = vmatpush.msra.mxu0 %v255
    %547 = vmatpush.msra.mxu0 %v247
    %548 = vmatpush.msra.mxu0 %v239
    %549 = vmatpush.msra.mxu0 %v231
    %550 = vmatpush.msra.mxu0 %v223
    %551 = vmatpush.msra.mxu0 %v215
    %552 = vmatpush.msra.mxu0 %v207
    %553 = vmatpush.msra.mxu0 %v199
    %554 = vmatmul.f32.gmra.mxu0 0.0
    %v555 = vpop.f32.mrf.mxu0
    %v556 = vadd.f32 %v536, %v555
    %557 = vdwg.mxu0
    %558 = vmatpush.msra.mxu0 %v192
    %559 = vmatpush.msra.mxu0 %v184
    %560 = vmatpush.msra.mxu0 %v176
    %561 = vmatpush.msra.mxu0 %v168
    %562 = vmatpush.msra.mxu0 %v160
    %563 = vmatpush.msra.mxu0 %v152
    %564 = vmatpush.msra.mxu0 %v144
    %565 = vmatpush.msra.mxu0 %v136
    %566 = vmatpush.msra.mxu0 %v128
    %567 = vmatpush.msra.mxu0 %v120
    %568 = vmatpush.msra.mxu0 %v112
    %569 = vmatpush.msra.mxu0 %v104
    %570 = vmatpush.msra.mxu0 %v96
    %571 = vmatpush.msra.mxu0 %v88
    %572 = vmatpush.msra.mxu0 %v80
    %573 = vmatpush.msra.mxu0 %v72
    %574 = vmatmul.f32.gmra.mxu0 %v357
    %v575 = vpop.f32.mrf.mxu0
    %v576 = vadd.f32 0.0, %v575
    %577 = vdwg.mxu0
    %578 = vmatpush.msra.mxu0 %v320
    %579 = vmatpush.msra.mxu0 %v312
    %580 = vmatpush.msra.mxu0 %v304
    %581 = vmatpush.msra.mxu0 %v296
    %582 = vmatpush.msra.mxu0 %v288
    %583 = vmatpush.msra.mxu0 %v280
    %584 = vmatpush.msra.mxu0 %v272
    %585 = vmatpush.msra.mxu0 %v264
    %586 = vmatpush.msra.mxu0 %v256
    %587 = vmatpush.msra.mxu0 %v248
    %588 = vmatpush.msra.mxu0 %v240
    %589 = vmatpush.msra.mxu0 %v232
    %590 = vmatpush.msra.mxu0 %v224
    %591 = vmatpush.msra.mxu0 %v216
    %592 = vmatpush.msra.mxu0 %v208
    %593 = vmatpush.msra.mxu0 %v200
    %594 = vmatmul.f32.gmra.mxu0 0.0
    %v595 = vpop.f32.mrf.mxu0
    %v596 = vadd.f32 %v576, %v595
    %597 = vdwg.mxu0
    %598 = vmatpush.msra.mxu0 %v193
    %599 = vmatpush.msra.mxu0 %v185
    %600 = vmatpush.msra.mxu0 %v177
    %601 = vmatpush.msra.mxu0 %v169
    %602 = vmatpush.msra.mxu0 %v161
    %603 = vmatpush.msra.mxu0 %v153
    %604 = vmatpush.msra.mxu0 %v145
    %605 = vmatpush.msra.mxu0 %v137
    %606 = vmatpush.msra.mxu0 %v129
    %607 = vmatpush.msra.mxu0 %v121
    %608 = vmatpush.msra.mxu0 %v113
    %609 = vmatpush.msra.mxu0 %v105
    %610 = vmatpush.msra.mxu0 %v97
    %611 = vmatpush.msra.mxu0 %v89
    %612 = vmatpush.msra.mxu0 %v81
    %613 = vmatpush.msra.mxu0 %v73
    %614 = vmatmul.f32.gmra.mxu0 %v357
    %v615 = vpop.f32.mrf.mxu0
    %v616 = vadd.f32 0.0, %v615
    %617 = vdwg.mxu0
    %618 = vmatpush.msra.mxu0 %v321
    %619 = vmatpush.msra.mxu0 %v313
    %620 = vmatpush.msra.mxu0 %v305
    %621 = vmatpush.msra.mxu0 %v297
    %622 = vmatpush.msra.mxu0 %v289
    %623 = vmatpush.msra.mxu0 %v281
    %624 = vmatpush.msra.mxu0 %v273
    %625 = vmatpush.msra.mxu0 %v265
    %626 = vmatpush.msra.mxu0 %v257
    %627 = vmatpush.msra.mxu0 %v249
    %628 = vmatpush.msra.mxu0 %v241
    %629 = vmatpush.msra.mxu0 %v233
    %630 = vmatpush.msra.mxu0 %v225
    %631 = vmatpush.msra.mxu0 %v217
    %632 = vmatpush.msra.mxu0 %v209
    %633 = vmatpush.msra.mxu0 %v201
    %634 = vmatmul.f32.gmra.mxu0 0.0
    %v635 = vpop.f32.mrf.mxu0
    %v636 = vadd.f32 %v616, %v635
    %637 = vdwg.mxu0
    %638 = vmatpush.msra.mxu0 %v194
    %639 = vmatpush.msra.mxu0 %v186
    %640 = vmatpush.msra.mxu0 %v178
    %641 = vmatpush.msra.mxu0 %v170
    %642 = vmatpush.msra.mxu0 %v162
    %643 = vmatpush.msra.mxu0 %v154
    %644 = vmatpush.msra.mxu0 %v146
    %645 = vmatpush.msra.mxu0 %v138
    %646 = vmatpush.msra.mxu0 %v130
    %647 = vmatpush.msra.mxu0 %v122
    %648 = vmatpush.msra.mxu0 %v114
    %649 = vmatpush.msra.mxu0 %v106
    %650 = vmatpush.msra.mxu0 %v98
    %651 = vmatpush.msra.mxu0 %v90
    %652 = vmatpush.msra.mxu0 %v82
    %653 = vmatpush.msra.mxu0 %v74
    %654 = vmatmul.f32.gmra.mxu0 %v357
    %v655 = vpop.f32.mrf.mxu0
    %v656 = vadd.f32 0.0, %v655
    %657 = vdwg.mxu0
    %658 = vmatpush.msra.mxu0 %v322
    %659 = vmatpush.msra.mxu0 %v314
    %660 = vmatpush.msra.mxu0 %v306
    %661 = vmatpush.msra.mxu0 %v298
    %662 = vmatpush.msra.mxu0 %v290
    %663 = vmatpush.msra.mxu0 %v282
    %664 = vmatpush.msra.mxu0 %v274
    %665 = vmatpush.msra.mxu0 %v266
    %666 = vmatpush.msra.mxu0 %v258
    %667 = vmatpush.msra.mxu0 %v250
    %668 = vmatpush.msra.mxu0 %v242
    %669 = vmatpush.msra.mxu0 %v234
    %670 = vmatpush.msra.mxu0 %v226
    %671 = vmatpush.msra.mxu0 %v218
    %672 = vmatpush.msra.mxu0 %v210
    %673 = vmatpush.msra.mxu0 %v202
    %674 = vmatmul.f32.gmra.mxu0 0.0
    %v675 = vpop.f32.mrf.mxu0
    %v676 = vadd.f32 %v656, %v675
    %677 = vdwg.mxu0
    %v678 = vadd.f32 %v556, %v325
    %v679 = vadd.f32 %v596, %v326
    %v680 = vadd.f32 %v636, %v327
    %v681 = vadd.f32 %v676, %v328
    %v682 = vtanh.pop %v678
    %v683 = vtanh.pop %v679
    %v684 = vtanh.pop %v680
    %v685 = vtanh.pop %v681
    %v686 = vmul.f32 %v682, 0.5
    %v687 = vadd.f32 %v686, 0.5
    %v688 = vmul.f32 %v683, 0.5
    %v689 = vadd.f32 %v688, 0.5
    %v690 = vmul.f32 %v685, 0.5
    %v691 = vadd.f32 %v690, 0.5
    %v692 = vmul.f32 %v689, 0.0
    %v693 = vmul.f32 %v687, %v684
    %v694 = vadd.f32 %v692, %v693
    %v695 = vtanh.pop %v694
    %v696 = vmul.f32 %v691, %v695
    %s697 = scalar_lea.vmem [#allocation3], 32
    %v698 = vld [vmem:[%s697] sm:$0xff]
    %v699 = vld [vmem:[%s697 + $0x8] sm:$0xff]
    %v700 = vld [vmem:[%s697 + $0x10] sm:$0xff]
    %v701 = vld [vmem:[%s697 + $0x18] sm:$0xff]
    %v702 = vadd.f32 %v698, %v396
    %v703 = vadd.f32 %v699, %v436
    %v704 = vadd.f32 %v700, %v476
    %v705 = vadd.f32 %v701, %v516
    %v706 = vtanh.pop %v702
    %v707 = vtanh.pop %v703
    %v708 = vtanh.pop %v704
    %v709 = vtanh.pop %v705
    %v710 = vmul.f32 %v706, 0.5
    %v711 = vadd.f32 %v710, 0.5
    %v712 = vmul.f32 %v707, 0.5
    %v713 = vadd.f32 %v712, 0.5
    %v714 = vmul.f32 %v709, 0.5
    %v715 = vadd.f32 %v714, 0.5
    %v716 = vmul.f32 %v713, %v355
    %v717 = vmul.f32 %v711, %v708
    %v718 = vadd.f32 %v716, %v717
    %v719 = vtanh.pop %v718
    %v720 = vmul.f32 %v715, %v719
    %721 = vmatpush.msra.mxu0 %v187
    %722 = vmatpush.msra.mxu0 %v179
    %723 = vmatpush.msra.mxu0 %v171
    %724 = vmatpush.msra.mxu0 %v163
    %725 = vmatpush.msra.mxu0 %v155
    %726 = vmatpush.msra.mxu0 %v147
    %727 = vmatpush.msra.mxu0 %v139
    %728 = vmatpush.msra.mxu0 %v131
    %729 = vmatpush.msra.mxu0 %v123
    %730 = vmatpush.msra.mxu0 %v115
    %731 = vmatpush.msra.mxu0 %v107
    %732 = vmatpush.msra.mxu0 %v99
    %733 = vmatpush.msra.mxu0 %v91
    %734 = vmatpush.msra.mxu0 %v83
    %735 = vmatpush.msra.mxu0 %v75
    %736 = vmatpush.msra.mxu0 %v67
    %737 = vmatmul.f32.gmra.mxu0 %v720
    %v738 = vpop.f32.mrf.mxu0
    %v739 = vadd.f32 0.0, %v738
    %740 = vdwg.mxu0
    %741 = vmatpush.msra.mxu0 %v315
    %742 = vmatpush.msra.mxu0 %v307
    %743 = vmatpush.msra.mxu0 %v299
    %744 = vmatpush.msra.mxu0 %v291
    %745 = vmatpush.msra.mxu0 %v283
    %746 = vmatpush.msra.mxu0 %v275
    %747 = vmatpush.msra.mxu0 %v267
    %748 = vmatpush.msra.mxu0 %v259
    %749 = vmatpush.msra.mxu0 %v251
    %750 = vmatpush.msra.mxu0 %v243
    %751 = vmatpush.msra.mxu0 %v235
    %752 = vmatpush.msra.mxu0 %v227
    %753 = vmatpush.msra.mxu0 %v219
    %754 = vmatpush.msra.mxu0 %v211
    %755 = vmatpush.msra.mxu0 %v203
    %756 = vmatpush.msra.mxu0 %v195
    %757 = vmatmul.f32.gmra.mxu0 %v696
    %v758 = vpop.f32.mrf.mxu0
    %v759 = vadd.f32 %v739, %v758
    %760 = vdwg.mxu0
    %761 = vmatpush.msra.mxu0 %v188
    %762 = vmatpush.msra.mxu0 %v180
    %763 = vmatpush.msra.mxu0 %v172
    %764 = vmatpush.msra.mxu0 %v164
    %765 = vmatpush.msra.mxu0 %v156
    %766 = vmatpush.msra.mxu0 %v148
    %767 = vmatpush.msra.mxu0 %v140
    %768 = vmatpush.msra.mxu0 %v132
    %769 = vmatpush.msra.mxu0 %v124
    %770 = vmatpush.msra.mxu0 %v116
    %771 = vmatpush.msra.mxu0 %v108
    %772 = vmatpush.msra.mxu0 %v100
    %773 = vmatpush.msra.mxu0 %v92
    %774 = vmatpush.msra.mxu0 %v84
    %775 = vmatpush.msra.mxu0 %v76
    %776 = vmatpush.msra.mxu0 %v68
    %777 = vmatmul.f32.gmra.mxu0 %v720
    %v778 = vpop.f32.mrf.mxu0
    %v779 = vadd.f32 0.0, %v778
    %780 = vdwg.mxu0
    %781 = vmatpush.msra.mxu0 %v316
    %782 = vmatpush.msra.mxu0 %v308
    %783 = vmatpush.msra.mxu0 %v300
    %784 = vmatpush.msra.mxu0 %v292
    %785 = vmatpush.msra.mxu0 %v284
    %786 = vmatpush.msra.mxu0 %v276
    %787 = vmatpush.msra.mxu0 %v268
    %788 = vmatpush.msra.mxu0 %v260
    %789 = vmatpush.msra.mxu0 %v252
    %790 = vmatpush.msra.mxu0 %v244
    %791 = vmatpush.msra.mxu0 %v236
    %792 = vmatpush.msra.mxu0 %v228
    %793 = vmatpush.msra.mxu0 %v220
    %794 = vmatpush.msra.mxu0 %v212
    %795 = vmatpush.msra.mxu0 %v204
    %796 = vmatpush.msra.mxu0 %v196
    %797 = vmatmul.f32.gmra.mxu0 %v696
    %v798 = vpop.f32.mrf.mxu0
    %v799 = vadd.f32 %v779, %v798
    %800 = vdwg.mxu0
    %801 = vmatpush.msra.mxu0 %v189
    %802 = vmatpush.msra.mxu0 %v181
    %803 = vmatpush.msra.mxu0 %v173
    %804 = vmatpush.msra.mxu0 %v165
    %805 = vmatpush.msra.mxu0 %v157
    %806 = vmatpush.msra.mxu0 %v149
    %807 = vmatpush.msra.mxu0 %v141
    %808 = vmatpush.msra.mxu0 %v133
    %809 = vmatpush.msra.mxu0 %v125
    %810 = vmatpush.msra.mxu0 %v117
    %811 = vmatpush.msra.mxu0 %v109
    %812 = vmatpush.msra.mxu0 %v101
    %813 = vmatpush.msra.mxu0 %v93
    %814 = vmatpush.msra.mxu0 %v85
    %815 = vmatpush.msra.mxu0 %v77
    %816 = vmatpush.msra.mxu0 %v69
    %817 = vmatmul.f32.gmra.mxu0 %v720
    %v818 = vpop.f32.mrf.mxu0
    %v819 = vadd.f32 0.0, %v818
    %820 = vdwg.mxu0
    %821 = vmatpush.msra.mxu0 %v317
    %822 = vmatpush.msra.mxu0 %v309
    %823 = vmatpush.msra.mxu0 %v301
    %824 = vmatpush.msra.mxu0 %v293
    %825 = vmatpush.msra.mxu0 %v285
    %826 = vmatpush.msra.mxu0 %v277
    %827 = vmatpush.msra.mxu0 %v269
    %828 = vmatpush.msra.mxu0 %v261
    %829 = vmatpush.msra.mxu0 %v253
    %830 = vmatpush.msra.mxu0 %v245
    %831 = vmatpush.msra.mxu0 %v237
    %832 = vmatpush.msra.mxu0 %v229
    %833 = vmatpush.msra.mxu0 %v221
    %834 = vmatpush.msra.mxu0 %v213
    %835 = vmatpush.msra.mxu0 %v205
    %836 = vmatpush.msra.mxu0 %v197
    %837 = vmatmul.f32.gmra.mxu0 %v696
    %v838 = vpop.f32.mrf.mxu0
    %v839 = vadd.f32 %v819, %v838
    %840 = vdwg.mxu0
    %841 = vmatpush.msra.mxu0 %v190
    %842 = vmatpush.msra.mxu0 %v182
    %843 = vmatpush.msra.mxu0 %v174
    %844 = vmatpush.msra.mxu0 %v166
    %845 = vmatpush.msra.mxu0 %v158
    %846 = vmatpush.msra.mxu0 %v150
    %847 = vmatpush.msra.mxu0 %v142
    %848 = vmatpush.msra.mxu0 %v134
    %849 = vmatpush.msra.mxu0 %v126
    %850 = vmatpush.msra.mxu0 %v118
    %851 = vmatpush.msra.mxu0 %v110
    %852 = vmatpush.msra.mxu0 %v102
    %853 = vmatpush.msra.mxu0 %v94
    %854 = vmatpush.msra.mxu0 %v86
    %855 = vmatpush.msra.mxu0 %v78
    %856 = vmatpush.msra.mxu0 %v70
    %857 = vmatmul.f32.gmra.mxu0 %v720
    %v858 = vpop.f32.mrf.mxu0
    %v859 = vadd.f32 0.0, %v858
    %860 = vdwg.mxu0
    %861 = vmatpush.msra.mxu0 %v318
    %862 = vmatpush.msra.mxu0 %v310
    %863 = vmatpush.msra.mxu0 %v302
    %864 = vmatpush.msra.mxu0 %v294
    %865 = vmatpush.msra.mxu0 %v286
    %866 = vmatpush.msra.mxu0 %v278
    %867 = vmatpush.msra.mxu0 %v270
    %868 = vmatpush.msra.mxu0 %v262
    %869 = vmatpush.msra.mxu0 %v254
    %870 = vmatpush.msra.mxu0 %v246
    %871 = vmatpush.msra.mxu0 %v238
    %872 = vmatpush.msra.mxu0 %v230
    %873 = vmatpush.msra.mxu0 %v222
    %874 = vmatpush.msra.mxu0 %v214
    %875 = vmatpush.msra.mxu0 %v206
    %876 = vmatpush.msra.mxu0 %v198
    %877 = vmatmul.f32.gmra.mxu0 %v696
    %v878 = vpop.f32.mrf.mxu0
    %v879 = vadd.f32 %v859, %v878
    %880 = vdwg.mxu0
    %881 = vmatpush.msra.mxu0 %v191
    %882 = vmatpush.msra.mxu0 %v183
    %883 = vmatpush.msra.mxu0 %v175
    %884 = vmatpush.msra.mxu0 %v167
    %885 = vmatpush.msra.mxu0 %v159
    %886 = vmatpush.msra.mxu0 %v151
    %887 = vmatpush.msra.mxu0 %v143
    %888 = vmatpush.msra.mxu0 %v135
    %889 = vmatpush.msra.mxu0 %v127
    %890 = vmatpush.msra.mxu0 %v119
    %891 = vmatpush.msra.mxu0 %v111
    %892 = vmatpush.msra.mxu0 %v103
    %893 = vmatpush.msra.mxu0 %v95
    %894 = vmatpush.msra.mxu0 %v87
    %895 = vmatpush.msra.mxu0 %v79
    %896 = vmatpush.msra.mxu0 %v71
    %897 = vmatmul.f32.gmra.mxu0 %v720
    %v898 = vpop.f32.mrf.mxu0
    %v899 = vadd.f32 0.0, %v898
    %900 = vdwg.mxu0
    %901 = vmatpush.msra.mxu0 %v319
    %902 = vmatpush.msra.mxu0 %v311
    %903 = vmatpush.msra.mxu0 %v303
    %904 = vmatpush.msra.mxu0 %v295
    %905 = vmatpush.msra.mxu0 %v287
    %906 = vmatpush.msra.mxu0 %v279
    %907 = vmatpush.msra.mxu0 %v271
    %908 = vmatpush.msra.mxu0 %v263
    %909 = vmatpush.msra.mxu0 %v255
    %910 = vmatpush.msra.mxu0 %v247
    %911 = vmatpush.msra.mxu0 %v239
    %912 = vmatpush.msra.mxu0 %v231
    %913 = vmatpush.msra.mxu0 %v223
    %914 = vmatpush.msra.mxu0 %v215
    %915 = vmatpush.msra.mxu0 %v207
    %916 = vmatpush.msra.mxu0 %v199
    %917 = vmatmul.f32.gmra.mxu0 %v696
    %v918 = vpop.f32.mrf.mxu0
    %v919 = vadd.f32 %v899, %v918
    %920 = vdwg.mxu0
    %921 = vmatpush.msra.mxu0 %v192
    %922 = vmatpush.msra.mxu0 %v184
    %923 = vmatpush.msra.mxu0 %v176
    %924 = vmatpush.msra.mxu0 %v168
    %925 = vmatpush.msra.mxu0 %v160
    %926 = vmatpush.msra.mxu0 %v152
    %927 = vmatpush.msra.mxu0 %v144
    %928 = vmatpush.msra.mxu0 %v136
    %929 = vmatpush.msra.mxu0 %v128
    %930 = vmatpush.msra.mxu0 %v120
    %931 = vmatpush.msra.mxu0 %v112
    %932 = vmatpush.msra.mxu0 %v104
    %933 = vmatpush.msra.mxu0 %v96
    %934 = vmatpush.msra.mxu0 %v88
    %935 = vmatpush.msra.mxu0 %v80
    %936 = vmatpush.msra.mxu0 %v72
    %937 = vmatmul.f32.gmra.mxu0 %v720
    %v938 = vpop.f32.mrf.mxu0
    %v939 = vadd.f32 0.0, %v938
    %940 = vdwg.mxu0
    %941 = vmatpush.msra.mxu0 %v320
    %942 = vmatpush.msra.mxu0 %v312
    %943 = vmatpush.msra.mxu0 %v304
    %944 = vmatpush.msra.mxu0 %v296
    %945 = vmatpush.msra.mxu0 %v288
    %946 = vmatpush.msra.mxu0 %v280
    %947 = vmatpush.msra.mxu0 %v272
    %948 = vmatpush.msra.mxu0 %v264
    %949 = vmatpush.msra.mxu0 %v256
    %950 = vmatpush.msra.mxu0 %v248
    %951 = vmatpush.msra.mxu0 %v240
    %952 = vmatpush.msra.mxu0 %v232
    %953 = vmatpush.msra.mxu0 %v224
    %954 = vmatpush.msra.mxu0 %v216
    %955 = vmatpush.msra.mxu0 %v208
    %956 = vmatpush.msra.mxu0 %v200
    %957 = vmatmul.f32.gmra.mxu0 %v696
    %v958 = vpop.f32.mrf.mxu0
    %v959 = vadd.f32 %v939, %v958
    %960 = vdwg.mxu0
    %961 = vmatpush.msra.mxu0 %v193
    %962 = vmatpush.msra.mxu0 %v185
    %963 = vmatpush.msra.mxu0 %v177
    %964 = vmatpush.msra.mxu0 %v169
    %965 = vmatpush.msra.mxu0 %v161
    %966 = vmatpush.msra.mxu0 %v153
    %967 = vmatpush.msra.mxu0 %v145
    %968 = vmatpush.msra.mxu0 %v137
    %969 = vmatpush.msra.mxu0 %v129
    %970 = vmatpush.msra.mxu0 %v121
    %971 = vmatpush.msra.mxu0 %v113
    %972 = vmatpush.msra.mxu0 %v105
    %973 = vmatpush.msra.mxu0 %v97
    %974 = vmatpush.msra.mxu0 %v89
    %975 = vmatpush.msra.mxu0 %v81
    %976 = vmatpush.msra.mxu0 %v73
    %977 = vmatmul.f32.gmra.mxu0 %v720
    %v978 = vpop.f32.mrf.mxu0
    %v979 = vadd.f32 0.0, %v978
    %980 = vdwg.mxu0
    %981 = vmatpush.msra.mxu0 %v321
    %982 = vmatpush.msra.mxu0 %v313
    %983 = vmatpush.msra.mxu0 %v305
    %984 = vmatpush.msra.mxu0 %v297
    %985 = vmatpush.msra.mxu0 %v289
    %986 = vmatpush.msra.mxu0 %v281
    %987 = vmatpush.msra.mxu0 %v273
    %988 = vmatpush.msra.mxu0 %v265
    %989 = vmatpush.msra.mxu0 %v257
    %990 = vmatpush.msra.mxu0 %v249
    %991 = vmatpush.msra.mxu0 %v241
    %992 = vmatpush.msra.mxu0 %v233
    %993 = vmatpush.msra.mxu0 %v225
    %994 = vmatpush.msra.mxu0 %v217
    %995 = vmatpush.msra.mxu0 %v209
    %996 = vmatpush.msra.mxu0 %v201
    %997 = vmatmul.f32.gmra.mxu0 %v696
    %v998 = vpop.f32.mrf.mxu0
    %v999 = vadd.f32 %v979, %v998
    %1000 = vdwg.mxu0
    %1001 = vmatpush.msra.mxu0 %v194
    %1002 = vmatpush.msra.mxu0 %v186
    %1003 = vmatpush.msra.mxu0 %v178
    %1004 = vmatpush.msra.mxu0 %v170
    %1005 = vmatpush.msra.mxu0 %v162
    %1006 = vmatpush.msra.mxu0 %v154
    %1007 = vmatpush.msra.mxu0 %v146
    %1008 = vmatpush.msra.mxu0 %v138
    %1009 = vmatpush.msra.mxu0 %v130
    %1010 = vmatpush.msra.mxu0 %v122
    %1011 = vmatpush.msra.mxu0 %v114
    %1012 = vmatpush.msra.mxu0 %v106
    %1013 = vmatpush.msra.mxu0 %v98
    %1014 = vmatpush.msra.mxu0 %v90
    %1015 = vmatpush.msra.mxu0 %v82
    %1016 = vmatpush.msra.mxu0 %v74
    %1017 = vmatmul.f32.gmra.mxu0 %v720
    %v1018 = vpop.f32.mrf.mxu0
    %v1019 = vadd.f32 0.0, %v1018
    %1020 = vdwg.mxu0
    %1021 = vmatpush.msra.mxu0 %v322
    %1022 = vmatpush.msra.mxu0 %v314
    %1023 = vmatpush.msra.mxu0 %v306
    %1024 = vmatpush.msra.mxu0 %v298
    %1025 = vmatpush.msra.mxu0 %v290
    %1026 = vmatpush.msra.mxu0 %v282
    %1027 = vmatpush.msra.mxu0 %v274
    %1028 = vmatpush.msra.mxu0 %v266
    %1029 = vmatpush.msra.mxu0 %v258
    %1030 = vmatpush.msra.mxu0 %v250
    %1031 = vmatpush.msra.mxu0 %v242
    %1032 = vmatpush.msra.mxu0 %v234
    %1033 = vmatpush.msra.mxu0 %v226
    %1034 = vmatpush.msra.mxu0 %v218
    %1035 = vmatpush.msra.mxu0 %v210
    %1036 = vmatpush.msra.mxu0 %v202
    %1037 = vmatmul.f32.gmra.mxu0 %v696
    %v1038 = vpop.f32.mrf.mxu0
    %v1039 = vadd.f32 %v1019, %v1038
    %1040 = vdwg.mxu0
    %v1041 = vadd.f32 %v919, %v325
    %v1042 = vadd.f32 %v959, %v326
    %v1043 = vadd.f32 %v999, %v327
    %v1044 = vadd.f32 %v1039, %v328
    %v1045 = vtanh.pop %v1041
    %v1046 = vtanh.pop %v1042
    %v1047 = vtanh.pop %v1043
    %v1048 = vtanh.pop %v1044
    %v1049 = vmul.f32 %v1045, 0.5
    %v1050 = vadd.f32 %v1049, 0.5
    %v1051 = vmul.f32 %v1046, 0.5
    %v1052 = vadd.f32 %v1051, 0.5
    %v1053 = vmul.f32 %v1048, 0.5
    %v1054 = vadd.f32 %v1053, 0.5
    %v1055 = vmul.f32 %v1052, %v694
    %v1056 = vmul.f32 %v1050, %v1047
    %v1057 = vadd.f32 %v1055, %v1056
    %v1058 = vtanh.pop %v1057
    %v1059 = vmul.f32 %v1054, %v1058
    %s1060 = scalar_lea.vmem [#allocation3], 64
    %v1061 = vld [vmem:[%s1060] sm:$0xff]
    %v1062 = vld [vmem:[%s1060 + $0x8] sm:$0xff]
    %v1063 = vld [vmem:[%s1060 + $0x10] sm:$0xff]
    %v1064 = vld [vmem:[%s1060 + $0x18] sm:$0xff]
    %v1065 = vadd.f32 %v1061, %v759
    %v1066 = vadd.f32 %v1062, %v799
    %v1067 = vadd.f32 %v1063, %v839
    %v1068 = vadd.f32 %v1064, %v879
    %v1069 = vtanh.pop %v1065
    %v1070 = vtanh.pop %v1066
    %v1071 = vtanh.pop %v1067
    %v1072 = vtanh.pop %v1068
    %v1073 = vmul.f32 %v1069, 0.5
    %v1074 = vadd.f32 %v1073, 0.5
    %v1075 = vmul.f32 %v1070, 0.5
    %v1076 = vadd.f32 %v1075, 0.5
    %v1077 = vmul.f32 %v1072, 0.5
    %v1078 = vadd.f32 %v1077, 0.5
    %v1079 = vmul.f32 %v1076, %v718
    %v1080 = vmul.f32 %v1074, %v1071
    %v1081 = vadd.f32 %v1079, %v1080
    %v1082 = vtanh.pop %v1081
    %v1083 = vmul.f32 %v1078, %v1082
    %1084 = vmatpush.msra.mxu0 %v187
    %1085 = vmatpush.msra.mxu0 %v179
    %1086 = vmatpush.msra.mxu0 %v171
    %1087 = vmatpush.msra.mxu0 %v163
    %1088 = vmatpush.msra.mxu0 %v155
    %1089 = vmatpush.msra.mxu0 %v147
    %1090 = vmatpush.msra.mxu0 %v139
    %1091 = vmatpush.msra.mxu0 %v131
    %1092 = vmatpush.msra.mxu0 %v123
    %1093 = vmatpush.msra.mxu0 %v115
    %1094 = vmatpush.msra.mxu0 %v107
    %1095 = vmatpush.msra.mxu0 %v99
    %1096 = vmatpush.msra.mxu0 %v91
    %1097 = vmatpush.msra.mxu0 %v83
    %1098 = vmatpush.msra.mxu0 %v75
    %1099 = vmatpush.msra.mxu0 %v67
    %1100 = vmatmul.f32.gmra.mxu0 %v1083
    %v1101 = vpop.f32.mrf.mxu0
    %v1102 = vadd.f32 0.0, %v1101
    %1103 = vdwg.mxu0
    %1104 = vmatpush.msra.mxu0 %v315
    %1105 = vmatpush.msra.mxu0 %v307
    %1106 = vmatpush.msra.mxu0 %v299
    %1107 = vmatpush.msra.mxu0 %v291
    %1108 = vmatpush.msra.mxu0 %v283
    %1109 = vmatpush.msra.mxu0 %v275
    %1110 = vmatpush.msra.mxu0 %v267
    %1111 = vmatpush.msra.mxu0 %v259
    %1112 = vmatpush.msra.mxu0 %v251
    %1113 = vmatpush.msra.mxu0 %v243
    %1114 = vmatpush.msra.mxu0 %v235
    %1115 = vmatpush.msra.mxu0 %v227
    %1116 = vmatpush.msra.mxu0 %v219
    %1117 = vmatpush.msra.mxu0 %v211
    %1118 = vmatpush.msra.mxu0 %v203
    %1119 = vmatpush.msra.mxu0 %v195
    %1120 = vmatmul.f32.gmra.mxu0 %v1059
    %v1121 = vpop.f32.mrf.mxu0
    %v1122 = vadd.f32 %v1102, %v1121
    %1123 = vdwg.mxu0
    %1124 = vmatpush.msra.mxu0 %v188
    %1125 = vmatpush.msra.mxu0 %v180
    %1126 = vmatpush.msra.mxu0 %v172
    %1127 = vmatpush.msra.mxu0 %v164
    %1128 = vmatpush.msra.mxu0 %v156
    %1129 = vmatpush.msra.mxu0 %v148
    %1130 = vmatpush.msra.mxu0 %v140
    %1131 = vmatpush.msra.mxu0 %v132
    %1132 = vmatpush.msra.mxu0 %v124
    %1133 = vmatpush.msra.mxu0 %v116
    %1134 = vmatpush.msra.mxu0 %v108
    %1135 = vmatpush.msra.mxu0 %v100
    %1136 = vmatpush.msra.mxu0 %v92
    %1137 = vmatpush.msra.mxu0 %v84
    %1138 = vmatpush.msra.mxu0 %v76
    %1139 = vmatpush.msra.mxu0 %v68
    %1140 = vmatmul.f32.gmra.mxu0 %v1083
    %v1141 = vpop.f32.mrf.mxu0
    %v1142 = vadd.f32 0.0, %v1141
    %1143 = vdwg.mxu0
    %1144 = vmatpush.msra.mxu0 %v316
    %1145 = vmatpush.msra.mxu0 %v308
    %1146 = vmatpush.msra.mxu0 %v300
    %1147 = vmatpush.msra.mxu0 %v292
    %1148 = vmatpush.msra.mxu0 %v284
    %1149 = vmatpush.msra.mxu0 %v276
    %1150 = vmatpush.msra.mxu0 %v268
    %1151 = vmatpush.msra.mxu0 %v260
    %1152 = vmatpush.msra.mxu0 %v252
    %1153 = vmatpush.msra.mxu0 %v244
    %1154 = vmatpush.msra.mxu0 %v236
    %1155 = vmatpush.msra.mxu0 %v228
    %1156 = vmatpush.msra.mxu0 %v220
    %1157 = vmatpush.msra.mxu0 %v212
    %1158 = vmatpush.msra.mxu0 %v204
    %1159 = vmatpush.msra.mxu0 %v196
    %1160 = vmatmul.f32.gmra.mxu0 %v1059
    %v1161 = vpop.f32.mrf.mxu0
    %v1162 = vadd.f32 %v1142, %v1161
    %1163 = vdwg.mxu0
    %1164 = vmatpush.msra.mxu0 %v189
    %1165 = vmatpush.msra.mxu0 %v181
    %1166 = vmatpush.msra.mxu0 %v173
    %1167 = vmatpush.msra.mxu0 %v165
    %1168 = vmatpush.msra.mxu0 %v157
    %1169 = vmatpush.msra.mxu0 %v149
    %1170 = vmatpush.msra.mxu0 %v141
    %1171 = vmatpush.msra.mxu0 %v133
    %1172 = vmatpush.msra.mxu0 %v125
    %1173 = vmatpush.msra.mxu0 %v117
    %1174 = vmatpush.msra.mxu0 %v109
    %1175 = vmatpush.msra.mxu0 %v101
    %1176 = vmatpush.msra.mxu0 %v93
    %1177 = vmatpush.msra.mxu0 %v85
    %1178 = vmatpush.msra.mxu0 %v77
    %1179 = vmatpush.msra.mxu0 %v69
    %1180 = vmatmul.f32.gmra.mxu0 %v1083
    %v1181 = vpop.f32.mrf.mxu0
    %v1182 = vadd.f32 0.0, %v1181
    %1183 = vdwg.mxu0
    %1184 = vmatpush.msra.mxu0 %v317
    %1185 = vmatpush.msra.mxu0 %v309
    %1186 = vmatpush.msra.mxu0 %v301
    %1187 = vmatpush.msra.mxu0 %v293
    %1188 = vmatpush.msra.mxu0 %v285
    %1189 = vmatpush.msra.mxu0 %v277
    %1190 = vmatpush.msra.mxu0 %v269
    %1191 = vmatpush.msra.mxu0 %v261
    %1192 = vmatpush.msra.mxu0 %v253
    %1193 = vmatpush.msra.mxu0 %v245
    %1194 = vmatpush.msra.mxu0 %v237
    %1195 = vmatpush.msra.mxu0 %v229
    %1196 = vmatpush.msra.mxu0 %v221
    %1197 = vmatpush.msra.mxu0 %v213
    %1198 = vmatpush.msra.mxu0 %v205
    %1199 = vmatpush.msra.mxu0 %v197
    %1200 = vmatmul.f32.gmra.mxu0 %v1059
    %v1201 = vpop.f32.mrf.mxu0
    %v1202 = vadd.f32 %v1182, %v1201
    %1203 = vdwg.mxu0
    %1204 = vmatpush.msra.mxu0 %v190
    %1205 = vmatpush.msra.mxu0 %v182
    %1206 = vmatpush.msra.mxu0 %v174
    %1207 = vmatpush.msra.mxu0 %v166
    %1208 = vmatpush.msra.mxu0 %v158
    %1209 = vmatpush.msra.mxu0 %v150
    %1210 = vmatpush.msra.mxu0 %v142
    %1211 = vmatpush.msra.mxu0 %v134
    %1212 = vmatpush.msra.mxu0 %v126
    %1213 = vmatpush.msra.mxu0 %v118
    %1214 = vmatpush.msra.mxu0 %v110
    %1215 = vmatpush.msra.mxu0 %v102
    %1216 = vmatpush.msra.mxu0 %v94
    %1217 = vmatpush.msra.mxu0 %v86
    %1218 = vmatpush.msra.mxu0 %v78
    %1219 = vmatpush.msra.mxu0 %v70
    %1220 = vmatmul.f32.gmra.mxu0 %v1083
    %v1221 = vpop.f32.mrf.mxu0
    %v1222 = vadd.f32 0.0, %v1221
    %1223 = vdwg.mxu0
    %1224 = vmatpush.msra.mxu0 %v318
    %1225 = vmatpush.msra.mxu0 %v310
    %1226 = vmatpush.msra.mxu0 %v302
    %1227 = vmatpush.msra.mxu0 %v294
    %1228 = vmatpush.msra.mxu0 %v286
    %1229 = vmatpush.msra.mxu0 %v278
    %1230 = vmatpush.msra.mxu0 %v270
    %1231 = vmatpush.msra.mxu0 %v262
    %1232 = vmatpush.msra.mxu0 %v254
    %1233 = vmatpush.msra.mxu0 %v246
    %1234 = vmatpush.msra.mxu0 %v238
    %1235 = vmatpush.msra.mxu0 %v230
    %1236 = vmatpush.msra.mxu0 %v222
    %1237 = vmatpush.msra.mxu0 %v214
    %1238 = vmatpush.msra.mxu0 %v206
    %1239 = vmatpush.msra.mxu0 %v198
    %1240 = vmatmul.f32.gmra.mxu0 %v1059
    %v1241 = vpop.f32.mrf.mxu0
    %v1242 = vadd.f32 %v1222, %v1241
    %1243 = vdwg.mxu0
    %1244 = vmatpush.msra.mxu0 %v191
    %1245 = vmatpush.msra.mxu0 %v183
    %1246 = vmatpush.msra.mxu0 %v175
    %1247 = vmatpush.msra.mxu0 %v167
    %1248 = vmatpush.msra.mxu0 %v159
    %1249 = vmatpush.msra.mxu0 %v151
    %1250 = vmatpush.msra.mxu0 %v143
    %1251 = vmatpush.msra.mxu0 %v135
    %1252 = vmatpush.msra.mxu0 %v127
    %1253 = vmatpush.msra.mxu0 %v119
    %1254 = vmatpush.msra.mxu0 %v111
    %1255 = vmatpush.msra.mxu0 %v103
    %1256 = vmatpush.msra.mxu0 %v95
    %1257 = vmatpush.msra.mxu0 %v87
    %1258 = vmatpush.msra.mxu0 %v79
    %1259 = vmatpush.msra.mxu0 %v71
    %1260 = vmatmul.f32.gmra.mxu0 %v1083
    %v1261 = vpop.f32.mrf.mxu0
    %v1262 = vadd.f32 0.0, %v1261
    %1263 = vdwg.mxu0
    %1264 = vmatpush.msra.mxu0 %v319
    %1265 = vmatpush.msra.mxu0 %v311
    %1266 = vmatpush.msra.mxu0 %v303
    %1267 = vmatpush.msra.mxu0 %v295
    %1268 = vmatpush.msra.mxu0 %v287
    %1269 = vmatpush.msra.mxu0 %v279
    %1270 = vmatpush.msra.mxu0 %v271
    %1271 = vmatpush.msra.mxu0 %v263
    %1272 = vmatpush.msra.mxu0 %v255
    %1273 = vmatpush.msra.mxu0 %v247
    %1274 = vmatpush.msra.mxu0 %v239
    %1275 = vmatpush.msra.mxu0 %v231
    %1276 = vmatpush.msra.mxu0 %v223
    %1277 = vmatpush.msra.mxu0 %v215
    %1278 = vmatpush.msra.mxu0 %v207
    %1279 = vmatpush.msra.mxu0 %v199
    %1280 = vmatmul.f32.gmra.mxu0 %v1059
    %v1281 = vpop.f32.mrf.mxu0
    %v1282 = vadd.f32 %v1262, %v1281
    %1283 = vdwg.mxu0
    %1284 = vmatpush.msra.mxu0 %v192
    %1285 = vmatpush.msra.mxu0 %v184
    %1286 = vmatpush.msra.mxu0 %v176
    %1287 = vmatpush.msra.mxu0 %v168
    %1288 = vmatpush.msra.mxu0 %v160
    %1289 = vmatpush.msra.mxu0 %v152
    %1290 = vmatpush.msra.mxu0 %v144
    %1291 = vmatpush.msra.mxu0 %v136
    %1292 = vmatpush.msra.mxu0 %v128
    %1293 = vmatpush.msra.mxu0 %v120
    %1294 = vmatpush.msra.mxu0 %v112
    %1295 = vmatpush.msra.mxu0 %v104
    %1296 = vmatpush.msra.mxu0 %v96
    %1297 = vmatpush.msra.mxu0 %v88
    %1298 = vmatpush.msra.mxu0 %v80
    %1299 = vmatpush.msra.mxu0 %v72
    %1300 = vmatmul.f32.gmra.mxu0 %v1083
    %v1301 = vpop.f32.mrf.mxu0
    %v1302 = vadd.f32 0.0, %v1301
    %1303 = vdwg.mxu0
    %1304 = vmatpush.msra.mxu0 %v320
    %1305 = vmatpush.msra.mxu0 %v312
    %1306 = vmatpush.msra.mxu0 %v304
    %1307 = vmatpush.msra.mxu0 %v296
    %1308 = vmatpush.msra.mxu0 %v288
    %1309 = vmatpush.msra.mxu0 %v280
    %1310 = vmatpush.msra.mxu0 %v272
    %1311 = vmatpush.msra.mxu0 %v264
    %1312 = vmatpush.msra.mxu0 %v256
    %1313 = vmatpush.msra.mxu0 %v248
    %1314 = vmatpush.msra.mxu0 %v240
    %1315 = vmatpush.msra.mxu0 %v232
    %1316 = vmatpush.msra.mxu0 %v224
    %1317 = vmatpush.msra.mxu0 %v216
    %1318 = vmatpush.msra.mxu0 %v208
    %1319 = vmatpush.msra.mxu0 %v200
    %1320 = vmatmul.f32.gmra.mxu0 %v1059
    %v1321 = vpop.f32.mrf.mxu0
    %v1322 = vadd.f32 %v1302, %v1321
    %1323 = vdwg.mxu0
    %1324 = vmatpush.msra.mxu0 %v193
    %1325 = vmatpush.msra.mxu0 %v185
    %1326 = vmatpush.msra.mxu0 %v177
    %1327 = vmatpush.msra.mxu0 %v169
    %1328 = vmatpush.msra.mxu0 %v161
    %1329 = vmatpush.msra.mxu0 %v153
    %1330 = vmatpush.msra.mxu0 %v145
    %1331 = vmatpush.msra.mxu0 %v137
    %1332 = vmatpush.msra.mxu0 %v129
    %1333 = vmatpush.msra.mxu0 %v121
    %1334 = vmatpush.msra.mxu0 %v113
    %1335 = vmatpush.msra.mxu0 %v105
    %1336 = vmatpush.msra.mxu0 %v97
    %1337 = vmatpush.msra.mxu0 %v89
    %1338 = vmatpush.msra.mxu0 %v81
    %1339 = vmatpush.msra.mxu0 %v73
    %1340 = vmatmul.f32.gmra.mxu0 %v1083
    %v1341 = vpop.f32.mrf.mxu0
    %v1342 = vadd.f32 0.0, %v1341
    %1343 = vdwg.mxu0
    %1344 = vmatpush.msra.mxu0 %v321
    %1345 = vmatpush.msra.mxu0 %v313
    %1346 = vmatpush.msra.mxu0 %v305
    %1347 = vmatpush.msra.mxu0 %v297
    %1348 = vmatpush.msra.mxu0 %v289
    %1349 = vmatpush.msra.mxu0 %v281
    %1350 = vmatpush.msra.mxu0 %v273
    %1351 = vmatpush.msra.mxu0 %v265
    %1352 = vmatpush.msra.mxu0 %v257
    %1353 = vmatpush.msra.mxu0 %v249
    %1354 = vmatpush.msra.mxu0 %v241
    %1355 = vmatpush.msra.mxu0 %v233
    %1356 = vmatpush.msra.mxu0 %v225
    %1357 = vmatpush.msra.mxu0 %v217
    %1358 = vmatpush.msra.mxu0 %v209
    %1359 = vmatpush.msra.mxu0 %v201
    %1360 = vmatmul.f32.gmra.mxu0 %v1059
    %v1361 = vpop.f32.mrf.mxu0
    %v1362 = vadd.f32 %v1342, %v1361
    %1363 = vdwg.mxu0
    %1364 = vmatpush.msra.mxu0 %v194
    %1365 = vmatpush.msra.mxu0 %v186
    %1366 = vmatpush.msra.mxu0 %v178
    %1367 = vmatpush.msra.mxu0 %v170
    %1368 = vmatpush.msra.mxu0 %v162
    %1369 = vmatpush.msra.mxu0 %v154
    %1370 = vmatpush.msra.mxu0 %v146
    %1371 = vmatpush.msra.mxu0 %v138
    %1372 = vmatpush.msra.mxu0 %v130
    %1373 = vmatpush.msra.mxu0 %v122
    %1374 = vmatpush.msra.mxu0 %v114
    %1375 = vmatpush.msra.mxu0 %v106
    %1376 = vmatpush.msra.mxu0 %v98
    %1377 = vmatpush.msra.mxu0 %v90
    %1378 = vmatpush.msra.mxu0 %v82
    %1379 = vmatpush.msra.mxu0 %v74
    %1380 = vmatmul.f32.gmra.mxu0 %v1083
    %v1381 = vpop.f32.mrf.mxu0
    %v1382 = vadd.f32 0.0, %v1381
    %1383 = vdwg.mxu0
    %1384 = vmatpush.msra.mxu0 %v322
    %1385 = vmatpush.msra.mxu0 %v314
    %1386 = vmatpush.msra.mxu0 %v306
    %1387 = vmatpush.msra.mxu0 %v298
    %1388 = vmatpush.msra.mxu0 %v290
    %1389 = vmatpush.msra.mxu0 %v282
    %1390 = vmatpush.msra.mxu0 %v274
    %1391 = vmatpush.msra.mxu0 %v266
    %1392 = vmatpush.msra.mxu0 %v258
    %1393 = vmatpush.msra.mxu0 %v250
    %1394 = vmatpush.msra.mxu0 %v242
    %1395 = vmatpush.msra.mxu0 %v234
    %1396 = vmatpush.msra.mxu0 %v226
    %1397 = vmatpush.msra.mxu0 %v218
    %1398 = vmatpush.msra.mxu0 %v210
    %1399 = vmatpush.msra.mxu0 %v202
    %1400 = vmatmul.f32.gmra.mxu0 %v1059
    %v1401 = vpop.f32.mrf.mxu0
    %v1402 = vadd.f32 %v1382, %v1401
    %1403 = vdwg.mxu0
    %v1404 = vadd.f32 %v1282, %v325
    %v1405 = vadd.f32 %v1322, %v326
    %v1406 = vadd.f32 %v1362, %v327
    %v1407 = vadd.f32 %v1402, %v328
    %v1408 = vtanh.pop %v1404
    %v1409 = vtanh.pop %v1405
    %v1410 = vtanh.pop %v1406
    %v1411 = vtanh.pop %v1407
    %v1412 = vmul.f32 %v1408, 0.5
    %v1413 = vadd.f32 %v1412, 0.5
    %v1414 = vmul.f32 %v1409, 0.5
    %v1415 = vadd.f32 %v1414, 0.5
    %v1416 = vmul.f32 %v1411, 0.5
    %v1417 = vadd.f32 %v1416, 0.5
    %v1418 = vmul.f32 %v1415, %v1057
    %v1419 = vmul.f32 %v1413, %v1410
    %v1420 = vadd.f32 %v1418, %v1419
    %v1421 = vtanh.pop %v1420
    %v1422 = vmul.f32 %v1417, %v1421
    %s1423 = scalar_lea.vmem [#allocation3], 96
    %v1424 = vld [vmem:[%s1423] sm:$0xff]
    %v1425 = vld [vmem:[%s1423 + $0x8] sm:$0xff]
    %v1426 = vld [vmem:[%s1423 + $0x10] sm:$0xff]
    %v1427 = vld [vmem:[%s1423 + $0x18] sm:$0xff]
    %v1428 = vadd.f32 %v1424, %v1122
    %v1429 = vadd.f32 %v1425, %v1162
    %v1430 = vadd.f32 %v1426, %v1202
    %v1431 = vadd.f32 %v1427, %v1242
    %v1432 = vtanh.pop %v1428
    %v1433 = vtanh.pop %v1429
    %v1434 = vtanh.pop %v1430
    %v1435 = vtanh.pop %v1431
    %v1436 = vmul.f32 %v1432, 0.5
    %v1437 = vadd.f32 %v1436, 0.5
    %v1438 = vmul.f32 %v1433, 0.5
    %v1439 = vadd.f32 %v1438, 0.5
    %v1440 = vmul.f32 %v1435, 0.5
    %v1441 = vadd.f32 %v1440, 0.5
    %v1442 = vmul.f32 %v1439, %v1081
    %v1443 = vmul.f32 %v1437, %v1434
    %v1444 = vadd.f32 %v1442, %v1443
    %v1445 = vtanh.pop %v1444
    %v1446 = vmul.f32 %v1441, %v1445
    %1447 = vmatpush.msra.mxu0 %v187
    %1448 = vmatpush.msra.mxu0 %v179
    %1449 = vmatpush.msra.mxu0 %v171
    %1450 = vmatpush.msra.mxu0 %v163
    %1451 = vmatpush.msra.mxu0 %v155
    %1452 = vmatpush.msra.mxu0 %v147
    %1453 = vmatpush.msra.mxu0 %v139
    %1454 = vmatpush.msra.mxu0 %v131
    %1455 = vmatpush.msra.mxu0 %v123
    %1456 = vmatpush.msra.mxu0 %v115
    %1457 = vmatpush.msra.mxu0 %v107
    %1458 = vmatpush.msra.mxu0 %v99
    %1459 = vmatpush.msra.mxu0 %v91
    %1460 = vmatpush.msra.mxu0 %v83
    %1461 = vmatpush.msra.mxu0 %v75
    %1462 = vmatpush.msra.mxu0 %v67
    %1463 = vmatmul.f32.gmra.mxu0 %v1446
    %v1464 = vpop.f32.mrf.mxu0
    %v1465 = vadd.f32 0.0, %v1464
    %1466 = vdwg.mxu0
    %1467 = vmatpush.msra.mxu0 %v315
    %1468 = vmatpush.msra.mxu0 %v307
    %1469 = vmatpush.msra.mxu0 %v299
    %1470 = vmatpush.msra.mxu0 %v291
    %1471 = vmatpush.msra.mxu0 %v283
    %1472 = vmatpush.msra.mxu0 %v275
    %1473 = vmatpush.msra.mxu0 %v267
    %1474 = vmatpush.msra.mxu0 %v259
    %1475 = vmatpush.msra.mxu0 %v251
    %1476 = vmatpush.msra.mxu0 %v243
    %1477 = vmatpush.msra.mxu0 %v235
    %1478 = vmatpush.msra.mxu0 %v227
    %1479 = vmatpush.msra.mxu0 %v219
    %1480 = vmatpush.msra.mxu0 %v211
    %1481 = vmatpush.msra.mxu0 %v203
    %1482 = vmatpush.msra.mxu0 %v195
    %1483 = vmatmul.f32.gmra.mxu0 %v1422
    %v1484 = vpop.f32.mrf.mxu0
    %v1485 = vadd.f32 %v1465, %v1484
    %1486 = vdwg.mxu0
    %1487 = vmatpush.msra.mxu0 %v188
    %1488 = vmatpush.msra.mxu0 %v180
    %1489 = vmatpush.msra.mxu0 %v172
    %1490 = vmatpush.msra.mxu0 %v164
    %1491 = vmatpush.msra.mxu0 %v156
    %1492 = vmatpush.msra.mxu0 %v148
    %1493 = vmatpush.msra.mxu0 %v140
    %1494 = vmatpush.msra.mxu0 %v132
    %1495 = vmatpush.msra.mxu0 %v124
    %1496 = vmatpush.msra.mxu0 %v116
    %1497 = vmatpush.msra.mxu0 %v108
    %1498 = vmatpush.msra.mxu0 %v100
    %1499 = vmatpush.msra.mxu0 %v92
    %1500 = vmatpush.msra.mxu0 %v84
    %1501 = vmatpush.msra.mxu0 %v76
    %1502 = vmatpush.msra.mxu0 %v68
    %1503 = vmatmul.f32.gmra.mxu0 %v1446
    %v1504 = vpop.f32.mrf.mxu0
    %v1505 = vadd.f32 0.0, %v1504
    %1506 = vdwg.mxu0
    %1507 = vmatpush.msra.mxu0 %v316
    %1508 = vmatpush.msra.mxu0 %v308
    %1509 = vmatpush.msra.mxu0 %v300
    %1510 = vmatpush.msra.mxu0 %v292
    %1511 = vmatpush.msra.mxu0 %v284
    %1512 = vmatpush.msra.mxu0 %v276
    %1513 = vmatpush.msra.mxu0 %v268
    %1514 = vmatpush.msra.mxu0 %v260
    %1515 = vmatpush.msra.mxu0 %v252
    %1516 = vmatpush.msra.mxu0 %v244
    %1517 = vmatpush.msra.mxu0 %v236
    %1518 = vmatpush.msra.mxu0 %v228
    %1519 = vmatpush.msra.mxu0 %v220
    %1520 = vmatpush.msra.mxu0 %v212
    %1521 = vmatpush.msra.mxu0 %v204
    %1522 = vmatpush.msra.mxu0 %v196
    %1523 = vmatmul.f32.gmra.mxu0 %v1422
    %v1524 = vpop.f32.mrf.mxu0
    %v1525 = vadd.f32 %v1505, %v1524
    %1526 = vdwg.mxu0
    %1527 = vmatpush.msra.mxu0 %v189
    %1528 = vmatpush.msra.mxu0 %v181
    %1529 = vmatpush.msra.mxu0 %v173
    %1530 = vmatpush.msra.mxu0 %v165
    %1531 = vmatpush.msra.mxu0 %v157
    %1532 = vmatpush.msra.mxu0 %v149
    %1533 = vmatpush.msra.mxu0 %v141
    %1534 = vmatpush.msra.mxu0 %v133
    %1535 = vmatpush.msra.mxu0 %v125
    %1536 = vmatpush.msra.mxu0 %v117
    %1537 = vmatpush.msra.mxu0 %v109
    %1538 = vmatpush.msra.mxu0 %v101
    %1539 = vmatpush.msra.mxu0 %v93
    %1540 = vmatpush.msra.mxu0 %v85
    %1541 = vmatpush.msra.mxu0 %v77
    %1542 = vmatpush.msra.mxu0 %v69
    %1543 = vmatmul.f32.gmra.mxu0 %v1446
    %v1544 = vpop.f32.mrf.mxu0
    %v1545 = vadd.f32 0.0, %v1544
    %1546 = vdwg.mxu0
    %1547 = vmatpush.msra.mxu0 %v317
    %1548 = vmatpush.msra.mxu0 %v309
    %1549 = vmatpush.msra.mxu0 %v301
    %1550 = vmatpush.msra.mxu0 %v293
    %1551 = vmatpush.msra.mxu0 %v285
    %1552 = vmatpush.msra.mxu0 %v277
    %1553 = vmatpush.msra.mxu0 %v269
    %1554 = vmatpush.msra.mxu0 %v261
    %1555 = vmatpush.msra.mxu0 %v253
    %1556 = vmatpush.msra.mxu0 %v245
    %1557 = vmatpush.msra.mxu0 %v237
    %1558 = vmatpush.msra.mxu0 %v229
    %1559 = vmatpush.msra.mxu0 %v221
    %1560 = vmatpush.msra.mxu0 %v213
    %1561 = vmatpush.msra.mxu0 %v205
    %1562 = vmatpush.msra.mxu0 %v197
    %1563 = vmatmul.f32.gmra.mxu0 %v1422
    %v1564 = vpop.f32.mrf.mxu0
    %v1565 = vadd.f32 %v1545, %v1564
    %1566 = vdwg.mxu0
    %1567 = vmatpush.msra.mxu0 %v190
    %1568 = vmatpush.msra.mxu0 %v182
    %1569 = vmatpush.msra.mxu0 %v174
    %1570 = vmatpush.msra.mxu0 %v166
    %1571 = vmatpush.msra.mxu0 %v158
    %1572 = vmatpush.msra.mxu0 %v150
    %1573 = vmatpush.msra.mxu0 %v142
    %1574 = vmatpush.msra.mxu0 %v134
    %1575 = vmatpush.msra.mxu0 %v126
    %1576 = vmatpush.msra.mxu0 %v118
    %1577 = vmatpush.msra.mxu0 %v110
    %1578 = vmatpush.msra.mxu0 %v102
    %1579 = vmatpush.msra.mxu0 %v94
    %1580 = vmatpush.msra.mxu0 %v86
    %1581 = vmatpush.msra.mxu0 %v78
    %1582 = vmatpush.msra.mxu0 %v70
    %1583 = vmatmul.f32.gmra.mxu0 %v1446
    %v1584 = vpop.f32.mrf.mxu0
    %v1585 = vadd.f32 0.0, %v1584
    %1586 = vdwg.mxu0
    %1587 = vmatpush.msra.mxu0 %v318
    %1588 = vmatpush.msra.mxu0 %v310
    %1589 = vmatpush.msra.mxu0 %v302
    %1590 = vmatpush.msra.mxu0 %v294
    %1591 = vmatpush.msra.mxu0 %v286
    %1592 = vmatpush.msra.mxu0 %v278
    %1593 = vmatpush.msra.mxu0 %v270
    %1594 = vmatpush.msra.mxu0 %v262
    %1595 = vmatpush.msra.mxu0 %v254
    %1596 = vmatpush.msra.mxu0 %v246
    %1597 = vmatpush.msra.mxu0 %v238
    %1598 = vmatpush.msra.mxu0 %v230
    %1599 = vmatpush.msra.mxu0 %v222
    %1600 = vmatpush.msra.mxu0 %v214
    %1601 = vmatpush.msra.mxu0 %v206
    %1602 = vmatpush.msra.mxu0 %v198
    %1603 = vmatmul.f32.gmra.mxu0 %v1422
    %v1604 = vpop.f32.mrf.mxu0
    %v1605 = vadd.f32 %v1585, %v1604
    %1606 = vdwg.mxu0
    %1607 = vmatpush.msra.mxu0 %v191
    %1608 = vmatpush.msra.mxu0 %v183
    %1609 = vmatpush.msra.mxu0 %v175
    %1610 = vmatpush.msra.mxu0 %v167
    %1611 = vmatpush.msra.mxu0 %v159
    %1612 = vmatpush.msra.mxu0 %v151
    %1613 = vmatpush.msra.mxu0 %v143
    %1614 = vmatpush.msra.mxu0 %v135
    %1615 = vmatpush.msra.mxu0 %v127
    %1616 = vmatpush.msra.mxu0 %v119
    %1617 = vmatpush.msra.mxu0 %v111
    %1618 = vmatpush.msra.mxu0 %v103
    %1619 = vmatpush.msra.mxu0 %v95
    %1620 = vmatpush.msra.mxu0 %v87
    %1621 = vmatpush.msra.mxu0 %v79
    %1622 = vmatpush.msra.mxu0 %v71
    %1623 = vmatmul.f32.gmra.mxu0 %v1446
    %v1624 = vpop.f32.mrf.mxu0
    %v1625 = vadd.f32 0.0, %v1624
    %1626 = vdwg.mxu0
    %1627 = vmatpush.msra.mxu0 %v319
    %1628 = vmatpush.msra.mxu0 %v311
    %1629 = vmatpush.msra.mxu0 %v303
    %1630 = vmatpush.msra.mxu0 %v295
    %1631 = vmatpush.msra.mxu0 %v287
    %1632 = vmatpush.msra.mxu0 %v279
    %1633 = vmatpush.msra.mxu0 %v271
    %1634 = vmatpush.msra.mxu0 %v263
    %1635 = vmatpush.msra.mxu0 %v255
    %1636 = vmatpush.msra.mxu0 %v247
    %1637 = vmatpush.msra.mxu0 %v239
    %1638 = vmatpush.msra.mxu0 %v231
    %1639 = vmatpush.msra.mxu0 %v223
    %1640 = vmatpush.msra.mxu0 %v215
    %1641 = vmatpush.msra.mxu0 %v207
    %1642 = vmatpush.msra.mxu0 %v199
    %1643 = vmatmul.f32.gmra.mxu0 %v1422
    %v1644 = vpop.f32.mrf.mxu0
    %v1645 = vadd.f32 %v1625, %v1644
    %1646 = vdwg.mxu0
    %1647 = vmatpush.msra.mxu0 %v192
    %1648 = vmatpush.msra.mxu0 %v184
    %1649 = vmatpush.msra.mxu0 %v176
    %1650 = vmatpush.msra.mxu0 %v168
    %1651 = vmatpush.msra.mxu0 %v160
    %1652 = vmatpush.msra.mxu0 %v152
    %1653 = vmatpush.msra.mxu0 %v144
    %1654 = vmatpush.msra.mxu0 %v136
    %1655 = vmatpush.msra.mxu0 %v128
    %1656 = vmatpush.msra.mxu0 %v120
    %1657 = vmatpush.msra.mxu0 %v112
    %1658 = vmatpush.msra.mxu0 %v104
    %1659 = vmatpush.msra.mxu0 %v96
    %1660 = vmatpush.msra.mxu0 %v88
    %1661 = vmatpush.msra.mxu0 %v80
    %1662 = vmatpush.msra.mxu0 %v72
    %1663 = vmatmul.f32.gmra.mxu0 %v1446
    %v1664 = vpop.f32.mrf.mxu0
    %v1665 = vadd.f32 0.0, %v1664
    %1666 = vdwg.mxu0
    %1667 = vmatpush.msra.mxu0 %v320
    %1668 = vmatpush.msra.mxu0 %v312
    %1669 = vmatpush.msra.mxu0 %v304
    %1670 = vmatpush.msra.mxu0 %v296
    %1671 = vmatpush.msra.mxu0 %v288
    %1672 = vmatpush.msra.mxu0 %v280
    %1673 = vmatpush.msra.mxu0 %v272
    %1674 = vmatpush.msra.mxu0 %v264
    %1675 = vmatpush.msra.mxu0 %v256
    %1676 = vmatpush.msra.mxu0 %v248
    %1677 = vmatpush.msra.mxu0 %v240
    %1678 = vmatpush.msra.mxu0 %v232
    %1679 = vmatpush.msra.mxu0 %v224
    %1680 = vmatpush.msra.mxu0 %v216
    %1681 = vmatpush.msra.mxu0 %v208
    %1682 = vmatpush.msra.mxu0 %v200
    %1683 = vmatmul.f32.gmra.mxu0 %v1422
    %v1684 = vpop.f32.mrf.mxu0
    %v1685 = vadd.f32 %v1665, %v1684
    %1686 = vdwg.mxu0
    %1687 = vmatpush.msra.mxu0 %v193
    %1688 = vmatpush.msra.mxu0 %v185
    %1689 = vmatpush.msra.mxu0 %v177
    %1690 = vmatpush.msra.mxu0 %v169
    %1691 = vmatpush.msra.mxu0 %v161
    %1692 = vmatpush.msra.mxu0 %v153
    %1693 = vmatpush.msra.mxu0 %v145
    %1694 = vmatpush.msra.mxu0 %v137
    %1695 = vmatpush.msra.mxu0 %v129
    %1696 = vmatpush.msra.mxu0 %v121
    %1697 = vmatpush.msra.mxu0 %v113
    %1698 = vmatpush.msra.mxu0 %v105
    %1699 = vmatpush.msra.mxu0 %v97
    %1700 = vmatpush.msra.mxu0 %v89
    %1701 = vmatpush.msra.mxu0 %v81
    %1702 = vmatpush.msra.mxu0 %v73
    %1703 = vmatmul.f32.gmra.mxu0 %v1446
    %v1704 = vpop.f32.mrf.mxu0
    %v1705 = vadd.f32 0.0, %v1704
    %1706 = vdwg.mxu0
    %1707 = vmatpush.msra.mxu0 %v321
    %1708 = vmatpush.msra.mxu0 %v313
    %1709 = vmatpush.msra.mxu0 %v305
    %1710 = vmatpush.msra.mxu0 %v297
    %1711 = vmatpush.msra.mxu0 %v289
    %1712 = vmatpush.msra.mxu0 %v281
    %1713 = vmatpush.msra.mxu0 %v273
    %1714 = vmatpush.msra.mxu0 %v265
    %1715 = vmatpush.msra.mxu0 %v257
    %1716 = vmatpush.msra.mxu0 %v249
    %1717 = vmatpush.msra.mxu0 %v241
    %1718 = vmatpush.msra.mxu0 %v233
    %1719 = vmatpush.msra.mxu0 %v225
    %1720 = vmatpush.msra.mxu0 %v217
    %1721 = vmatpush.msra.mxu0 %v209
    %1722 = vmatpush.msra.mxu0 %v201
    %1723 = vmatmul.f32.gmra.mxu0 %v1422
    %v1724 = vpop.f32.mrf.mxu0
    %v1725 = vadd.f32 %v1705, %v1724
    %1726 = vdwg.mxu0
    %1727 = vmatpush.msra.mxu0 %v194
    %1728 = vmatpush.msra.mxu0 %v186
    %1729 = vmatpush.msra.mxu0 %v178
    %1730 = vmatpush.msra.mxu0 %v170
    %1731 = vmatpush.msra.mxu0 %v162
    %1732 = vmatpush.msra.mxu0 %v154
    %1733 = vmatpush.msra.mxu0 %v146
    %1734 = vmatpush.msra.mxu0 %v138
    %1735 = vmatpush.msra.mxu0 %v130
    %1736 = vmatpush.msra.mxu0 %v122
    %1737 = vmatpush.msra.mxu0 %v114
    %1738 = vmatpush.msra.mxu0 %v106
    %1739 = vmatpush.msra.mxu0 %v98
    %1740 = vmatpush.msra.mxu0 %v90
    %1741 = vmatpush.msra.mxu0 %v82
    %1742 = vmatpush.msra.mxu0 %v74
    %1743 = vmatmul.f32.gmra.mxu0 %v1446
    %v1744 = vpop.f32.mrf.mxu0
    %v1745 = vadd.f32 0.0, %v1744
    %1746 = vdwg.mxu0
    %1747 = vmatpush.msra.mxu0 %v322
    %1748 = vmatpush.msra.mxu0 %v314
    %1749 = vmatpush.msra.mxu0 %v306
    %1750 = vmatpush.msra.mxu0 %v298
    %1751 = vmatpush.msra.mxu0 %v290
    %1752 = vmatpush.msra.mxu0 %v282
    %1753 = vmatpush.msra.mxu0 %v274
    %1754 = vmatpush.msra.mxu0 %v266
    %1755 = vmatpush.msra.mxu0 %v258
    %1756 = vmatpush.msra.mxu0 %v250
    %1757 = vmatpush.msra.mxu0 %v242
    %1758 = vmatpush.msra.mxu0 %v234
    %1759 = vmatpush.msra.mxu0 %v226
    %1760 = vmatpush.msra.mxu0 %v218
    %1761 = vmatpush.msra.mxu0 %v210
    %1762 = vmatpush.msra.mxu0 %v202
    %1763 = vmatmul.f32.gmra.mxu0 %v1422
    %v1764 = vpop.f32.mrf.mxu0
    %v1765 = vadd.f32 %v1745, %v1764
    %1766 = vdwg.mxu0
    %v1767 = vadd.f32 %v1645, %v325
    %v1768 = vadd.f32 %v1685, %v326
    %v1769 = vadd.f32 %v1725, %v327
    %v1770 = vadd.f32 %v1765, %v328
    %v1771 = vtanh.pop %v1767
    %v1772 = vtanh.pop %v1768
    %v1773 = vtanh.pop %v1769
    %v1774 = vtanh.pop %v1770
    %v1775 = vmul.f32 %v1771, 0.5
    %v1776 = vadd.f32 %v1775, 0.5
    %v1777 = vmul.f32 %v1772, 0.5
    %v1778 = vadd.f32 %v1777, 0.5
    %v1779 = vmul.f32 %v1774, 0.5
    %v1780 = vadd.f32 %v1779, 0.5
    %v1781 = vmul.f32 %v1778, %v1420
    %v1782 = vmul.f32 %v1776, %v1773
    %v1783 = vadd.f32 %v1781, %v1782
    %v1784 = vtanh.pop %v1783
    %v1785 = vmul.f32 %v1780, %v1784
    %s1786 = scalar_lea.vmem [#allocation3], 128
    %v1787 = vld [vmem:[%s1786] sm:$0xff]
    %v1788 = vld [vmem:[%s1786 + $0x8] sm:$0xff]
    %v1789 = vld [vmem:[%s1786 + $0x10] sm:$0xff]
    %v1790 = vld [vmem:[%s1786 + $0x18] sm:$0xff]
    %v1791 = vadd.f32 %v1787, %v1485
    %v1792 = vadd.f32 %v1788, %v1525
    %v1793 = vadd.f32 %v1789, %v1565
    %v1794 = vadd.f32 %v1790, %v1605
    %v1795 = vtanh.pop %v1791
    %v1796 = vtanh.pop %v1792
    %v1797 = vtanh.pop %v1793
    %v1798 = vtanh.pop %v1794
    %v1799 = vmul.f32 %v1795, 0.5
    %v1800 = vadd.f32 %v1799, 0.5
    %v1801 = vmul.f32 %v1796, 0.5
    %v1802 = vadd.f32 %v1801, 0.5
    %v1803 = vmul.f32 %v1798, 0.5
    %v1804 = vadd.f32 %v1803, 0.5
    %v1805 = vmul.f32 %v1802, %v1444
    %v1806 = vmul.f32 %v1800, %v1797
    %v1807 = vadd.f32 %v1805, %v1806
    %v1808 = vtanh.pop %v1807
    %v1809 = vmul.f32 %v1804, %v1808
    %1810 = vmatpush.msra.mxu0 %v187
    %1811 = vmatpush.msra.mxu0 %v179
    %1812 = vmatpush.msra.mxu0 %v171
    %1813 = vmatpush.msra.mxu0 %v163
    %1814 = vmatpush.msra.mxu0 %v155
    %1815 = vmatpush.msra.mxu0 %v147
    %1816 = vmatpush.msra.mxu0 %v139
    %1817 = vmatpush.msra.mxu0 %v131
    %1818 = vmatpush.msra.mxu0 %v123
    %1819 = vmatpush.msra.mxu0 %v115
    %1820 = vmatpush.msra.mxu0 %v107
    %1821 = vmatpush.msra.mxu0 %v99
    %1822 = vmatpush.msra.mxu0 %v91
    %1823 = vmatpush.msra.mxu0 %v83
    %1824 = vmatpush.msra.mxu0 %v75
    %1825 = vmatpush.msra.mxu0 %v67
    %1826 = vmatmul.f32.gmra.mxu0 %v1809
    %v1827 = vpop.f32.mrf.mxu0
    %v1828 = vadd.f32 0.0, %v1827
    %1829 = vdwg.mxu0
    %1830 = vmatpush.msra.mxu0 %v315
    %1831 = vmatpush.msra.mxu0 %v307
    %1832 = vmatpush.msra.mxu0 %v299
    %1833 = vmatpush.msra.mxu0 %v291
    %1834 = vmatpush.msra.mxu0 %v283
    %1835 = vmatpush.msra.mxu0 %v275
    %1836 = vmatpush.msra.mxu0 %v267
    %1837 = vmatpush.msra.mxu0 %v259
    %1838 = vmatpush.msra.mxu0 %v251
    %1839 = vmatpush.msra.mxu0 %v243
    %1840 = vmatpush.msra.mxu0 %v235
    %1841 = vmatpush.msra.mxu0 %v227
    %1842 = vmatpush.msra.mxu0 %v219
    %1843 = vmatpush.msra.mxu0 %v211
    %1844 = vmatpush.msra.mxu0 %v203
    %1845 = vmatpush.msra.mxu0 %v195
    %1846 = vmatmul.f32.gmra.mxu0 %v1785
    %v1847 = vpop.f32.mrf.mxu0
    %v1848 = vadd.f32 %v1828, %v1847
    %1849 = vdwg.mxu0
    %1850 = vmatpush.msra.mxu0 %v188
    %1851 = vmatpush.msra.mxu0 %v180
    %1852 = vmatpush.msra.mxu0 %v172
    %1853 = vmatpush.msra.mxu0 %v164
    %1854 = vmatpush.msra.mxu0 %v156
    %1855 = vmatpush.msra.mxu0 %v148
    %1856 = vmatpush.msra.mxu0 %v140
    %1857 = vmatpush.msra.mxu0 %v132
    %1858 = vmatpush.msra.mxu0 %v124
    %1859 = vmatpush.msra.mxu0 %v116
    %1860 = vmatpush.msra.mxu0 %v108
    %1861 = vmatpush.msra.mxu0 %v100
    %1862 = vmatpush.msra.mxu0 %v92
    %1863 = vmatpush.msra.mxu0 %v84
    %1864 = vmatpush.msra.mxu0 %v76
    %1865 = vmatpush.msra.mxu0 %v68
    %1866 = vmatmul.f32.gmra.mxu0 %v1809
    %v1867 = vpop.f32.mrf.mxu0
    %v1868 = vadd.f32 0.0, %v1867
    %1869 = vdwg.mxu0
    %1870 = vmatpush.msra.mxu0 %v316
    %1871 = vmatpush.msra.mxu0 %v308
    %1872 = vmatpush.msra.mxu0 %v300
    %1873 = vmatpush.msra.mxu0 %v292
    %1874 = vmatpush.msra.mxu0 %v284
    %1875 = vmatpush.msra.mxu0 %v276
    %1876 = vmatpush.msra.mxu0 %v268
    %1877 = vmatpush.msra.mxu0 %v260
    %1878 = vmatpush.msra.mxu0 %v252
    %1879 = vmatpush.msra.mxu0 %v244
    %1880 = vmatpush.msra.mxu0 %v236
    %1881 = vmatpush.msra.mxu0 %v228
    %1882 = vmatpush.msra.mxu0 %v220
    %1883 = vmatpush.msra.mxu0 %v212
    %1884 = vmatpush.msra.mxu0 %v204
    %1885 = vmatpush.msra.mxu0 %v196
    %1886 = vmatmul.f32.gmra.mxu0 %v1785
    %v1887 = vpop.f32.mrf.mxu0
    %v1888 = vadd.f32 %v1868, %v1887
    %1889 = vdwg.mxu0
    %1890 = vmatpush.msra.mxu0 %v189
    %1891 = vmatpush.msra.mxu0 %v181
    %1892 = vmatpush.msra.mxu0 %v173
    %1893 = vmatpush.msra.mxu0 %v165
    %1894 = vmatpush.msra.mxu0 %v157
    %1895 = vmatpush.msra.mxu0 %v149
    %1896 = vmatpush.msra.mxu0 %v141
    %1897 = vmatpush.msra.mxu0 %v133
    %1898 = vmatpush.msra.mxu0 %v125
    %1899 = vmatpush.msra.mxu0 %v117
    %1900 = vmatpush.msra.mxu0 %v109
    %1901 = vmatpush.msra.mxu0 %v101
    %1902 = vmatpush.msra.mxu0 %v93
    %1903 = vmatpush.msra.mxu0 %v85
    %1904 = vmatpush.msra.mxu0 %v77
    %1905 = vmatpush.msra.mxu0 %v69
    %1906 = vmatmul.f32.gmra.mxu0 %v1809
    %v1907 = vpop.f32.mrf.mxu0
    %v1908 = vadd.f32 0.0, %v1907
    %1909 = vdwg.mxu0
    %1910 = vmatpush.msra.mxu0 %v317
    %1911 = vmatpush.msra.mxu0 %v309
    %1912 = vmatpush.msra.mxu0 %v301
    %1913 = vmatpush.msra.mxu0 %v293
    %1914 = vmatpush.msra.mxu0 %v285
    %1915 = vmatpush.msra.mxu0 %v277
    %1916 = vmatpush.msra.mxu0 %v269
    %1917 = vmatpush.msra.mxu0 %v261
    %1918 = vmatpush.msra.mxu0 %v253
    %1919 = vmatpush.msra.mxu0 %v245
    %1920 = vmatpush.msra.mxu0 %v237
    %1921 = vmatpush.msra.mxu0 %v229
    %1922 = vmatpush.msra.mxu0 %v221
    %1923 = vmatpush.msra.mxu0 %v213
    %1924 = vmatpush.msra.mxu0 %v205
    %1925 = vmatpush.msra.mxu0 %v197
    %1926 = vmatmul.f32.gmra.mxu0 %v1785
    %v1927 = vpop.f32.mrf.mxu0
    %v1928 = vadd.f32 %v1908, %v1927
    %1929 = vdwg.mxu0
    %1930 = vmatpush.msra.mxu0 %v190
    %1931 = vmatpush.msra.mxu0 %v182
    %1932 = vmatpush.msra.mxu0 %v174
    %1933 = vmatpush.msra.mxu0 %v166
    %1934 = vmatpush.msra.mxu0 %v158
    %1935 = vmatpush.msra.mxu0 %v150
    %1936 = vmatpush.msra.mxu0 %v142
    %1937 = vmatpush.msra.mxu0 %v134
    %1938 = vmatpush.msra.mxu0 %v126
    %1939 = vmatpush.msra.mxu0 %v118
    %1940 = vmatpush.msra.mxu0 %v110
    %1941 = vmatpush.msra.mxu0 %v102
    %1942 = vmatpush.msra.mxu0 %v94
    %1943 = vmatpush.msra.mxu0 %v86
    %1944 = vmatpush.msra.mxu0 %v78
    %1945 = vmatpush.msra.mxu0 %v70
    %1946 = vmatmul.f32.gmra.mxu0 %v1809
    %v1947 = vpop.f32.mrf.mxu0
    %v1948 = vadd.f32 0.0, %v1947
    %1949 = vdwg.mxu0
    %1950 = vmatpush.msra.mxu0 %v318
    %1951 = vmatpush.msra.mxu0 %v310
    %1952 = vmatpush.msra.mxu0 %v302
    %1953 = vmatpush.msra.mxu0 %v294
    %1954 = vmatpush.msra.mxu0 %v286
    %1955 = vmatpush.msra.mxu0 %v278
    %1956 = vmatpush.msra.mxu0 %v270
    %1957 = vmatpush.msra.mxu0 %v262
    %1958 = vmatpush.msra.mxu0 %v254
    %1959 = vmatpush.msra.mxu0 %v246
    %1960 = vmatpush.msra.mxu0 %v238
    %1961 = vmatpush.msra.mxu0 %v230
    %1962 = vmatpush.msra.mxu0 %v222
    %1963 = vmatpush.msra.mxu0 %v214
    %1964 = vmatpush.msra.mxu0 %v206
    %1965 = vmatpush.msra.mxu0 %v198
    %1966 = vmatmul.f32.gmra.mxu0 %v1785
    %v1967 = vpop.f32.mrf.mxu0
    %v1968 = vadd.f32 %v1948, %v1967
    %1969 = vdwg.mxu0
    %1970 = vmatpush.msra.mxu0 %v191
    %1971 = vmatpush.msra.mxu0 %v183
    %1972 = vmatpush.msra.mxu0 %v175
    %1973 = vmatpush.msra.mxu0 %v167
    %1974 = vmatpush.msra.mxu0 %v159
    %1975 = vmatpush.msra.mxu0 %v151
    %1976 = vmatpush.msra.mxu0 %v143
    %1977 = vmatpush.msra.mxu0 %v135
    %1978 = vmatpush.msra.mxu0 %v127
    %1979 = vmatpush.msra.mxu0 %v119
    %1980 = vmatpush.msra.mxu0 %v111
    %1981 = vmatpush.msra.mxu0 %v103
    %1982 = vmatpush.msra.mxu0 %v95
    %1983 = vmatpush.msra.mxu0 %v87
    %1984 = vmatpush.msra.mxu0 %v79
    %1985 = vmatpush.msra.mxu0 %v71
    %1986 = vmatmul.f32.gmra.mxu0 %v1809
    %v1987 = vpop.f32.mrf.mxu0
    %v1988 = vadd.f32 0.0, %v1987
    %1989 = vdwg.mxu0
    %1990 = vmatpush.msra.mxu0 %v319
    %1991 = vmatpush.msra.mxu0 %v311
    %1992 = vmatpush.msra.mxu0 %v303
    %1993 = vmatpush.msra.mxu0 %v295
    %1994 = vmatpush.msra.mxu0 %v287
    %1995 = vmatpush.msra.mxu0 %v279
    %1996 = vmatpush.msra.mxu0 %v271
    %1997 = vmatpush.msra.mxu0 %v263
    %1998 = vmatpush.msra.mxu0 %v255
    %1999 = vmatpush.msra.mxu0 %v247
    %2000 = vmatpush.msra.mxu0 %v239
    %2001 = vmatpush.msra.mxu0 %v231
    %2002 = vmatpush.msra.mxu0 %v223
    %2003 = vmatpush.msra.mxu0 %v215
    %2004 = vmatpush.msra.mxu0 %v207
    %2005 = vmatpush.msra.mxu0 %v199
    %2006 = vmatmul.f32.gmra.mxu0 %v1785
    %v2007 = vpop.f32.mrf.mxu0
    %v2008 = vadd.f32 %v1988, %v2007
    %2009 = vdwg.mxu0
    %2010 = vmatpush.msra.mxu0 %v192
    %2011 = vmatpush.msra.mxu0 %v184
    %2012 = vmatpush.msra.mxu0 %v176
    %2013 = vmatpush.msra.mxu0 %v168
    %2014 = vmatpush.msra.mxu0 %v160
    %2015 = vmatpush.msra.mxu0 %v152
    %2016 = vmatpush.msra.mxu0 %v144
    %2017 = vmatpush.msra.mxu0 %v136
    %2018 = vmatpush.msra.mxu0 %v128
    %2019 = vmatpush.msra.mxu0 %v120
    %2020 = vmatpush.msra.mxu0 %v112
    %2021 = vmatpush.msra.mxu0 %v104
    %2022 = vmatpush.msra.mxu0 %v96
    %2023 = vmatpush.msra.mxu0 %v88
    %2024 = vmatpush.msra.mxu0 %v80
    %2025 = vmatpush.msra.mxu0 %v72
    %2026 = vmatmul.f32.gmra.mxu0 %v1809
    %v2027 = vpop.f32.mrf.mxu0
    %v2028 = vadd.f32 0.0, %v2027
    %2029 = vdwg.mxu0
    %2030 = vmatpush.msra.mxu0 %v320
    %2031 = vmatpush.msra.mxu0 %v312
    %2032 = vmatpush.msra.mxu0 %v304
    %2033 = vmatpush.msra.mxu0 %v296
    %2034 = vmatpush.msra.mxu0 %v288
    %2035 = vmatpush.msra.mxu0 %v280
    %2036 = vmatpush.msra.mxu0 %v272
    %2037 = vmatpush.msra.mxu0 %v264
    %2038 = vmatpush.msra.mxu0 %v256
    %2039 = vmatpush.msra.mxu0 %v248
    %2040 = vmatpush.msra.mxu0 %v240
    %2041 = vmatpush.msra.mxu0 %v232
    %2042 = vmatpush.msra.mxu0 %v224
    %2043 = vmatpush.msra.mxu0 %v216
    %2044 = vmatpush.msra.mxu0 %v208
    %2045 = vmatpush.msra.mxu0 %v200
    %2046 = vmatmul.f32.gmra.mxu0 %v1785
    %v2047 = vpop.f32.mrf.mxu0
    %v2048 = vadd.f32 %v2028, %v2047
    %2049 = vdwg.mxu0
    %2050 = vmatpush.msra.mxu0 %v193
    %2051 = vmatpush.msra.mxu0 %v185
    %2052 = vmatpush.msra.mxu0 %v177
    %2053 = vmatpush.msra.mxu0 %v169
    %2054 = vmatpush.msra.mxu0 %v161
    %2055 = vmatpush.msra.mxu0 %v153
    %2056 = vmatpush.msra.mxu0 %v145
    %2057 = vmatpush.msra.mxu0 %v137
    %2058 = vmatpush.msra.mxu0 %v129
    %2059 = vmatpush.msra.mxu0 %v121
    %2060 = vmatpush.msra.mxu0 %v113
    %2061 = vmatpush.msra.mxu0 %v105
    %2062 = vmatpush.msra.mxu0 %v97
    %2063 = vmatpush.msra.mxu0 %v89
    %2064 = vmatpush.msra.mxu0 %v81
    %2065 = vmatpush.msra.mxu0 %v73
    %2066 = vmatmul.f32.gmra.mxu0 %v1809
    %v2067 = vpop.f32.mrf.mxu0
    %v2068 = vadd.f32 0.0, %v2067
    %2069 = vdwg.mxu0
    %2070 = vmatpush.msra.mxu0 %v321
    %2071 = vmatpush.msra.mxu0 %v313
    %2072 = vmatpush.msra.mxu0 %v305
    %2073 = vmatpush.msra.mxu0 %v297
    %2074 = vmatpush.msra.mxu0 %v289
    %2075 = vmatpush.msra.mxu0 %v281
    %2076 = vmatpush.msra.mxu0 %v273
    %2077 = vmatpush.msra.mxu0 %v265
    %2078 = vmatpush.msra.mxu0 %v257
    %2079 = vmatpush.msra.mxu0 %v249
    %2080 = vmatpush.msra.mxu0 %v241
    %2081 = vmatpush.msra.mxu0 %v233
    %2082 = vmatpush.msra.mxu0 %v225
    %2083 = vmatpush.msra.mxu0 %v217
    %2084 = vmatpush.msra.mxu0 %v209
    %2085 = vmatpush.msra.mxu0 %v201
    %2086 = vmatmul.f32.gmra.mxu0 %v1785
    %v2087 = vpop.f32.mrf.mxu0
    %v2088 = vadd.f32 %v2068, %v2087
    %2089 = vdwg.mxu0
    %2090 = vmatpush.msra.mxu0 %v194
    %2091 = vmatpush.msra.mxu0 %v186
    %2092 = vmatpush.msra.mxu0 %v178
    %2093 = vmatpush.msra.mxu0 %v170
    %2094 = vmatpush.msra.mxu0 %v162
    %2095 = vmatpush.msra.mxu0 %v154
    %2096 = vmatpush.msra.mxu0 %v146
    %2097 = vmatpush.msra.mxu0 %v138
    %2098 = vmatpush.msra.mxu0 %v130
    %2099 = vmatpush.msra.mxu0 %v122
    %2100 = vmatpush.msra.mxu0 %v114
    %2101 = vmatpush.msra.mxu0 %v106
    %2102 = vmatpush.msra.mxu0 %v98
    %2103 = vmatpush.msra.mxu0 %v90
    %2104 = vmatpush.msra.mxu0 %v82
    %2105 = vmatpush.msra.mxu0 %v74
    %2106 = vmatmul.f32.gmra.mxu0 %v1809
    %v2107 = vpop.f32.mrf.mxu0
    %v2108 = vadd.f32 0.0, %v2107
    %2109 = vdwg.mxu0
    %2110 = vmatpush.msra.mxu0 %v322
    %2111 = vmatpush.msra.mxu0 %v314
    %2112 = vmatpush.msra.mxu0 %v306
    %2113 = vmatpush.msra.mxu0 %v298
    %2114 = vmatpush.msra.mxu0 %v290
    %2115 = vmatpush.msra.mxu0 %v282
    %2116 = vmatpush.msra.mxu0 %v274
    %2117 = vmatpush.msra.mxu0 %v266
    %2118 = vmatpush.msra.mxu0 %v258
    %2119 = vmatpush.msra.mxu0 %v250
    %2120 = vmatpush.msra.mxu0 %v242
    %2121 = vmatpush.msra.mxu0 %v234
    %2122 = vmatpush.msra.mxu0 %v226
    %2123 = vmatpush.msra.mxu0 %v218
    %2124 = vmatpush.msra.mxu0 %v210
    %2125 = vmatpush.msra.mxu0 %v202
    %2126 = vmatmul.f32.gmra.mxu0 %v1785
    %v2127 = vpop.f32.mrf.mxu0
    %v2128 = vadd.f32 %v2108, %v2127
    %2129 = vdwg.mxu0
    %v2130 = vadd.f32 %v2008, %v325
    %v2131 = vadd.f32 %v2048, %v326
    %v2132 = vadd.f32 %v2088, %v327
    %v2133 = vadd.f32 %v2128, %v328
    %v2134 = vtanh.pop %v2130
    %v2135 = vtanh.pop %v2131
    %v2136 = vtanh.pop %v2132
    %v2137 = vtanh.pop %v2133
    %v2138 = vmul.f32 %v2134, 0.5
    %v2139 = vadd.f32 %v2138, 0.5
    %v2140 = vmul.f32 %v2135, 0.5
    %v2141 = vadd.f32 %v2140, 0.5
    %v2142 = vmul.f32 %v2137, 0.5
    %v2143 = vadd.f32 %v2142, 0.5
    %v2144 = vmul.f32 %v2141, %v1783
    %v2145 = vmul.f32 %v2139, %v2136
    %v2146 = vadd.f32 %v2144, %v2145
    %v2147 = vtanh.pop %v2146
    %v2148 = vmul.f32 %v2143, %v2147
    %s2149 = scalar_lea.vmem [#allocation3], 160
    %v2150 = vld [vmem:[%s2149] sm:$0xff]
    %v2151 = vld [vmem:[%s2149 + $0x8] sm:$0xff]
    %v2152 = vld [vmem:[%s2149 + $0x10] sm:$0xff]
    %v2153 = vld [vmem:[%s2149 + $0x18] sm:$0xff]
    %v2154 = vadd.f32 %v2150, %v1848
    %v2155 = vadd.f32 %v2151, %v1888
    %v2156 = vadd.f32 %v2152, %v1928
    %v2157 = vadd.f32 %v2153, %v1968
    %v2158 = vtanh.pop %v2154
    %v2159 = vtanh.pop %v2155
    %v2160 = vtanh.pop %v2156
    %v2161 = vtanh.pop %v2157
    %v2162 = vmul.f32 %v2158, 0.5
    %v2163 = vadd.f32 %v2162, 0.5
    %v2164 = vmul.f32 %v2159, 0.5
    %v2165 = vadd.f32 %v2164, 0.5
    %v2166 = vmul.f32 %v2161, 0.5
    %v2167 = vadd.f32 %v2166, 0.5
    %v2168 = vmul.f32 %v2165, %v1807
    %v2169 = vmul.f32 %v2163, %v2160
    %v2170 = vadd.f32 %v2168, %v2169
    %v2171 = vtanh.pop %v2170
    %v2172 = vmul.f32 %v2167, %v2171
    %2173 = vmatpush.msra.mxu0 %v187
    %2174 = vmatpush.msra.mxu0 %v179
    %2175 = vmatpush.msra.mxu0 %v171
    %2176 = vmatpush.msra.mxu0 %v163
    %2177 = vmatpush.msra.mxu0 %v155
    %2178 = vmatpush.msra.mxu0 %v147
    %2179 = vmatpush.msra.mxu0 %v139
    %2180 = vmatpush.msra.mxu0 %v131
    %2181 = vmatpush.msra.mxu0 %v123
    %2182 = vmatpush.msra.mxu0 %v115
    %2183 = vmatpush.msra.mxu0 %v107
    %2184 = vmatpush.msra.mxu0 %v99
    %2185 = vmatpush.msra.mxu0 %v91
    %2186 = vmatpush.msra.mxu0 %v83
    %2187 = vmatpush.msra.mxu0 %v75
    %2188 = vmatpush.msra.mxu0 %v67
    %2189 = vmatmul.f32.gmra.mxu0 %v2172
    %v2190 = vpop.f32.mrf.mxu0
    %v2191 = vadd.f32 0.0, %v2190
    %2192 = vdwg.mxu0
    %2193 = vmatpush.msra.mxu0 %v315
    %2194 = vmatpush.msra.mxu0 %v307
    %2195 = vmatpush.msra.mxu0 %v299
    %2196 = vmatpush.msra.mxu0 %v291
    %2197 = vmatpush.msra.mxu0 %v283
    %2198 = vmatpush.msra.mxu0 %v275
    %2199 = vmatpush.msra.mxu0 %v267
    %2200 = vmatpush.msra.mxu0 %v259
    %2201 = vmatpush.msra.mxu0 %v251
    %2202 = vmatpush.msra.mxu0 %v243
    %2203 = vmatpush.msra.mxu0 %v235
    %2204 = vmatpush.msra.mxu0 %v227
    %2205 = vmatpush.msra.mxu0 %v219
    %2206 = vmatpush.msra.mxu0 %v211
    %2207 = vmatpush.msra.mxu0 %v203
    %2208 = vmatpush.msra.mxu0 %v195
    %2209 = vmatmul.f32.gmra.mxu0 %v2148
    %v2210 = vpop.f32.mrf.mxu0
    %v2211 = vadd.f32 %v2191, %v2210
    %2212 = vdwg.mxu0
    %2213 = vmatpush.msra.mxu0 %v188
    %2214 = vmatpush.msra.mxu0 %v180
    %2215 = vmatpush.msra.mxu0 %v172
    %2216 = vmatpush.msra.mxu0 %v164
    %2217 = vmatpush.msra.mxu0 %v156
    %2218 = vmatpush.msra.mxu0 %v148
    %2219 = vmatpush.msra.mxu0 %v140
    %2220 = vmatpush.msra.mxu0 %v132
    %2221 = vmatpush.msra.mxu0 %v124
    %2222 = vmatpush.msra.mxu0 %v116
    %2223 = vmatpush.msra.mxu0 %v108
    %2224 = vmatpush.msra.mxu0 %v100
    %2225 = vmatpush.msra.mxu0 %v92
    %2226 = vmatpush.msra.mxu0 %v84
    %2227 = vmatpush.msra.mxu0 %v76
    %2228 = vmatpush.msra.mxu0 %v68
    %2229 = vmatmul.f32.gmra.mxu0 %v2172
    %v2230 = vpop.f32.mrf.mxu0
    %v2231 = vadd.f32 0.0, %v2230
    %2232 = vdwg.mxu0
    %2233 = vmatpush.msra.mxu0 %v316
    %2234 = vmatpush.msra.mxu0 %v308
    %2235 = vmatpush.msra.mxu0 %v300
    %2236 = vmatpush.msra.mxu0 %v292
    %2237 = vmatpush.msra.mxu0 %v284
    %2238 = vmatpush.msra.mxu0 %v276
    %2239 = vmatpush.msra.mxu0 %v268
    %2240 = vmatpush.msra.mxu0 %v260
    %2241 = vmatpush.msra.mxu0 %v252
    %2242 = vmatpush.msra.mxu0 %v244
    %2243 = vmatpush.msra.mxu0 %v236
    %2244 = vmatpush.msra.mxu0 %v228
    %2245 = vmatpush.msra.mxu0 %v220
    %2246 = vmatpush.msra.mxu0 %v212
    %2247 = vmatpush.msra.mxu0 %v204
    %2248 = vmatpush.msra.mxu0 %v196
    %2249 = vmatmul.f32.gmra.mxu0 %v2148
    %v2250 = vpop.f32.mrf.mxu0
    %v2251 = vadd.f32 %v2231, %v2250
    %2252 = vdwg.mxu0
    %2253 = vmatpush.msra.mxu0 %v189
    %2254 = vmatpush.msra.mxu0 %v181
    %2255 = vmatpush.msra.mxu0 %v173
    %2256 = vmatpush.msra.mxu0 %v165
    %2257 = vmatpush.msra.mxu0 %v157
    %2258 = vmatpush.msra.mxu0 %v149
    %2259 = vmatpush.msra.mxu0 %v141
    %2260 = vmatpush.msra.mxu0 %v133
    %2261 = vmatpush.msra.mxu0 %v125
    %2262 = vmatpush.msra.mxu0 %v117
    %2263 = vmatpush.msra.mxu0 %v109
    %2264 = vmatpush.msra.mxu0 %v101
    %2265 = vmatpush.msra.mxu0 %v93
    %2266 = vmatpush.msra.mxu0 %v85
    %2267 = vmatpush.msra.mxu0 %v77
    %2268 = vmatpush.msra.mxu0 %v69
    %2269 = vmatmul.f32.gmra.mxu0 %v2172
    %v2270 = vpop.f32.mrf.mxu0
    %v2271 = vadd.f32 0.0, %v2270
    %2272 = vdwg.mxu0
    %2273 = vmatpush.msra.mxu0 %v317
    %2274 = vmatpush.msra.mxu0 %v309
    %2275 = vmatpush.msra.mxu0 %v301
    %2276 = vmatpush.msra.mxu0 %v293
    %2277 = vmatpush.msra.mxu0 %v285
    %2278 = vmatpush.msra.mxu0 %v277
    %2279 = vmatpush.msra.mxu0 %v269
    %2280 = vmatpush.msra.mxu0 %v261
    %2281 = vmatpush.msra.mxu0 %v253
    %2282 = vmatpush.msra.mxu0 %v245
    %2283 = vmatpush.msra.mxu0 %v237
    %2284 = vmatpush.msra.mxu0 %v229
    %2285 = vmatpush.msra.mxu0 %v221
    %2286 = vmatpush.msra.mxu0 %v213
    %2287 = vmatpush.msra.mxu0 %v205
    %2288 = vmatpush.msra.mxu0 %v197
    %2289 = vmatmul.f32.gmra.mxu0 %v2148
    %v2290 = vpop.f32.mrf.mxu0
    %v2291 = vadd.f32 %v2271, %v2290
    %2292 = vdwg.mxu0
    %2293 = vmatpush.msra.mxu0 %v190
    %2294 = vmatpush.msra.mxu0 %v182
    %2295 = vmatpush.msra.mxu0 %v174
    %2296 = vmatpush.msra.mxu0 %v166
    %2297 = vmatpush.msra.mxu0 %v158
    %2298 = vmatpush.msra.mxu0 %v150
    %2299 = vmatpush.msra.mxu0 %v142
    %2300 = vmatpush.msra.mxu0 %v134
    %2301 = vmatpush.msra.mxu0 %v126
    %2302 = vmatpush.msra.mxu0 %v118
    %2303 = vmatpush.msra.mxu0 %v110
    %2304 = vmatpush.msra.mxu0 %v102
    %2305 = vmatpush.msra.mxu0 %v94
    %2306 = vmatpush.msra.mxu0 %v86
    %2307 = vmatpush.msra.mxu0 %v78
    %2308 = vmatpush.msra.mxu0 %v70
    %2309 = vmatmul.f32.gmra.mxu0 %v2172
    %v2310 = vpop.f32.mrf.mxu0
    %v2311 = vadd.f32 0.0, %v2310
    %2312 = vdwg.mxu0
    %2313 = vmatpush.msra.mxu0 %v318
    %2314 = vmatpush.msra.mxu0 %v310
    %2315 = vmatpush.msra.mxu0 %v302
    %2316 = vmatpush.msra.mxu0 %v294
    %2317 = vmatpush.msra.mxu0 %v286
    %2318 = vmatpush.msra.mxu0 %v278
    %2319 = vmatpush.msra.mxu0 %v270
    %2320 = vmatpush.msra.mxu0 %v262
    %2321 = vmatpush.msra.mxu0 %v254
    %2322 = vmatpush.msra.mxu0 %v246
    %2323 = vmatpush.msra.mxu0 %v238
    %2324 = vmatpush.msra.mxu0 %v230
    %2325 = vmatpush.msra.mxu0 %v222
    %2326 = vmatpush.msra.mxu0 %v214
    %2327 = vmatpush.msra.mxu0 %v206
    %2328 = vmatpush.msra.mxu0 %v198
    %2329 = vmatmul.f32.gmra.mxu0 %v2148
    %v2330 = vpop.f32.mrf.mxu0
    %v2331 = vadd.f32 %v2311, %v2330
    %2332 = vdwg.mxu0
    %2333 = vmatpush.msra.mxu0 %v191
    %2334 = vmatpush.msra.mxu0 %v183
    %2335 = vmatpush.msra.mxu0 %v175
    %2336 = vmatpush.msra.mxu0 %v167
    %2337 = vmatpush.msra.mxu0 %v159
    %2338 = vmatpush.msra.mxu0 %v151
    %2339 = vmatpush.msra.mxu0 %v143
    %2340 = vmatpush.msra.mxu0 %v135
    %2341 = vmatpush.msra.mxu0 %v127
    %2342 = vmatpush.msra.mxu0 %v119
    %2343 = vmatpush.msra.mxu0 %v111
    %2344 = vmatpush.msra.mxu0 %v103
    %2345 = vmatpush.msra.mxu0 %v95
    %2346 = vmatpush.msra.mxu0 %v87
    %2347 = vmatpush.msra.mxu0 %v79
    %2348 = vmatpush.msra.mxu0 %v71
    %2349 = vmatmul.f32.gmra.mxu0 %v2172
    %v2350 = vpop.f32.mrf.mxu0
    %v2351 = vadd.f32 0.0, %v2350
    %2352 = vdwg.mxu0
    %2353 = vmatpush.msra.mxu0 %v319
    %2354 = vmatpush.msra.mxu0 %v311
    %2355 = vmatpush.msra.mxu0 %v303
    %2356 = vmatpush.msra.mxu0 %v295
    %2357 = vmatpush.msra.mxu0 %v287
    %2358 = vmatpush.msra.mxu0 %v279
    %2359 = vmatpush.msra.mxu0 %v271
    %2360 = vmatpush.msra.mxu0 %v263
    %2361 = vmatpush.msra.mxu0 %v255
    %2362 = vmatpush.msra.mxu0 %v247
    %2363 = vmatpush.msra.mxu0 %v239
    %2364 = vmatpush.msra.mxu0 %v231
    %2365 = vmatpush.msra.mxu0 %v223
    %2366 = vmatpush.msra.mxu0 %v215
    %2367 = vmatpush.msra.mxu0 %v207
    %2368 = vmatpush.msra.mxu0 %v199
    %2369 = vmatmul.f32.gmra.mxu0 %v2148
    %v2370 = vpop.f32.mrf.mxu0
    %v2371 = vadd.f32 %v2351, %v2370
    %2372 = vdwg.mxu0
    %2373 = vmatpush.msra.mxu0 %v192
    %2374 = vmatpush.msra.mxu0 %v184
    %2375 = vmatpush.msra.mxu0 %v176
    %2376 = vmatpush.msra.mxu0 %v168
    %2377 = vmatpush.msra.mxu0 %v160
    %2378 = vmatpush.msra.mxu0 %v152
    %2379 = vmatpush.msra.mxu0 %v144
    %2380 = vmatpush.msra.mxu0 %v136
    %2381 = vmatpush.msra.mxu0 %v128
    %2382 = vmatpush.msra.mxu0 %v120
    %2383 = vmatpush.msra.mxu0 %v112
    %2384 = vmatpush.msra.mxu0 %v104
    %2385 = vmatpush.msra.mxu0 %v96
    %2386 = vmatpush.msra.mxu0 %v88
    %2387 = vmatpush.msra.mxu0 %v80
    %2388 = vmatpush.msra.mxu0 %v72
    %2389 = vmatmul.f32.gmra.mxu0 %v2172
    %v2390 = vpop.f32.mrf.mxu0
    %v2391 = vadd.f32 0.0, %v2390
    %2392 = vdwg.mxu0
    %2393 = vmatpush.msra.mxu0 %v320
    %2394 = vmatpush.msra.mxu0 %v312
    %2395 = vmatpush.msra.mxu0 %v304
    %2396 = vmatpush.msra.mxu0 %v296
    %2397 = vmatpush.msra.mxu0 %v288
    %2398 = vmatpush.msra.mxu0 %v280
    %2399 = vmatpush.msra.mxu0 %v272
    %2400 = vmatpush.msra.mxu0 %v264
    %2401 = vmatpush.msra.mxu0 %v256
    %2402 = vmatpush.msra.mxu0 %v248
    %2403 = vmatpush.msra.mxu0 %v240
    %2404 = vmatpush.msra.mxu0 %v232
    %2405 = vmatpush.msra.mxu0 %v224
    %2406 = vmatpush.msra.mxu0 %v216
    %2407 = vmatpush.msra.mxu0 %v208
    %2408 = vmatpush.msra.mxu0 %v200
    %2409 = vmatmul.f32.gmra.mxu0 %v2148
    %v2410 = vpop.f32.mrf.mxu0
    %v2411 = vadd.f32 %v2391, %v2410
    %2412 = vdwg.mxu0
    %2413 = vmatpush.msra.mxu0 %v193
    %2414 = vmatpush.msra.mxu0 %v185
    %2415 = vmatpush.msra.mxu0 %v177
    %2416 = vmatpush.msra.mxu0 %v169
    %2417 = vmatpush.msra.mxu0 %v161
    %2418 = vmatpush.msra.mxu0 %v153
    %2419 = vmatpush.msra.mxu0 %v145
    %2420 = vmatpush.msra.mxu0 %v137
    %2421 = vmatpush.msra.mxu0 %v129
    %2422 = vmatpush.msra.mxu0 %v121
    %2423 = vmatpush.msra.mxu0 %v113
    %2424 = vmatpush.msra.mxu0 %v105
    %2425 = vmatpush.msra.mxu0 %v97
    %2426 = vmatpush.msra.mxu0 %v89
    %2427 = vmatpush.msra.mxu0 %v81
    %2428 = vmatpush.msra.mxu0 %v73
    %2429 = vmatmul.f32.gmra.mxu0 %v2172
    %v2430 = vpop.f32.mrf.mxu0
    %v2431 = vadd.f32 0.0, %v2430
    %2432 = vdwg.mxu0
    %2433 = vmatpush.msra.mxu0 %v321
    %2434 = vmatpush.msra.mxu0 %v313
    %2435 = vmatpush.msra.mxu0 %v305
    %2436 = vmatpush.msra.mxu0 %v297
    %2437 = vmatpush.msra.mxu0 %v289
    %2438 = vmatpush.msra.mxu0 %v281
    %2439 = vmatpush.msra.mxu0 %v273
    %2440 = vmatpush.msra.mxu0 %v265
    %2441 = vmatpush.msra.mxu0 %v257
    %2442 = vmatpush.msra.mxu0 %v249
    %2443 = vmatpush.msra.mxu0 %v241
    %2444 = vmatpush.msra.mxu0 %v233
    %2445 = vmatpush.msra.mxu0 %v225
    %2446 = vmatpush.msra.mxu0 %v217
    %2447 = vmatpush.msra.mxu0 %v209
    %2448 = vmatpush.msra.mxu0 %v201
    %2449 = vmatmul.f32.gmra.mxu0 %v2148
    %v2450 = vpop.f32.mrf.mxu0
    %v2451 = vadd.f32 %v2431, %v2450
    %2452 = vdwg.mxu0
    %2453 = vmatpush.msra.mxu0 %v194
    %2454 = vmatpush.msra.mxu0 %v186
    %2455 = vmatpush.msra.mxu0 %v178
    %2456 = vmatpush.msra.mxu0 %v170
    %2457 = vmatpush.msra.mxu0 %v162
    %2458 = vmatpush.msra.mxu0 %v154
    %2459 = vmatpush.msra.mxu0 %v146
    %2460 = vmatpush.msra.mxu0 %v138
    %2461 = vmatpush.msra.mxu0 %v130
    %2462 = vmatpush.msra.mxu0 %v122
    %2463 = vmatpush.msra.mxu0 %v114
    %2464 = vmatpush.msra.mxu0 %v106
    %2465 = vmatpush.msra.mxu0 %v98
    %2466 = vmatpush.msra.mxu0 %v90
    %2467 = vmatpush.msra.mxu0 %v82
    %2468 = vmatpush.msra.mxu0 %v74
    %2469 = vmatmul.f32.gmra.mxu0 %v2172
    %v2470 = vpop.f32.mrf.mxu0
    %v2471 = vadd.f32 0.0, %v2470
    %2472 = vdwg.mxu0
    %2473 = vmatpush.msra.mxu0 %v322
    %2474 = vmatpush.msra.mxu0 %v314
    %2475 = vmatpush.msra.mxu0 %v306
    %2476 = vmatpush.msra.mxu0 %v298
    %2477 = vmatpush.msra.mxu0 %v290
    %2478 = vmatpush.msra.mxu0 %v282
    %2479 = vmatpush.msra.mxu0 %v274
    %2480 = vmatpush.msra.mxu0 %v266
    %2481 = vmatpush.msra.mxu0 %v258
    %2482 = vmatpush.msra.mxu0 %v250
    %2483 = vmatpush.msra.mxu0 %v242
    %2484 = vmatpush.msra.mxu0 %v234
    %2485 = vmatpush.msra.mxu0 %v226
    %2486 = vmatpush.msra.mxu0 %v218
    %2487 = vmatpush.msra.mxu0 %v210
    %2488 = vmatpush.msra.mxu0 %v202
    %2489 = vmatmul.f32.gmra.mxu0 %v2148
    %v2490 = vpop.f32.mrf.mxu0
    %v2491 = vadd.f32 %v2471, %v2490
    %2492 = vdwg.mxu0
    %v2493 = vadd.f32 %v2371, %v325
    %v2494 = vadd.f32 %v2411, %v326
    %v2495 = vadd.f32 %v2451, %v327
    %v2496 = vadd.f32 %v2491, %v328
    %v2497 = vtanh.pop %v2493
    %v2498 = vtanh.pop %v2494
    %v2499 = vtanh.pop %v2495
    %v2500 = vtanh.pop %v2496
    %v2501 = vmul.f32 %v2497, 0.5
    %v2502 = vadd.f32 %v2501, 0.5
    %v2503 = vmul.f32 %v2498, 0.5
    %v2504 = vadd.f32 %v2503, 0.5
    %v2505 = vmul.f32 %v2500, 0.5
    %v2506 = vadd.f32 %v2505, 0.5
    %v2507 = vmul.f32 %v2504, %v2146
    %v2508 = vmul.f32 %v2502, %v2499
    %v2509 = vadd.f32 %v2507, %v2508
    %v2510 = vtanh.pop %v2509
    %v2511 = vmul.f32 %v2506, %v2510
    %s2512 = scalar_lea.vmem [#allocation3], 192
    %v2513 = vld [vmem:[%s2512] sm:$0xff]
    %v2514 = vld [vmem:[%s2512 + $0x8] sm:$0xff]
    %v2515 = vld [vmem:[%s2512 + $0x10] sm:$0xff]
    %v2516 = vld [vmem:[%s2512 + $0x18] sm:$0xff]
    %v2517 = vadd.f32 %v2513, %v2211
    %v2518 = vadd.f32 %v2514, %v2251
    %v2519 = vadd.f32 %v2515, %v2291
    %v2520 = vadd.f32 %v2516, %v2331
    %v2521 = vtanh.pop %v2517
    %v2522 = vtanh.pop %v2518
    %v2523 = vtanh.pop %v2519
    %v2524 = vtanh.pop %v2520
    %v2525 = vmul.f32 %v2521, 0.5
    %v2526 = vadd.f32 %v2525, 0.5
    %v2527 = vmul.f32 %v2522, 0.5
    %v2528 = vadd.f32 %v2527, 0.5
    %v2529 = vmul.f32 %v2524, 0.5
    %v2530 = vadd.f32 %v2529, 0.5
    %v2531 = vmul.f32 %v2528, %v2170
    %v2532 = vmul.f32 %v2526, %v2523
    %v2533 = vadd.f32 %v2531, %v2532
    %v2534 = vtanh.pop %v2533
    %v2535 = vmul.f32 %v2530, %v2534
    %2536 = vmatpush.msra.mxu0 %v187
    %2537 = vmatpush.msra.mxu0 %v179
    %2538 = vmatpush.msra.mxu0 %v171
    %2539 = vmatpush.msra.mxu0 %v163
    %2540 = vmatpush.msra.mxu0 %v155
    %2541 = vmatpush.msra.mxu0 %v147
    %2542 = vmatpush.msra.mxu0 %v139
    %2543 = vmatpush.msra.mxu0 %v131
    %2544 = vmatpush.msra.mxu0 %v123
    %2545 = vmatpush.msra.mxu0 %v115
    %2546 = vmatpush.msra.mxu0 %v107
    %2547 = vmatpush.msra.mxu0 %v99
    %2548 = vmatpush.msra.mxu0 %v91
    %2549 = vmatpush.msra.mxu0 %v83
    %2550 = vmatpush.msra.mxu0 %v75
    %2551 = vmatpush.msra.mxu0 %v67
    %2552 = vmatmul.f32.gmra.mxu0 %v2535
    %v2553 = vpop.f32.mrf.mxu0
    %v2554 = vadd.f32 0.0, %v2553
    %2555 = vdwg.mxu0
    %2556 = vmatpush.msra.mxu0 %v315
    %2557 = vmatpush.msra.mxu0 %v307
    %2558 = vmatpush.msra.mxu0 %v299
    %2559 = vmatpush.msra.mxu0 %v291
    %2560 = vmatpush.msra.mxu0 %v283
    %2561 = vmatpush.msra.mxu0 %v275
    %2562 = vmatpush.msra.mxu0 %v267
    %2563 = vmatpush.msra.mxu0 %v259
    %2564 = vmatpush.msra.mxu0 %v251
    %2565 = vmatpush.msra.mxu0 %v243
    %2566 = vmatpush.msra.mxu0 %v235
    %2567 = vmatpush.msra.mxu0 %v227
    %2568 = vmatpush.msra.mxu0 %v219
    %2569 = vmatpush.msra.mxu0 %v211
    %2570 = vmatpush.msra.mxu0 %v203
    %2571 = vmatpush.msra.mxu0 %v195
    %2572 = vmatmul.f32.gmra.mxu0 %v2511
    %v2573 = vpop.f32.mrf.mxu0
    %v2574 = vadd.f32 %v2554, %v2573
    %2575 = vdwg.mxu0
    %2576 = vmatpush.msra.mxu0 %v188
    %2577 = vmatpush.msra.mxu0 %v180
    %2578 = vmatpush.msra.mxu0 %v172
    %2579 = vmatpush.msra.mxu0 %v164
    %2580 = vmatpush.msra.mxu0 %v156
    %2581 = vmatpush.msra.mxu0 %v148
    %2582 = vmatpush.msra.mxu0 %v140
    %2583 = vmatpush.msra.mxu0 %v132
    %2584 = vmatpush.msra.mxu0 %v124
    %2585 = vmatpush.msra.mxu0 %v116
    %2586 = vmatpush.msra.mxu0 %v108
    %2587 = vmatpush.msra.mxu0 %v100
    %2588 = vmatpush.msra.mxu0 %v92
    %2589 = vmatpush.msra.mxu0 %v84
    %2590 = vmatpush.msra.mxu0 %v76
    %2591 = vmatpush.msra.mxu0 %v68
    %2592 = vmatmul.f32.gmra.mxu0 %v2535
    %v2593 = vpop.f32.mrf.mxu0
    %v2594 = vadd.f32 0.0, %v2593
    %2595 = vdwg.mxu0
    %2596 = vmatpush.msra.mxu0 %v316
    %2597 = vmatpush.msra.mxu0 %v308
    %2598 = vmatpush.msra.mxu0 %v300
    %2599 = vmatpush.msra.mxu0 %v292
    %2600 = vmatpush.msra.mxu0 %v284
    %2601 = vmatpush.msra.mxu0 %v276
    %2602 = vmatpush.msra.mxu0 %v268
    %2603 = vmatpush.msra.mxu0 %v260
    %2604 = vmatpush.msra.mxu0 %v252
    %2605 = vmatpush.msra.mxu0 %v244
    %2606 = vmatpush.msra.mxu0 %v236
    %2607 = vmatpush.msra.mxu0 %v228
    %2608 = vmatpush.msra.mxu0 %v220
    %2609 = vmatpush.msra.mxu0 %v212
    %2610 = vmatpush.msra.mxu0 %v204
    %2611 = vmatpush.msra.mxu0 %v196
    %2612 = vmatmul.f32.gmra.mxu0 %v2511
    %v2613 = vpop.f32.mrf.mxu0
    %v2614 = vadd.f32 %v2594, %v2613
    %2615 = vdwg.mxu0
    %2616 = vmatpush.msra.mxu0 %v189
    %2617 = vmatpush.msra.mxu0 %v181
    %2618 = vmatpush.msra.mxu0 %v173
    %2619 = vmatpush.msra.mxu0 %v165
    %2620 = vmatpush.msra.mxu0 %v157
    %2621 = vmatpush.msra.mxu0 %v149
    %2622 = vmatpush.msra.mxu0 %v141
    %2623 = vmatpush.msra.mxu0 %v133
    %2624 = vmatpush.msra.mxu0 %v125
    %2625 = vmatpush.msra.mxu0 %v117
    %2626 = vmatpush.msra.mxu0 %v109
    %2627 = vmatpush.msra.mxu0 %v101
    %2628 = vmatpush.msra.mxu0 %v93
    %2629 = vmatpush.msra.mxu0 %v85
    %2630 = vmatpush.msra.mxu0 %v77
    %2631 = vmatpush.msra.mxu0 %v69
    %2632 = vmatmul.f32.gmra.mxu0 %v2535
    %v2633 = vpop.f32.mrf.mxu0
    %v2634 = vadd.f32 0.0, %v2633
    %2635 = vdwg.mxu0
    %2636 = vmatpush.msra.mxu0 %v317
    %2637 = vmatpush.msra.mxu0 %v309
    %2638 = vmatpush.msra.mxu0 %v301
    %2639 = vmatpush.msra.mxu0 %v293
    %2640 = vmatpush.msra.mxu0 %v285
    %2641 = vmatpush.msra.mxu0 %v277
    %2642 = vmatpush.msra.mxu0 %v269
    %2643 = vmatpush.msra.mxu0 %v261
    %2644 = vmatpush.msra.mxu0 %v253
    %2645 = vmatpush.msra.mxu0 %v245
    %2646 = vmatpush.msra.mxu0 %v237
    %2647 = vmatpush.msra.mxu0 %v229
    %2648 = vmatpush.msra.mxu0 %v221
    %2649 = vmatpush.msra.mxu0 %v213
    %2650 = vmatpush.msra.mxu0 %v205
    %2651 = vmatpush.msra.mxu0 %v197
    %2652 = vmatmul.f32.gmra.mxu0 %v2511
    %v2653 = vpop.f32.mrf.mxu0
    %v2654 = vadd.f32 %v2634, %v2653
    %2655 = vdwg.mxu0
    %2656 = vmatpush.msra.mxu0 %v190
    %2657 = vmatpush.msra.mxu0 %v182
    %2658 = vmatpush.msra.mxu0 %v174
    %2659 = vmatpush.msra.mxu0 %v166
    %2660 = vmatpush.msra.mxu0 %v158
    %2661 = vmatpush.msra.mxu0 %v150
    %2662 = vmatpush.msra.mxu0 %v142
    %2663 = vmatpush.msra.mxu0 %v134
    %2664 = vmatpush.msra.mxu0 %v126
    %2665 = vmatpush.msra.mxu0 %v118
    %2666 = vmatpush.msra.mxu0 %v110
    %2667 = vmatpush.msra.mxu0 %v102
    %2668 = vmatpush.msra.mxu0 %v94
    %2669 = vmatpush.msra.mxu0 %v86
    %2670 = vmatpush.msra.mxu0 %v78
    %2671 = vmatpush.msra.mxu0 %v70
    %2672 = vmatmul.f32.gmra.mxu0 %v2535
    %v2673 = vpop.f32.mrf.mxu0
    %v2674 = vadd.f32 0.0, %v2673
    %2675 = vdwg.mxu0
    %2676 = vmatpush.msra.mxu0 %v318
    %2677 = vmatpush.msra.mxu0 %v310
    %2678 = vmatpush.msra.mxu0 %v302
    %2679 = vmatpush.msra.mxu0 %v294
    %2680 = vmatpush.msra.mxu0 %v286
    %2681 = vmatpush.msra.mxu0 %v278
    %2682 = vmatpush.msra.mxu0 %v270
    %2683 = vmatpush.msra.mxu0 %v262
    %2684 = vmatpush.msra.mxu0 %v254
    %2685 = vmatpush.msra.mxu0 %v246
    %2686 = vmatpush.msra.mxu0 %v238
    %2687 = vmatpush.msra.mxu0 %v230
    %2688 = vmatpush.msra.mxu0 %v222
    %2689 = vmatpush.msra.mxu0 %v214
    %2690 = vmatpush.msra.mxu0 %v206
    %2691 = vmatpush.msra.mxu0 %v198
    %2692 = vmatmul.f32.gmra.mxu0 %v2511
    %v2693 = vpop.f32.mrf.mxu0
    %v2694 = vadd.f32 %v2674, %v2693
    %2695 = vdwg.mxu0
    %2696 = vmatpush.msra.mxu0 %v191
    %2697 = vmatpush.msra.mxu0 %v183
    %2698 = vmatpush.msra.mxu0 %v175
    %2699 = vmatpush.msra.mxu0 %v167
    %2700 = vmatpush.msra.mxu0 %v159
    %2701 = vmatpush.msra.mxu0 %v151
    %2702 = vmatpush.msra.mxu0 %v143
    %2703 = vmatpush.msra.mxu0 %v135
    %2704 = vmatpush.msra.mxu0 %v127
    %2705 = vmatpush.msra.mxu0 %v119
    %2706 = vmatpush.msra.mxu0 %v111
    %2707 = vmatpush.msra.mxu0 %v103
    %2708 = vmatpush.msra.mxu0 %v95
    %2709 = vmatpush.msra.mxu0 %v87
    %2710 = vmatpush.msra.mxu0 %v79
    %2711 = vmatpush.msra.mxu0 %v71
    %2712 = vmatmul.f32.gmra.mxu0 %v2535
    %v2713 = vpop.f32.mrf.mxu0
    %v2714 = vadd.f32 0.0, %v2713
    %2715 = vdwg.mxu0
    %2716 = vmatpush.msra.mxu0 %v319
    %2717 = vmatpush.msra.mxu0 %v311
    %2718 = vmatpush.msra.mxu0 %v303
    %2719 = vmatpush.msra.mxu0 %v295
    %2720 = vmatpush.msra.mxu0 %v287
    %2721 = vmatpush.msra.mxu0 %v279
    %2722 = vmatpush.msra.mxu0 %v271
    %2723 = vmatpush.msra.mxu0 %v263
    %2724 = vmatpush.msra.mxu0 %v255
    %2725 = vmatpush.msra.mxu0 %v247
    %2726 = vmatpush.msra.mxu0 %v239
    %2727 = vmatpush.msra.mxu0 %v231
    %2728 = vmatpush.msra.mxu0 %v223
    %2729 = vmatpush.msra.mxu0 %v215
    %2730 = vmatpush.msra.mxu0 %v207
    %2731 = vmatpush.msra.mxu0 %v199
    %2732 = vmatmul.f32.gmra.mxu0 %v2511
    %v2733 = vpop.f32.mrf.mxu0
    %v2734 = vadd.f32 %v2714, %v2733
    %2735 = vdwg.mxu0
    %2736 = vmatpush.msra.mxu0 %v192
    %2737 = vmatpush.msra.mxu0 %v184
    %2738 = vmatpush.msra.mxu0 %v176
    %2739 = vmatpush.msra.mxu0 %v168
    %2740 = vmatpush.msra.mxu0 %v160
    %2741 = vmatpush.msra.mxu0 %v152
    %2742 = vmatpush.msra.mxu0 %v144
    %2743 = vmatpush.msra.mxu0 %v136
    %2744 = vmatpush.msra.mxu0 %v128
    %2745 = vmatpush.msra.mxu0 %v120
    %2746 = vmatpush.msra.mxu0 %v112
    %2747 = vmatpush.msra.mxu0 %v104
    %2748 = vmatpush.msra.mxu0 %v96
    %2749 = vmatpush.msra.mxu0 %v88
    %2750 = vmatpush.msra.mxu0 %v80
    %2751 = vmatpush.msra.mxu0 %v72
    %2752 = vmatmul.f32.gmra.mxu0 %v2535
    %v2753 = vpop.f32.mrf.mxu0
    %v2754 = vadd.f32 0.0, %v2753
    %2755 = vdwg.mxu0
    %2756 = vmatpush.msra.mxu0 %v320
    %2757 = vmatpush.msra.mxu0 %v312
    %2758 = vmatpush.msra.mxu0 %v304
    %2759 = vmatpush.msra.mxu0 %v296
    %2760 = vmatpush.msra.mxu0 %v288
    %2761 = vmatpush.msra.mxu0 %v280
    %2762 = vmatpush.msra.mxu0 %v272
    %2763 = vmatpush.msra.mxu0 %v264
    %2764 = vmatpush.msra.mxu0 %v256
    %2765 = vmatpush.msra.mxu0 %v248
    %2766 = vmatpush.msra.mxu0 %v240
    %2767 = vmatpush.msra.mxu0 %v232
    %2768 = vmatpush.msra.mxu0 %v224
    %2769 = vmatpush.msra.mxu0 %v216
    %2770 = vmatpush.msra.mxu0 %v208
    %2771 = vmatpush.msra.mxu0 %v200
    %2772 = vmatmul.f32.gmra.mxu0 %v2511
    %v2773 = vpop.f32.mrf.mxu0
    %v2774 = vadd.f32 %v2754, %v2773
    %2775 = vdwg.mxu0
    %2776 = vmatpush.msra.mxu0 %v193
    %2777 = vmatpush.msra.mxu0 %v185
    %2778 = vmatpush.msra.mxu0 %v177
    %2779 = vmatpush.msra.mxu0 %v169
    %2780 = vmatpush.msra.mxu0 %v161
    %2781 = vmatpush.msra.mxu0 %v153
    %2782 = vmatpush.msra.mxu0 %v145
    %2783 = vmatpush.msra.mxu0 %v137
    %2784 = vmatpush.msra.mxu0 %v129
    %2785 = vmatpush.msra.mxu0 %v121
    %2786 = vmatpush.msra.mxu0 %v113
    %2787 = vmatpush.msra.mxu0 %v105
    %2788 = vmatpush.msra.mxu0 %v97
    %2789 = vmatpush.msra.mxu0 %v89
    %2790 = vmatpush.msra.mxu0 %v81
    %2791 = vmatpush.msra.mxu0 %v73
    %2792 = vmatmul.f32.gmra.mxu0 %v2535
    %v2793 = vpop.f32.mrf.mxu0
    %v2794 = vadd.f32 0.0, %v2793
    %2795 = vdwg.mxu0
    %2796 = vmatpush.msra.mxu0 %v321
    %2797 = vmatpush.msra.mxu0 %v313
    %2798 = vmatpush.msra.mxu0 %v305
    %2799 = vmatpush.msra.mxu0 %v297
    %2800 = vmatpush.msra.mxu0 %v289
    %2801 = vmatpush.msra.mxu0 %v281
    %2802 = vmatpush.msra.mxu0 %v273
    %2803 = vmatpush.msra.mxu0 %v265
    %2804 = vmatpush.msra.mxu0 %v257
    %2805 = vmatpush.msra.mxu0 %v249
    %2806 = vmatpush.msra.mxu0 %v241
    %2807 = vmatpush.msra.mxu0 %v233
    %2808 = vmatpush.msra.mxu0 %v225
    %2809 = vmatpush.msra.mxu0 %v217
    %2810 = vmatpush.msra.mxu0 %v209
    %2811 = vmatpush.msra.mxu0 %v201
    %2812 = vmatmul.f32.gmra.mxu0 %v2511
    %v2813 = vpop.f32.mrf.mxu0
    %v2814 = vadd.f32 %v2794, %v2813
    %2815 = vdwg.mxu0
    %2816 = vmatpush.msra.mxu0 %v194
    %2817 = vmatpush.msra.mxu0 %v186
    %2818 = vmatpush.msra.mxu0 %v178
    %2819 = vmatpush.msra.mxu0 %v170
    %2820 = vmatpush.msra.mxu0 %v162
    %2821 = vmatpush.msra.mxu0 %v154
    %2822 = vmatpush.msra.mxu0 %v146
    %2823 = vmatpush.msra.mxu0 %v138
    %2824 = vmatpush.msra.mxu0 %v130
    %2825 = vmatpush.msra.mxu0 %v122
    %2826 = vmatpush.msra.mxu0 %v114
    %2827 = vmatpush.msra.mxu0 %v106
    %2828 = vmatpush.msra.mxu0 %v98
    %2829 = vmatpush.msra.mxu0 %v90
    %2830 = vmatpush.msra.mxu0 %v82
    %2831 = vmatpush.msra.mxu0 %v74
    %2832 = vmatmul.f32.gmra.mxu0 %v2535
    %v2833 = vpop.f32.mrf.mxu0
    %v2834 = vadd.f32 0.0, %v2833
    %2835 = vdwg.mxu0
    %2836 = vmatpush.msra.mxu0 %v322
    %2837 = vmatpush.msra.mxu0 %v314
    %2838 = vmatpush.msra.mxu0 %v306
    %2839 = vmatpush.msra.mxu0 %v298
    %2840 = vmatpush.msra.mxu0 %v290
    %2841 = vmatpush.msra.mxu0 %v282
    %2842 = vmatpush.msra.mxu0 %v274
    %2843 = vmatpush.msra.mxu0 %v266
    %2844 = vmatpush.msra.mxu0 %v258
    %2845 = vmatpush.msra.mxu0 %v250
    %2846 = vmatpush.msra.mxu0 %v242
    %2847 = vmatpush.msra.mxu0 %v234
    %2848 = vmatpush.msra.mxu0 %v226
    %2849 = vmatpush.msra.mxu0 %v218
    %2850 = vmatpush.msra.mxu0 %v210
    %2851 = vmatpush.msra.mxu0 %v202
    %2852 = vmatmul.f32.gmra.mxu0 %v2511
    %v2853 = vpop.f32.mrf.mxu0
    %v2854 = vadd.f32 %v2834, %v2853
    %2855 = vdwg.mxu0
    %v2856 = vadd.f32 %v2734, %v325
    %v2857 = vadd.f32 %v2774, %v326
    %v2858 = vadd.f32 %v2814, %v327
    %v2859 = vadd.f32 %v2854, %v328
    %v2860 = vtanh.pop %v2856
    %v2861 = vtanh.pop %v2857
    %v2862 = vtanh.pop %v2858
    %v2863 = vtanh.pop %v2859
    %v2864 = vmul.f32 %v2860, 0.5
    %v2865 = vadd.f32 %v2864, 0.5
    %v2866 = vmul.f32 %v2861, 0.5
    %v2867 = vadd.f32 %v2866, 0.5
    %v2868 = vmul.f32 %v2863, 0.5
    %v2869 = vadd.f32 %v2868, 0.5
    %v2870 = vmul.f32 %v2867, %v2509
    %v2871 = vmul.f32 %v2865, %v2862
    %v2872 = vadd.f32 %v2870, %v2871
    %v2873 = vtanh.pop %v2872
    %v2874 = vmul.f32 %v2869, %v2873
    %s2875 = scalar_lea.vmem [#allocation3], 224
    %v2876 = vld [vmem:[%s2875] sm:$0xff]
    %v2877 = vld [vmem:[%s2875 + $0x8] sm:$0xff]
    %v2878 = vld [vmem:[%s2875 + $0x10] sm:$0xff]
    %v2879 = vld [vmem:[%s2875 + $0x18] sm:$0xff]
    %v2880 = vadd.f32 %v2876, %v2574
    %v2881 = vadd.f32 %v2877, %v2614
    %v2882 = vadd.f32 %v2878, %v2654
    %v2883 = vadd.f32 %v2879, %v2694
    %v2884 = vtanh.pop %v2880
    %v2885 = vtanh.pop %v2881
    %v2886 = vtanh.pop %v2882
    %v2887 = vtanh.pop %v2883
    %v2888 = vmul.f32 %v2884, 0.5
    %v2889 = vadd.f32 %v2888, 0.5
    %v2890 = vmul.f32 %v2885, 0.5
    %v2891 = vadd.f32 %v2890, 0.5
    %v2892 = vmul.f32 %v2887, 0.5
    %v2893 = vadd.f32 %v2892, 0.5
    %v2894 = vmul.f32 %v2891, %v2533
    %v2895 = vmul.f32 %v2889, %v2886
    %v2896 = vadd.f32 %v2894, %v2895
    %v2897 = vtanh.pop %v2896
    %v2898 = vmul.f32 %v2893, %v2897
    %2899 = vmatpush.msra.mxu0 %v191
    %2900 = vmatpush.msra.mxu0 %v183
    %2901 = vmatpush.msra.mxu0 %v175
    %2902 = vmatpush.msra.mxu0 %v167
    %2903 = vmatpush.msra.mxu0 %v159
    %2904 = vmatpush.msra.mxu0 %v151
    %2905 = vmatpush.msra.mxu0 %v143
    %2906 = vmatpush.msra.mxu0 %v135
    %2907 = vmatpush.msra.mxu0 %v127
    %2908 = vmatpush.msra.mxu0 %v119
    %2909 = vmatpush.msra.mxu0 %v111
    %2910 = vmatpush.msra.mxu0 %v103
    %2911 = vmatpush.msra.mxu0 %v95
    %2912 = vmatpush.msra.mxu0 %v87
    %2913 = vmatpush.msra.mxu0 %v79
    %2914 = vmatpush.msra.mxu0 %v71
    %2915 = vmatmul.f32.gmra.mxu0 %v2898
    %v2916 = vpop.f32.mrf.mxu0
    %v2917 = vadd.f32 0.0, %v2916
    %2918 = vdwg.mxu0
    %2919 = vmatpush.msra.mxu0 %v319
    %2920 = vmatpush.msra.mxu0 %v311
    %2921 = vmatpush.msra.mxu0 %v303
    %2922 = vmatpush.msra.mxu0 %v295
    %2923 = vmatpush.msra.mxu0 %v287
    %2924 = vmatpush.msra.mxu0 %v279
    %2925 = vmatpush.msra.mxu0 %v271
    %2926 = vmatpush.msra.mxu0 %v263
    %2927 = vmatpush.msra.mxu0 %v255
    %2928 = vmatpush.msra.mxu0 %v247
    %2929 = vmatpush.msra.mxu0 %v239
    %2930 = vmatpush.msra.mxu0 %v231
    %2931 = vmatpush.msra.mxu0 %v223
    %2932 = vmatpush.msra.mxu0 %v215
    %2933 = vmatpush.msra.mxu0 %v207
    %2934 = vmatpush.msra.mxu0 %v199
    %2935 = vmatmul.f32.gmra.mxu0 %v2874
    %v2936 = vpop.f32.mrf.mxu0
    %v2937 = vadd.f32 %v2917, %v2936
    %2938 = vdwg.mxu0
    %2939 = vmatpush.msra.mxu0 %v192
    %2940 = vmatpush.msra.mxu0 %v184
    %2941 = vmatpush.msra.mxu0 %v176
    %2942 = vmatpush.msra.mxu0 %v168
    %2943 = vmatpush.msra.mxu0 %v160
    %2944 = vmatpush.msra.mxu0 %v152
    %2945 = vmatpush.msra.mxu0 %v144
    %2946 = vmatpush.msra.mxu0 %v136
    %2947 = vmatpush.msra.mxu0 %v128
    %2948 = vmatpush.msra.mxu0 %v120
    %2949 = vmatpush.msra.mxu0 %v112
    %2950 = vmatpush.msra.mxu0 %v104
    %2951 = vmatpush.msra.mxu0 %v96
    %2952 = vmatpush.msra.mxu0 %v88
    %2953 = vmatpush.msra.mxu0 %v80
    %2954 = vmatpush.msra.mxu0 %v72
    %2955 = vmatmul.f32.gmra.mxu0 %v2898
    %v2956 = vpop.f32.mrf.mxu0
    %v2957 = vadd.f32 0.0, %v2956
    %2958 = vdwg.mxu0
    %2959 = vmatpush.msra.mxu0 %v320
    %2960 = vmatpush.msra.mxu0 %v312
    %2961 = vmatpush.msra.mxu0 %v304
    %2962 = vmatpush.msra.mxu0 %v296
    %2963 = vmatpush.msra.mxu0 %v288
    %2964 = vmatpush.msra.mxu0 %v280
    %2965 = vmatpush.msra.mxu0 %v272
    %2966 = vmatpush.msra.mxu0 %v264
    %2967 = vmatpush.msra.mxu0 %v256
    %2968 = vmatpush.msra.mxu0 %v248
    %2969 = vmatpush.msra.mxu0 %v240
    %2970 = vmatpush.msra.mxu0 %v232
    %2971 = vmatpush.msra.mxu0 %v224
    %2972 = vmatpush.msra.mxu0 %v216
    %2973 = vmatpush.msra.mxu0 %v208
    %2974 = vmatpush.msra.mxu0 %v200
    %2975 = vmatmul.f32.gmra.mxu0 %v2874
    %v2976 = vpop.f32.mrf.mxu0
    %v2977 = vadd.f32 %v2957, %v2976
    %2978 = vdwg.mxu0
    %2979 = vmatpush.msra.mxu0 %v193
    %2980 = vmatpush.msra.mxu0 %v185
    %2981 = vmatpush.msra.mxu0 %v177
    %2982 = vmatpush.msra.mxu0 %v169
    %2983 = vmatpush.msra.mxu0 %v161
    %2984 = vmatpush.msra.mxu0 %v153
    %2985 = vmatpush.msra.mxu0 %v145
    %2986 = vmatpush.msra.mxu0 %v137
    %2987 = vmatpush.msra.mxu0 %v129
    %2988 = vmatpush.msra.mxu0 %v121
    %2989 = vmatpush.msra.mxu0 %v113
    %2990 = vmatpush.msra.mxu0 %v105
    %2991 = vmatpush.msra.mxu0 %v97
    %2992 = vmatpush.msra.mxu0 %v89
    %2993 = vmatpush.msra.mxu0 %v81
    %2994 = vmatpush.msra.mxu0 %v73
    %2995 = vmatmul.f32.gmra.mxu0 %v2898
    %v2996 = vpop.f32.mrf.mxu0
    %v2997 = vadd.f32 0.0, %v2996
    %2998 = vdwg.mxu0
    %2999 = vmatpush.msra.mxu0 %v321
    %3000 = vmatpush.msra.mxu0 %v313
    %3001 = vmatpush.msra.mxu0 %v305
    %3002 = vmatpush.msra.mxu0 %v297
    %3003 = vmatpush.msra.mxu0 %v289
    %3004 = vmatpush.msra.mxu0 %v281
    %3005 = vmatpush.msra.mxu0 %v273
    %3006 = vmatpush.msra.mxu0 %v265
    %3007 = vmatpush.msra.mxu0 %v257
    %3008 = vmatpush.msra.mxu0 %v249
    %3009 = vmatpush.msra.mxu0 %v241
    %3010 = vmatpush.msra.mxu0 %v233
    %3011 = vmatpush.msra.mxu0 %v225
    %3012 = vmatpush.msra.mxu0 %v217
    %3013 = vmatpush.msra.mxu0 %v209
    %3014 = vmatpush.msra.mxu0 %v201
    %3015 = vmatmul.f32.gmra.mxu0 %v2874
    %v3016 = vpop.f32.mrf.mxu0
    %v3017 = vadd.f32 %v2997, %v3016
    %3018 = vdwg.mxu0
    %3019 = vmatpush.msra.mxu0 %v194
    %3020 = vmatpush.msra.mxu0 %v186
    %3021 = vmatpush.msra.mxu0 %v178
    %3022 = vmatpush.msra.mxu0 %v170
    %3023 = vmatpush.msra.mxu0 %v162
    %3024 = vmatpush.msra.mxu0 %v154
    %3025 = vmatpush.msra.mxu0 %v146
    %3026 = vmatpush.msra.mxu0 %v138
    %3027 = vmatpush.msra.mxu0 %v130
    %3028 = vmatpush.msra.mxu0 %v122
    %3029 = vmatpush.msra.mxu0 %v114
    %3030 = vmatpush.msra.mxu0 %v106
    %3031 = vmatpush.msra.mxu0 %v98
    %3032 = vmatpush.msra.mxu0 %v90
    %3033 = vmatpush.msra.mxu0 %v82
    %3034 = vmatpush.msra.mxu0 %v74
    %3035 = vmatmul.f32.gmra.mxu0 %v2898
    %v3036 = vpop.f32.mrf.mxu0
    %v3037 = vadd.f32 0.0, %v3036
    %3038 = vdwg.mxu0
    %3039 = vmatpush.msra.mxu0 %v322
    %3040 = vmatpush.msra.mxu0 %v314
    %3041 = vmatpush.msra.mxu0 %v306
    %3042 = vmatpush.msra.mxu0 %v298
    %3043 = vmatpush.msra.mxu0 %v290
    %3044 = vmatpush.msra.mxu0 %v282
    %3045 = vmatpush.msra.mxu0 %v274
    %3046 = vmatpush.msra.mxu0 %v266
    %3047 = vmatpush.msra.mxu0 %v258
    %3048 = vmatpush.msra.mxu0 %v250
    %3049 = vmatpush.msra.mxu0 %v242
    %3050 = vmatpush.msra.mxu0 %v234
    %3051 = vmatpush.msra.mxu0 %v226
    %3052 = vmatpush.msra.mxu0 %v218
    %3053 = vmatpush.msra.mxu0 %v210
    %3054 = vmatpush.msra.mxu0 %v202
    %3055 = vmatmul.f32.gmra.mxu0 %v2874
    %v3056 = vpop.f32.mrf.mxu0
    %v3057 = vadd.f32 %v3037, %v3056
    %3058 = vdwg.mxu0
    %v3059 = vadd.f32 %v2937, %v325
    %v3060 = vadd.f32 %v2977, %v326
    %v3061 = vadd.f32 %v3017, %v327
    %v3062 = vadd.f32 %v3057, %v328
    %v3063 = vtanh.pop %v3059
    %v3064 = vtanh.pop %v3060
    %v3065 = vtanh.pop %v3061
    %v3066 = vtanh.pop %v3062
    %v3067 = vmul.f32 %v3063, 0.5
    %v3068 = vadd.f32 %v3067, 0.5
    %v3069 = vmul.f32 %v3064, 0.5
    %v3070 = vadd.f32 %v3069, 0.5
    %v3071 = vmul.f32 %v3066, 0.5
    %v3072 = vadd.f32 %v3071, 0.5
    %v3073 = vmul.f32 %v3070, %v2872
    %v3074 = vmul.f32 %v3068, %v3065
    %v3075 = vadd.f32 %v3073, %v3074
    %v3076 = vtanh.pop %v3075
    %v3077 = vmul.f32 %v3072, %v3076
    %v3079 = vperm.slane %v333, 0
    %v3081 = vmul.f32 %v3077, %v3079
    %3082 = vadd.xlane.f32.xlu0 %v3081
    %v3083 = vpop.xlane.xlu0 %3082
    %v3085 = vperm.slane %v334, 0
    %v3087 = vadd.f32 %v3083, %v3085
    %vm3088 = vcmask 7168
    %3089 = vst.msk [vmem:[%s5] sm:$0xff] %vm3088, %v3087
    // Predicated region
    $region34: #{tpu_custom_call.1} parent=1 // pred_check
      _
    $region35: #{tpu_custom_call.1} parent=1 // pred_check_branch
      %3091 = sbr.rel (0) target = $region37
    $region36: #{tpu_custom_call.1} parent=1 // pred_region
      _
    $region37: #{tpu_custom_call.1} parent=1 // pred_fallthru
      _
    // Predicated region
    $region38: #{tpu_custom_call.1} parent=1 // pred_check
      _
    $region39: #{tpu_custom_call.1} parent=1 // pred_check_branch
      %3093 = sbr.rel (0) target = $region41
    $region40: #{tpu_custom_call.1} parent=1 // pred_region
      _
    $region41: #{tpu_custom_call.1} parent=1 // pred_fallthru
      _
    %3094 = vsyncpa [#allocation4], 1
    %3095 = vsyncpa [#allocation6], 1

</llo_original>
